<compile_context>
chip_gen: v7x
topology: tpu7x:2x2x1
jax: 0.10.0
libtpu: 0.0.40
codegen_flags: <defaults>
</compile_context>

<pallas_src>
import math

import jax
import jax.numpy as jnp
from jax import lax
from jax.experimental import pallas as pl
from jax.experimental.pallas import tpu as pltpu  # noqa: F401  (TPU backend)

# ----------------------------- config ---------------------------------------
BATCH = 2
IMG = 16
CHANNELS = 3
PATCH = 8
HIDDEN = 32
HEADS = 4
HEAD_DIM = HIDDEN // HEADS
LAYERS = 2
INTERMEDIATE = 64
EPS = 1e-12
NUM_PATCHES = (IMG // PATCH) ** 2          # 4
SEQ = NUM_PATCHES + 1                      # 5
SEQ_PAD = 8                                # padded to a full sublane tile
PATCH_DIM = CHANNELS * PATCH * PATCH       # 192


# ----------------------------- in-kernel helpers -----------------------------
def _layernorm(x, g, b, eps=EPS):
    mean = jnp.mean(x, axis=-1, keepdims=True)
    var = jnp.mean(jnp.square(x - mean), axis=-1, keepdims=True)
    return (x - mean) * lax.rsqrt(var + eps) * g + b


def _gelu(x):
    # exact (erf) GELU, matching HF ViT's default "gelu" activation
    return 0.5 * x * (1.0 + lax.erf(x * (1.0 / math.sqrt(2.0))))


# ----------------------------- fused ViT kernel ------------------------------
def _vit_kernel(patches_ref, w_patch_ref, add0_ref, key_mask_ref,
                ln1_g_ref, ln1_b_ref, wqkv_ref, bqkv_ref, wo_ref, bo_ref,
                ln2_g_ref, ln2_b_ref, wi_ref, bi_ref, wo2_ref, bo2_ref,
                lnf_g_ref, lnf_b_ref, out_ref):
    scale = 1.0 / math.sqrt(HEAD_DIM)
    key_mask = key_mask_ref[...]                       # (1, SEQ_PAD): 0 / -1e30

    # --- patch embedding; CLS token, position embeddings and patch bias are
    #     pre-folded into add0 (padded rows stay exactly zero-seeded).
    h = jnp.dot(patches_ref[...], w_patch_ref[...],
                preferred_element_type=jnp.float32) + add0_ref[...]   # (B*SEQ_PAD, H)

    for l in range(LAYERS):
        # ---------------- attention block (pre-LN, fused QKV) ----------------
        hn = _layernorm(h, ln1_g_ref[l], ln1_b_ref[l])
        qkv = jnp.dot(hn, wqkv_ref[l],
                      preferred_element_type=jnp.float32) + bqkv_ref[l]  # (B*SEQ_PAD, 3H)
        wo_l = wo_ref[l]                                                 # (H, H)

        attn_blocks = []
        for b in range(BATCH):                         # static unroll, all in VMEM
            r0 = b * SEQ_PAD
            q_b = qkv[r0:r0 + SEQ_PAD, 0:HIDDEN]
            k_b = qkv[r0:r0 + SEQ_PAD, HIDDEN:2 * HIDDEN]
            v_b = qkv[r0:r0 + SEQ_PAD, 2 * HIDDEN:3 * HIDDEN]
            acc = jnp.zeros((SEQ_PAD, HIDDEN), jnp.float32)
            for hh in range(HEADS):                    # static unroll over heads
                c0 = hh * HEAD_DIM
                qh = q_b[:, c0:c0 + HEAD_DIM]
                kh = k_b[:, c0:c0 + HEAD_DIM]
                vh = v_b[:, c0:c0 + HEAD_DIM]
                # q @ k^T without materializing a transpose
                s = lax.dot_general(qh, kh, (((1,), (1,)), ((), ())),
                                    preferred_element_type=jnp.float32) * scale
                s = s + key_mask                       # mask padded key columns
                s = s - jnp.max(s, axis=-1, keepdims=True)
                p = jnp.exp(s)
                p = p / jnp.sum(p, axis=-1, keepdims=True)
                ctx_h = jnp.dot(p, vh, preferred_element_type=jnp.float32)
                # fold the output projection into the head loop:
                #   ctx @ Wo == sum_h ctx_h @ Wo[h*D:(h+1)*D, :]
                acc = acc + jnp.dot(ctx_h, wo_l[c0:c0 + HEAD_DIM, :],
                                    preferred_element_type=jnp.float32)
            attn_blocks.append(acc)
        attn_out = jnp.concatenate(attn_blocks, axis=0)        # (B*SEQ_PAD, H)
        h = attn_out + bo_ref[l] + h                           # residual 1 (fused)

        # ---------------- MLP block (pre-LN) ---------------------------------
        hn2 = _layernorm(h, ln2_g_ref[l], ln2_b_ref[l])
        inter = _gelu(jnp.dot(hn2, wi_ref[l],
                              preferred_element_type=jnp.float32) + bi_ref[l])
        h = jnp.dot(inter, wo2_ref[l],
                    preferred_element_type=jnp.float32) + bo2_ref[l] + h   # residual 2

    # --- final LayerNorm -> last_hidden_state (padded rows sliced by wrapper)
    out_ref[...] = _layernorm(h, lnf_g_ref[...], lnf_b_ref[...]).astype(out_ref.dtype)


# ----------------------------- parameters -----------------------------------
def init_params(key):
    keys = iter(jax.random.split(key, 8 + 16 * LAYERS))

    def rnd(shape):
        return 0.02 * jax.random.normal(next(keys), shape, jnp.float32)

    params = {
        # conv weight kept in PyTorch layout (out, C, P, P)
        "patch_w": rnd((HIDDEN, CHANNELS, PATCH, PATCH)),
        "patch_b": rnd((HIDDEN,)),
        "cls": rnd((1, 1, HIDDEN)),
        "pos": rnd((1, SEQ, HIDDEN)),
        "lnf_g": jnp.ones((HIDDEN,), jnp.float32),
        "lnf_b": jnp.zeros((HIDDEN,), jnp.float32),
        "layers": [],
    }
    for _ in range(LAYERS):
        params["layers"].append(
            {
                "ln1_g": jnp.ones((HIDDEN,), jnp.float32),
                "ln1_b": jnp.zeros((HIDDEN,), jnp.float32),
                "wq": rnd((HIDDEN, HIDDEN)), "bq": rnd((HIDDEN,)),
                "wk": rnd((HIDDEN, HIDDEN)), "bk": rnd((HIDDEN,)),
                "wv": rnd((HIDDEN, HIDDEN)), "bv": rnd((HIDDEN,)),
                "wo": rnd((HIDDEN, HIDDEN)), "bo": rnd((HIDDEN,)),
                "ln2_g": jnp.ones((HIDDEN,), jnp.float32),
                "ln2_b": jnp.zeros((HIDDEN,), jnp.float32),
                "wi": rnd((HIDDEN, INTERMEDIATE)), "bi": rnd((INTERMEDIATE,)),
                "wo2": rnd((INTERMEDIATE, HIDDEN)), "bo2": rnd((HIDDEN,)),
            }
        )
    return params


# ----------------------------- forward pass ----------------------------------
def vit_forward(params, x):
    # layout: x is NCHW (B, C, H, W) float32 pixel values, like the PyTorch module.
    B, C, H, W = x.shape
    assert B == BATCH and C == CHANNELS and H == IMG and W == IMG
    nh, nw = H // PATCH, W // PATCH
    npatch = nh * nw

    # --- wrapper-side layout prep (pure data movement / parameter folding) ---
    # extract (c, ph, pw)-ordered patches to match PyTorch conv-weight flattening
    patches = (
        x.reshape(B, C, nh, PATCH, nw, PATCH)
        .transpose(0, 2, 4, 1, 3, 5)
        .reshape(B, npatch, PATCH_DIM)
    )
    # pad each batch's token rows to SEQ_PAD=8: [CLS slot(zeros), patches, zeros]
    patches_pad = jnp.concatenate(
        [jnp.zeros((B, 1, PATCH_DIM), jnp.float32),
         patches,
         jnp.zeros((B, SEQ_PAD - SEQ, PATCH_DIM), jnp.float32)],
        axis=1,
    ).reshape(B * SEQ_PAD, PATCH_DIM)

    w_patch = params["patch_w"].reshape(HIDDEN, -1).T          # (PATCH_DIM, HIDDEN)

    # fold CLS token + position embeddings + patch bias into one additive term
    cls_row = params["cls"][0] + params["pos"][0, 0:1]                    # (1, H)
    patch_rows = params["pos"][0, 1:SEQ] + params["patch_b"][None, :]     # (4, H)
    pad_rows = jnp.zeros((SEQ_PAD - SEQ, HIDDEN), jnp.float32)
    add0 = jnp.tile(jnp.concatenate([cls_row, patch_rows, pad_rows], axis=0),
                    (B, 1))                                               # (B*SEQ_PAD, H)

    key_mask = jnp.where(jnp.arange(SEQ_PAD) < SEQ, 0.0, -1e30
                         ).astype(jnp.float32).reshape(1, SEQ_PAD)

    # --- stack per-layer weights; fuse Q/K/V into a single (H, 3H) matmul ----
    L = params["layers"]
    stack2 = lambda n: jnp.stack([lay[n] for lay in L]).reshape(LAYERS, 1, -1)
    ln1_g, ln1_b = stack2("ln1_g"), stack2("ln1_b")
    ln2_g, ln2_b = stack2("ln2_g"), stack2("ln2_b")
    wqkv = jnp.stack([jnp.concatenate([lay["wq"], lay["wk"], lay["wv"]], axis=1)
                      for lay in L])                                      # (L, H, 3H)
    bqkv = jnp.stack([jnp.concatenate([lay["bq"], lay["bk"], lay["bv"]])
                      for lay in L]).reshape(LAYERS, 1, 3 * HIDDEN)
    wo = jnp.stack([lay["wo"] for lay in L])
    bo = stack2("bo")
    wi = jnp.stack([lay["wi"] for lay in L])
    bi = stack2("bi")
    wo2 = jnp.stack([lay["wo2"] for lay in L])
    bo2 = stack2("bo2")
    lnf_g = params["lnf_g"].reshape(1, HIDDEN)
    lnf_b = params["lnf_b"].reshape(1, HIDDEN)

    # --- single fused pallas_call for the whole encoder ----------------------
    out_pad = pl.pallas_call(
        _vit_kernel,
        out_shape=jax.ShapeDtypeStruct((B * SEQ_PAD, HIDDEN), jnp.float32),
    )(patches_pad, w_patch, add0, key_mask,
      ln1_g, ln1_b, wqkv, bqkv, wo, bo, ln2_g, ln2_b, wi, bi, wo2, bo2,
      lnf_g, lnf_b)

    # drop the padded rows -> (B, SEQ, HIDDEN) last_hidden_state
    return out_pad.reshape(B, SEQ_PAD, HIDDEN)[:, :SEQ, :]


# ----------------------------- driver ----------------------------------------
if __name__ == "__main__":
    key = jax.random.PRNGKey(0)
    pkey, xkey = jax.random.split(key)
    params = init_params(pkey)
    x = jax.random.normal(xkey, (BATCH, CHANNELS, IMG, IMG), jnp.float32)

    fwd = jax.jit(vit_forward)
    last_hidden_state = fwd(params, x)
    jax.block_until_ready(last_hidden_state)

    assert last_hidden_state.shape == (BATCH, SEQ, HIDDEN)
    assert bool(jnp.all(jnp.isfinite(last_hidden_state)))
    print("KERNEL_OK")
</pallas_src>

<mosaic_0001>
module attributes {stable_mosaic.version = 11 : i64} {
  func.func @_vit_kernel(%arg0: memref<16x192xf32, #tpu.memory_space<vmem>>, %arg1: memref<192x32xf32, #tpu.memory_space<vmem>>, %arg2: memref<16x32xf32, #tpu.memory_space<vmem>>, %arg3: memref<1x8xf32, #tpu.memory_space<vmem>>, %arg4: memref<2x1x32xf32, #tpu.memory_space<vmem>>, %arg5: memref<2x1x32xf32, #tpu.memory_space<vmem>>, %arg6: memref<2x32x96xf32, #tpu.memory_space<vmem>>, %arg7: memref<2x1x96xf32, #tpu.memory_space<vmem>>, %arg8: memref<2x32x32xf32, #tpu.memory_space<vmem>>, %arg9: memref<2x1x32xf32, #tpu.memory_space<vmem>>, %arg10: memref<2x1x32xf32, #tpu.memory_space<vmem>>, %arg11: memref<2x1x32xf32, #tpu.memory_space<vmem>>, %arg12: memref<2x32x64xf32, #tpu.memory_space<vmem>>, %arg13: memref<2x1x64xf32, #tpu.memory_space<vmem>>, %arg14: memref<2x64x32xf32, #tpu.memory_space<vmem>>, %arg15: memref<2x1x32xf32, #tpu.memory_space<vmem>>, %arg16: memref<1x32xf32, #tpu.memory_space<vmem>>, %arg17: memref<1x32xf32, #tpu.memory_space<vmem>>, %arg18: memref<16x32xf32, #tpu.memory_space<vmem>>) attributes {dimension_semantics = [], scalar_prefetch = 0 : i64, scratch_operands = 0 : i64, tpu.core_type = #tpu.core_type<tc>} {
    %c0 = arith.constant 0 : index
    %c0_0 = arith.constant 0 : index
    %0 = vector.load %arg3[%c0, %c0_0] : memref<1x8xf32, #tpu.memory_space<vmem>>, vector<1x8xf32>
    %c0_1 = arith.constant 0 : index
    %c0_2 = arith.constant 0 : index
    %1 = vector.load %arg0[%c0_1, %c0_2] : memref<16x192xf32, #tpu.memory_space<vmem>>, vector<16x192xf32>
    %c0_3 = arith.constant 0 : index
    %c0_4 = arith.constant 0 : index
    %2 = vector.load %arg1[%c0_3, %c0_4] : memref<192x32xf32, #tpu.memory_space<vmem>>, vector<192x32xf32>
    %cst = arith.constant dense<0.000000e+00> : vector<16x32xf32>
    %3 = tpu.matmul %1, %2, %cst {dimension_numbers = #tpu.dot_dimension_numbers<[1], [0], [0], [1], [0, 0, 1, 1], [], []>} : vector<16x192xf32>, vector<192x32xf32>, vector<16x32xf32> -> vector<16x32xf32>
    %c0_5 = arith.constant 0 : index
    %c0_6 = arith.constant 0 : index
    %4 = vector.load %arg2[%c0_5, %c0_6] : memref<16x32xf32, #tpu.memory_space<vmem>>, vector<16x32xf32>
    %5 = arith.addf %3, %4 : vector<16x32xf32>
    %c0_7 = arith.constant 0 : index
    %c0_8 = arith.constant 0 : index
    %c0_9 = arith.constant 0 : index
    %6 = vector.load %arg4[%c0_7, %c0_8, %c0_9] : memref<2x1x32xf32, #tpu.memory_space<vmem>>, vector<1x1x32xf32>
    %7 = vector.shape_cast %6 : vector<1x1x32xf32> to vector<1x32xf32>
    %c0_10 = arith.constant 0 : index
    %c0_11 = arith.constant 0 : index
    %c0_12 = arith.constant 0 : index
    %8 = vector.load %arg5[%c0_10, %c0_11, %c0_12] : memref<2x1x32xf32, #tpu.memory_space<vmem>>, vector<1x1x32xf32>
    %9 = vector.shape_cast %8 : vector<1x1x32xf32> to vector<1x32xf32>
    %cst_13 = arith.constant dense<0.000000e+00> : vector<16xf32>
    %10 = vector.multi_reduction <add>, %5, %cst_13 [1] : vector<16x32xf32> to vector<16xf32>
    %11 = vector.shape_cast %10 : vector<16xf32> to vector<16x1xf32>
    %cst_14 = arith.constant 3.200000e+01 : f32
    %12 = vector.broadcast %cst_14 : f32 to vector<16x1xf32>
    %13 = arith.divf %11, %12 : vector<16x1xf32>
    %14 = vector.broadcast %13 : vector<16x1xf32> to vector<16x32xf32>
    %15 = arith.subf %5, %14 : vector<16x32xf32>
    %16 = arith.mulf %15, %15 : vector<16x32xf32>
    %cst_15 = arith.constant dense<0.000000e+00> : vector<16xf32>
    %17 = vector.multi_reduction <add>, %16, %cst_15 [1] : vector<16x32xf32> to vector<16xf32>
    %18 = vector.shape_cast %17 : vector<16xf32> to vector<16x1xf32>
    %cst_16 = arith.constant 3.200000e+01 : f32
    %19 = vector.broadcast %cst_16 : f32 to vector<16x1xf32>
    %20 = arith.divf %18, %19 : vector<16x1xf32>
    %21 = vector.broadcast %13 : vector<16x1xf32> to vector<16x32xf32>
    %22 = arith.subf %5, %21 : vector<16x32xf32>
    %cst_17 = arith.constant 9.99999996E-13 : f32
    %23 = vector.broadcast %cst_17 : f32 to vector<16x1xf32>
    %24 = arith.addf %20, %23 : vector<16x1xf32>
    %25 = math.rsqrt %24 : vector<16x1xf32>
    %26 = vector.broadcast %25 : vector<16x1xf32> to vector<16x32xf32>
    %27 = arith.mulf %22, %26 : vector<16x32xf32>
    %28 = vector.broadcast %7 : vector<1x32xf32> to vector<16x32xf32>
    %29 = arith.mulf %27, %28 : vector<16x32xf32>
    %30 = vector.broadcast %9 : vector<1x32xf32> to vector<16x32xf32>
    %31 = arith.addf %29, %30 : vector<16x32xf32>
    %c0_18 = arith.constant 0 : index
    %c0_19 = arith.constant 0 : index
    %c0_20 = arith.constant 0 : index
    %32 = vector.load %arg6[%c0_18, %c0_19, %c0_20] : memref<2x32x96xf32, #tpu.memory_space<vmem>>, vector<1x32x96xf32>
    %33 = vector.shape_cast %32 : vector<1x32x96xf32> to vector<32x96xf32>
    %cst_21 = arith.constant dense<0.000000e+00> : vector<16x96xf32>
    %34 = tpu.matmul %31, %33, %cst_21 {dimension_numbers = #tpu.dot_dimension_numbers<[1], [0], [0], [1], [0, 0, 1, 1], [], []>} : vector<16x32xf32>, vector<32x96xf32>, vector<16x96xf32> -> vector<16x96xf32>
    %c0_22 = arith.constant 0 : index
    %c0_23 = arith.constant 0 : index
    %c0_24 = arith.constant 0 : index
    %35 = vector.load %arg7[%c0_22, %c0_23, %c0_24] : memref<2x1x96xf32, #tpu.memory_space<vmem>>, vector<1x1x96xf32>
    %36 = vector.shape_cast %35 : vector<1x1x96xf32> to vector<1x96xf32>
    %37 = vector.broadcast %36 : vector<1x96xf32> to vector<16x96xf32>
    %38 = arith.addf %34, %37 : vector<16x96xf32>
    %c0_25 = arith.constant 0 : index
    %c0_26 = arith.constant 0 : index
    %c0_27 = arith.constant 0 : index
    %39 = vector.load %arg8[%c0_25, %c0_26, %c0_27] : memref<2x32x32xf32, #tpu.memory_space<vmem>>, vector<1x32x32xf32>
    %40 = vector.shape_cast %39 : vector<1x32x32xf32> to vector<32x32xf32>
    %41 = vector.extract_strided_slice %38 {offsets = [0, 0], sizes = [8, 32], strides = [1, 1]} : vector<16x96xf32> to vector<8x32xf32>
    %42 = vector.extract_strided_slice %38 {offsets = [0, 32], sizes = [8, 32], strides = [1, 1]} : vector<16x96xf32> to vector<8x32xf32>
    %43 = vector.extract_strided_slice %38 {offsets = [0, 64], sizes = [8, 32], strides = [1, 1]} : vector<16x96xf32> to vector<8x32xf32>
    %cst_28 = arith.constant 0.000000e+00 : f32
    %44 = vector.broadcast %cst_28 : f32 to vector<8x32xf32>
    %45 = vector.extract_strided_slice %41 {offsets = [0, 0], sizes = [8, 8], strides = [1, 1]} : vector<8x32xf32> to vector<8x8xf32>
    %46 = vector.extract_strided_slice %42 {offsets = [0, 0], sizes = [8, 8], strides = [1, 1]} : vector<8x32xf32> to vector<8x8xf32>
    %47 = vector.extract_strided_slice %43 {offsets = [0, 0], sizes = [8, 8], strides = [1, 1]} : vector<8x32xf32> to vector<8x8xf32>
    %cst_29 = arith.constant dense<0.000000e+00> : vector<8x8xf32>
    %48 = tpu.matmul %45, %46, %cst_29 {dimension_numbers = #tpu.dot_dimension_numbers<[1], [1], [0], [0], [0, 0, 1, 0], [], []>} : vector<8x8xf32>, vector<8x8xf32>, vector<8x8xf32> -> vector<8x8xf32>
    %cst_30 = arith.constant 0.353553385 : f32
    %49 = vector.broadcast %cst_30 : f32 to vector<8x8xf32>
    %50 = arith.mulf %48, %49 : vector<8x8xf32>
    %51 = vector.broadcast %0 : vector<1x8xf32> to vector<8x8xf32>
    %52 = arith.addf %50, %51 : vector<8x8xf32>
    %cst_31 = arith.constant dense<0xFF800000> : vector<8xf32>
    %53 = vector.multi_reduction <maximumf>, %52, %cst_31 [1] : vector<8x8xf32> to vector<8xf32>
    %54 = vector.shape_cast %53 : vector<8xf32> to vector<8x1xf32>
    %55 = vector.broadcast %54 : vector<8x1xf32> to vector<8x8xf32>
    %56 = arith.subf %52, %55 : vector<8x8xf32>
    %57 = math.exp %56 : vector<8x8xf32>
    %cst_32 = arith.constant dense<0.000000e+00> : vector<8xf32>
    %58 = vector.multi_reduction <add>, %57, %cst_32 [1] : vector<8x8xf32> to vector<8xf32>
    %59 = vector.shape_cast %58 : vector<8xf32> to vector<8x1xf32>
    %60 = vector.broadcast %59 : vector<8x1xf32> to vector<8x8xf32>
    %61 = arith.divf %57, %60 : vector<8x8xf32>
    %cst_33 = arith.constant dense<0.000000e+00> : vector<8x8xf32>
    %62 = tpu.matmul %61, %47, %cst_33 {dimension_numbers = #tpu.dot_dimension_numbers<[1], [0], [0], [1], [0, 0, 1, 1], [], []>} : vector<8x8xf32>, vector<8x8xf32>, vector<8x8xf32> -> vector<8x8xf32>
    %63 = vector.extract_strided_slice %40 {offsets = [0, 0], sizes = [8, 32], strides = [1, 1]} : vector<32x32xf32> to vector<8x32xf32>
    %cst_34 = arith.constant dense<0.000000e+00> : vector<8x32xf32>
    %64 = tpu.matmul %62, %63, %cst_34 {dimension_numbers = #tpu.dot_dimension_numbers<[1], [0], [0], [1], [0, 0, 1, 1], [], []>} : vector<8x8xf32>, vector<8x32xf32>, vector<8x32xf32> -> vector<8x32xf32>
    %65 = arith.addf %44, %64 : vector<8x32xf32>
    %66 = vector.extract_strided_slice %41 {offsets = [0, 8], sizes = [8, 8], strides = [1, 1]} : vector<8x32xf32> to vector<8x8xf32>
    %67 = vector.extract_strided_slice %42 {offsets = [0, 8], sizes = [8, 8], strides = [1, 1]} : vector<8x32xf32> to vector<8x8xf32>
    %68 = vector.extract_strided_slice %43 {offsets = [0, 8], sizes = [8, 8], strides = [1, 1]} : vector<8x32xf32> to vector<8x8xf32>
    %cst_35 = arith.constant dense<0.000000e+00> : vector<8x8xf32>
    %69 = tpu.matmul %66, %67, %cst_35 {dimension_numbers = #tpu.dot_dimension_numbers<[1], [1], [0], [0], [0, 0, 1, 0], [], []>} : vector<8x8xf32>, vector<8x8xf32>, vector<8x8xf32> -> vector<8x8xf32>
    %cst_36 = arith.constant 0.353553385 : f32
    %70 = vector.broadcast %cst_36 : f32 to vector<8x8xf32>
    %71 = arith.mulf %69, %70 : vector<8x8xf32>
    %72 = vector.broadcast %0 : vector<1x8xf32> to vector<8x8xf32>
    %73 = arith.addf %71, %72 : vector<8x8xf32>
    %cst_37 = arith.constant dense<0xFF800000> : vector<8xf32>
    %74 = vector.multi_reduction <maximumf>, %73, %cst_37 [1] : vector<8x8xf32> to vector<8xf32>
    %75 = vector.shape_cast %74 : vector<8xf32> to vector<8x1xf32>
    %76 = vector.broadcast %75 : vector<8x1xf32> to vector<8x8xf32>
    %77 = arith.subf %73, %76 : vector<8x8xf32>
    %78 = math.exp %77 : vector<8x8xf32>
    %cst_38 = arith.constant dense<0.000000e+00> : vector<8xf32>
    %79 = vector.multi_reduction <add>, %78, %cst_38 [1] : vector<8x8xf32> to vector<8xf32>
    %80 = vector.shape_cast %79 : vector<8xf32> to vector<8x1xf32>
    %81 = vector.broadcast %80 : vector<8x1xf32> to vector<8x8xf32>
    %82 = arith.divf %78, %81 : vector<8x8xf32>
    %cst_39 = arith.constant dense<0.000000e+00> : vector<8x8xf32>
    %83 = tpu.matmul %82, %68, %cst_39 {dimension_numbers = #tpu.dot_dimension_numbers<[1], [0], [0], [1], [0, 0, 1, 1], [], []>} : vector<8x8xf32>, vector<8x8xf32>, vector<8x8xf32> -> vector<8x8xf32>
    %84 = vector.extract_strided_slice %40 {offsets = [8, 0], sizes = [8, 32], strides = [1, 1]} : vector<32x32xf32> to vector<8x32xf32>
    %cst_40 = arith.constant dense<0.000000e+00> : vector<8x32xf32>
    %85 = tpu.matmul %83, %84, %cst_40 {dimension_numbers = #tpu.dot_dimension_numbers<[1], [0], [0], [1], [0, 0, 1, 1], [], []>} : vector<8x8xf32>, vector<8x32xf32>, vector<8x32xf32> -> vector<8x32xf32>
    %86 = arith.addf %65, %85 : vector<8x32xf32>
    %87 = vector.extract_strided_slice %41 {offsets = [0, 16], sizes = [8, 8], strides = [1, 1]} : vector<8x32xf32> to vector<8x8xf32>
    %88 = vector.extract_strided_slice %42 {offsets = [0, 16], sizes = [8, 8], strides = [1, 1]} : vector<8x32xf32> to vector<8x8xf32>
    %89 = vector.extract_strided_slice %43 {offsets = [0, 16], sizes = [8, 8], strides = [1, 1]} : vector<8x32xf32> to vector<8x8xf32>
    %cst_41 = arith.constant dense<0.000000e+00> : vector<8x8xf32>
    %90 = tpu.matmul %87, %88, %cst_41 {dimension_numbers = #tpu.dot_dimension_numbers<[1], [1], [0], [0], [0, 0, 1, 0], [], []>} : vector<8x8xf32>, vector<8x8xf32>, vector<8x8xf32> -> vector<8x8xf32>
    %cst_42 = arith.constant 0.353553385 : f32
    %91 = vector.broadcast %cst_42 : f32 to vector<8x8xf32>
    %92 = arith.mulf %90, %91 : vector<8x8xf32>
    %93 = vector.broadcast %0 : vector<1x8xf32> to vector<8x8xf32>
    %94 = arith.addf %92, %93 : vector<8x8xf32>
    %cst_43 = arith.constant dense<0xFF800000> : vector<8xf32>
    %95 = vector.multi_reduction <maximumf>, %94, %cst_43 [1] : vector<8x8xf32> to vector<8xf32>
    %96 = vector.shape_cast %95 : vector<8xf32> to vector<8x1xf32>
    %97 = vector.broadcast %96 : vector<8x1xf32> to vector<8x8xf32>
    %98 = arith.subf %94, %97 : vector<8x8xf32>
    %99 = math.exp %98 : vector<8x8xf32>
    %cst_44 = arith.constant dense<0.000000e+00> : vector<8xf32>
    %100 = vector.multi_reduction <add>, %99, %cst_44 [1] : vector<8x8xf32> to vector<8xf32>
    %101 = vector.shape_cast %100 : vector<8xf32> to vector<8x1xf32>
    %102 = vector.broadcast %101 : vector<8x1xf32> to vector<8x8xf32>
    %103 = arith.divf %99, %102 : vector<8x8xf32>
    %cst_45 = arith.constant dense<0.000000e+00> : vector<8x8xf32>
    %104 = tpu.matmul %103, %89, %cst_45 {dimension_numbers = #tpu.dot_dimension_numbers<[1], [0], [0], [1], [0, 0, 1, 1], [], []>} : vector<8x8xf32>, vector<8x8xf32>, vector<8x8xf32> -> vector<8x8xf32>
    %105 = vector.extract_strided_slice %40 {offsets = [16, 0], sizes = [8, 32], strides = [1, 1]} : vector<32x32xf32> to vector<8x32xf32>
    %cst_46 = arith.constant dense<0.000000e+00> : vector<8x32xf32>
    %106 = tpu.matmul %104, %105, %cst_46 {dimension_numbers = #tpu.dot_dimension_numbers<[1], [0], [0], [1], [0, 0, 1, 1], [], []>} : vector<8x8xf32>, vector<8x32xf32>, vector<8x32xf32> -> vector<8x32xf32>
    %107 = arith.addf %86, %106 : vector<8x32xf32>
    %108 = vector.extract_strided_slice %41 {offsets = [0, 24], sizes = [8, 8], strides = [1, 1]} : vector<8x32xf32> to vector<8x8xf32>
    %109 = vector.extract_strided_slice %42 {offsets = [0, 24], sizes = [8, 8], strides = [1, 1]} : vector<8x32xf32> to vector<8x8xf32>
    %110 = vector.extract_strided_slice %43 {offsets = [0, 24], sizes = [8, 8], strides = [1, 1]} : vector<8x32xf32> to vector<8x8xf32>
    %cst_47 = arith.constant dense<0.000000e+00> : vector<8x8xf32>
    %111 = tpu.matmul %108, %109, %cst_47 {dimension_numbers = #tpu.dot_dimension_numbers<[1], [1], [0], [0], [0, 0, 1, 0], [], []>} : vector<8x8xf32>, vector<8x8xf32>, vector<8x8xf32> -> vector<8x8xf32>
    %cst_48 = arith.constant 0.353553385 : f32
    %112 = vector.broadcast %cst_48 : f32 to vector<8x8xf32>
    %113 = arith.mulf %111, %112 : vector<8x8xf32>
    %114 = vector.broadcast %0 : vector<1x8xf32> to vector<8x8xf32>
    %115 = arith.addf %113, %114 : vector<8x8xf32>
    %cst_49 = arith.constant dense<0xFF800000> : vector<8xf32>
    %116 = vector.multi_reduction <maximumf>, %115, %cst_49 [1] : vector<8x8xf32> to vector<8xf32>
    %117 = vector.shape_cast %116 : vector<8xf32> to vector<8x1xf32>
    %118 = vector.broadcast %117 : vector<8x1xf32> to vector<8x8xf32>
    %119 = arith.subf %115, %118 : vector<8x8xf32>
    %120 = math.exp %119 : vector<8x8xf32>
    %cst_50 = arith.constant dense<0.000000e+00> : vector<8xf32>
    %121 = vector.multi_reduction <add>, %120, %cst_50 [1] : vector<8x8xf32> to vector<8xf32>
    %122 = vector.shape_cast %121 : vector<8xf32> to vector<8x1xf32>
    %123 = vector.broadcast %122 : vector<8x1xf32> to vector<8x8xf32>
    %124 = arith.divf %120, %123 : vector<8x8xf32>
    %cst_51 = arith.constant dense<0.000000e+00> : vector<8x8xf32>
    %125 = tpu.matmul %124, %110, %cst_51 {dimension_numbers = #tpu.dot_dimension_numbers<[1], [0], [0], [1], [0, 0, 1, 1], [], []>} : vector<8x8xf32>, vector<8x8xf32>, vector<8x8xf32> -> vector<8x8xf32>
    %126 = vector.extract_strided_slice %40 {offsets = [24, 0], sizes = [8, 32], strides = [1, 1]} : vector<32x32xf32> to vector<8x32xf32>
    %cst_52 = arith.constant dense<0.000000e+00> : vector<8x32xf32>
    %127 = tpu.matmul %125, %126, %cst_52 {dimension_numbers = #tpu.dot_dimension_numbers<[1], [0], [0], [1], [0, 0, 1, 1], [], []>} : vector<8x8xf32>, vector<8x32xf32>, vector<8x32xf32> -> vector<8x32xf32>
    %128 = arith.addf %107, %127 : vector<8x32xf32>
    %129 = vector.extract_strided_slice %38 {offsets = [8, 0], sizes = [8, 32], strides = [1, 1]} : vector<16x96xf32> to vector<8x32xf32>
    %130 = vector.extract_strided_slice %38 {offsets = [8, 32], sizes = [8, 32], strides = [1, 1]} : vector<16x96xf32> to vector<8x32xf32>
    %131 = vector.extract_strided_slice %38 {offsets = [8, 64], sizes = [8, 32], strides = [1, 1]} : vector<16x96xf32> to vector<8x32xf32>
    %cst_53 = arith.constant 0.000000e+00 : f32
    %132 = vector.broadcast %cst_53 : f32 to vector<8x32xf32>
    %133 = vector.extract_strided_slice %129 {offsets = [0, 0], sizes = [8, 8], strides = [1, 1]} : vector<8x32xf32> to vector<8x8xf32>
    %134 = vector.extract_strided_slice %130 {offsets = [0, 0], sizes = [8, 8], strides = [1, 1]} : vector<8x32xf32> to vector<8x8xf32>
    %135 = vector.extract_strided_slice %131 {offsets = [0, 0], sizes = [8, 8], strides = [1, 1]} : vector<8x32xf32> to vector<8x8xf32>
    %cst_54 = arith.constant dense<0.000000e+00> : vector<8x8xf32>
    %136 = tpu.matmul %133, %134, %cst_54 {dimension_numbers = #tpu.dot_dimension_numbers<[1], [1], [0], [0], [0, 0, 1, 0], [], []>} : vector<8x8xf32>, vector<8x8xf32>, vector<8x8xf32> -> vector<8x8xf32>
    %cst_55 = arith.constant 0.353553385 : f32
    %137 = vector.broadcast %cst_55 : f32 to vector<8x8xf32>
    %138 = arith.mulf %136, %137 : vector<8x8xf32>
    %139 = vector.broadcast %0 : vector<1x8xf32> to vector<8x8xf32>
    %140 = arith.addf %138, %139 : vector<8x8xf32>
    %cst_56 = arith.constant dense<0xFF800000> : vector<8xf32>
    %141 = vector.multi_reduction <maximumf>, %140, %cst_56 [1] : vector<8x8xf32> to vector<8xf32>
    %142 = vector.shape_cast %141 : vector<8xf32> to vector<8x1xf32>
    %143 = vector.broadcast %142 : vector<8x1xf32> to vector<8x8xf32>
    %144 = arith.subf %140, %143 : vector<8x8xf32>
    %145 = math.exp %144 : vector<8x8xf32>
    %cst_57 = arith.constant dense<0.000000e+00> : vector<8xf32>
    %146 = vector.multi_reduction <add>, %145, %cst_57 [1] : vector<8x8xf32> to vector<8xf32>
    %147 = vector.shape_cast %146 : vector<8xf32> to vector<8x1xf32>
    %148 = vector.broadcast %147 : vector<8x1xf32> to vector<8x8xf32>
    %149 = arith.divf %145, %148 : vector<8x8xf32>
    %cst_58 = arith.constant dense<0.000000e+00> : vector<8x8xf32>
    %150 = tpu.matmul %149, %135, %cst_58 {dimension_numbers = #tpu.dot_dimension_numbers<[1], [0], [0], [1], [0, 0, 1, 1], [], []>} : vector<8x8xf32>, vector<8x8xf32>, vector<8x8xf32> -> vector<8x8xf32>
    %151 = vector.extract_strided_slice %40 {offsets = [0, 0], sizes = [8, 32], strides = [1, 1]} : vector<32x32xf32> to vector<8x32xf32>
    %cst_59 = arith.constant dense<0.000000e+00> : vector<8x32xf32>
    %152 = tpu.matmul %150, %151, %cst_59 {dimension_numbers = #tpu.dot_dimension_numbers<[1], [0], [0], [1], [0, 0, 1, 1], [], []>} : vector<8x8xf32>, vector<8x32xf32>, vector<8x32xf32> -> vector<8x32xf32>
    %153 = arith.addf %132, %152 : vector<8x32xf32>
    %154 = vector.extract_strided_slice %129 {offsets = [0, 8], sizes = [8, 8], strides = [1, 1]} : vector<8x32xf32> to vector<8x8xf32>
    %155 = vector.extract_strided_slice %130 {offsets = [0, 8], sizes = [8, 8], strides = [1, 1]} : vector<8x32xf32> to vector<8x8xf32>
    %156 = vector.extract_strided_slice %131 {offsets = [0, 8], sizes = [8, 8], strides = [1, 1]} : vector<8x32xf32> to vector<8x8xf32>
    %cst_60 = arith.constant dense<0.000000e+00> : vector<8x8xf32>
    %157 = tpu.matmul %154, %155, %cst_60 {dimension_numbers = #tpu.dot_dimension_numbers<[1], [1], [0], [0], [0, 0, 1, 0], [], []>} : vector<8x8xf32>, vector<8x8xf32>, vector<8x8xf32> -> vector<8x8xf32>
    %cst_61 = arith.constant 0.353553385 : f32
    %158 = vector.broadcast %cst_61 : f32 to vector<8x8xf32>
    %159 = arith.mulf %157, %158 : vector<8x8xf32>
    %160 = vector.broadcast %0 : vector<1x8xf32> to vector<8x8xf32>
    %161 = arith.addf %159, %160 : vector<8x8xf32>
    %cst_62 = arith.constant dense<0xFF800000> : vector<8xf32>
    %162 = vector.multi_reduction <maximumf>, %161, %cst_62 [1] : vector<8x8xf32> to vector<8xf32>
    %163 = vector.shape_cast %162 : vector<8xf32> to vector<8x1xf32>
    %164 = vector.broadcast %163 : vector<8x1xf32> to vector<8x8xf32>
    %165 = arith.subf %161, %164 : vector<8x8xf32>
    %166 = math.exp %165 : vector<8x8xf32>
    %cst_63 = arith.constant dense<0.000000e+00> : vector<8xf32>
    %167 = vector.multi_reduction <add>, %166, %cst_63 [1] : vector<8x8xf32> to vector<8xf32>
    %168 = vector.shape_cast %167 : vector<8xf32> to vector<8x1xf32>
    %169 = vector.broadcast %168 : vector<8x1xf32> to vector<8x8xf32>
    %170 = arith.divf %166, %169 : vector<8x8xf32>
    %cst_64 = arith.constant dense<0.000000e+00> : vector<8x8xf32>
    %171 = tpu.matmul %170, %156, %cst_64 {dimension_numbers = #tpu.dot_dimension_numbers<[1], [0], [0], [1], [0, 0, 1, 1], [], []>} : vector<8x8xf32>, vector<8x8xf32>, vector<8x8xf32> -> vector<8x8xf32>
    %172 = vector.extract_strided_slice %40 {offsets = [8, 0], sizes = [8, 32], strides = [1, 1]} : vector<32x32xf32> to vector<8x32xf32>
    %cst_65 = arith.constant dense<0.000000e+00> : vector<8x32xf32>
    %173 = tpu.matmul %171, %172, %cst_65 {dimension_numbers = #tpu.dot_dimension_numbers<[1], [0], [0], [1], [0, 0, 1, 1], [], []>} : vector<8x8xf32>, vector<8x32xf32>, vector<8x32xf32> -> vector<8x32xf32>
    %174 = arith.addf %153, %173 : vector<8x32xf32>
    %175 = vector.extract_strided_slice %129 {offsets = [0, 16], sizes = [8, 8], strides = [1, 1]} : vector<8x32xf32> to vector<8x8xf32>
    %176 = vector.extract_strided_slice %130 {offsets = [0, 16], sizes = [8, 8], strides = [1, 1]} : vector<8x32xf32> to vector<8x8xf32>
    %177 = vector.extract_strided_slice %131 {offsets = [0, 16], sizes = [8, 8], strides = [1, 1]} : vector<8x32xf32> to vector<8x8xf32>
    %cst_66 = arith.constant dense<0.000000e+00> : vector<8x8xf32>
    %178 = tpu.matmul %175, %176, %cst_66 {dimension_numbers = #tpu.dot_dimension_numbers<[1], [1], [0], [0], [0, 0, 1, 0], [], []>} : vector<8x8xf32>, vector<8x8xf32>, vector<8x8xf32> -> vector<8x8xf32>
    %cst_67 = arith.constant 0.353553385 : f32
    %179 = vector.broadcast %cst_67 : f32 to vector<8x8xf32>
    %180 = arith.mulf %178, %179 : vector<8x8xf32>
    %181 = vector.broadcast %0 : vector<1x8xf32> to vector<8x8xf32>
    %182 = arith.addf %180, %181 : vector<8x8xf32>
    %cst_68 = arith.constant dense<0xFF800000> : vector<8xf32>
    %183 = vector.multi_reduction <maximumf>, %182, %cst_68 [1] : vector<8x8xf32> to vector<8xf32>
    %184 = vector.shape_cast %183 : vector<8xf32> to vector<8x1xf32>
    %185 = vector.broadcast %184 : vector<8x1xf32> to vector<8x8xf32>
    %186 = arith.subf %182, %185 : vector<8x8xf32>
    %187 = math.exp %186 : vector<8x8xf32>
    %cst_69 = arith.constant dense<0.000000e+00> : vector<8xf32>
    %188 = vector.multi_reduction <add>, %187, %cst_69 [1] : vector<8x8xf32> to vector<8xf32>
    %189 = vector.shape_cast %188 : vector<8xf32> to vector<8x1xf32>
    %190 = vector.broadcast %189 : vector<8x1xf32> to vector<8x8xf32>
    %191 = arith.divf %187, %190 : vector<8x8xf32>
    %cst_70 = arith.constant dense<0.000000e+00> : vector<8x8xf32>
    %192 = tpu.matmul %191, %177, %cst_70 {dimension_numbers = #tpu.dot_dimension_numbers<[1], [0], [0], [1], [0, 0, 1, 1], [], []>} : vector<8x8xf32>, vector<8x8xf32>, vector<8x8xf32> -> vector<8x8xf32>
    %193 = vector.extract_strided_slice %40 {offsets = [16, 0], sizes = [8, 32], strides = [1, 1]} : vector<32x32xf32> to vector<8x32xf32>
    %cst_71 = arith.constant dense<0.000000e+00> : vector<8x32xf32>
    %194 = tpu.matmul %192, %193, %cst_71 {dimension_numbers = #tpu.dot_dimension_numbers<[1], [0], [0], [1], [0, 0, 1, 1], [], []>} : vector<8x8xf32>, vector<8x32xf32>, vector<8x32xf32> -> vector<8x32xf32>
    %195 = arith.addf %174, %194 : vector<8x32xf32>
    %196 = vector.extract_strided_slice %129 {offsets = [0, 24], sizes = [8, 8], strides = [1, 1]} : vector<8x32xf32> to vector<8x8xf32>
    %197 = vector.extract_strided_slice %130 {offsets = [0, 24], sizes = [8, 8], strides = [1, 1]} : vector<8x32xf32> to vector<8x8xf32>
    %198 = vector.extract_strided_slice %131 {offsets = [0, 24], sizes = [8, 8], strides = [1, 1]} : vector<8x32xf32> to vector<8x8xf32>
    %cst_72 = arith.constant dense<0.000000e+00> : vector<8x8xf32>
    %199 = tpu.matmul %196, %197, %cst_72 {dimension_numbers = #tpu.dot_dimension_numbers<[1], [1], [0], [0], [0, 0, 1, 0], [], []>} : vector<8x8xf32>, vector<8x8xf32>, vector<8x8xf32> -> vector<8x8xf32>
    %cst_73 = arith.constant 0.353553385 : f32
    %200 = vector.broadcast %cst_73 : f32 to vector<8x8xf32>
    %201 = arith.mulf %199, %200 : vector<8x8xf32>
    %202 = vector.broadcast %0 : vector<1x8xf32> to vector<8x8xf32>
    %203 = arith.addf %201, %202 : vector<8x8xf32>
    %cst_74 = arith.constant dense<0xFF800000> : vector<8xf32>
    %204 = vector.multi_reduction <maximumf>, %203, %cst_74 [1] : vector<8x8xf32> to vector<8xf32>
    %205 = vector.shape_cast %204 : vector<8xf32> to vector<8x1xf32>
    %206 = vector.broadcast %205 : vector<8x1xf32> to vector<8x8xf32>
    %207 = arith.subf %203, %206 : vector<8x8xf32>
    %208 = math.exp %207 : vector<8x8xf32>
    %cst_75 = arith.constant dense<0.000000e+00> : vector<8xf32>
    %209 = vector.multi_reduction <add>, %208, %cst_75 [1] : vector<8x8xf32> to vector<8xf32>
    %210 = vector.shape_cast %209 : vector<8xf32> to vector<8x1xf32>
    %211 = vector.broadcast %210 : vector<8x1xf32> to vector<8x8xf32>
    %212 = arith.divf %208, %211 : vector<8x8xf32>
    %cst_76 = arith.constant dense<0.000000e+00> : vector<8x8xf32>
    %213 = tpu.matmul %212, %198, %cst_76 {dimension_numbers = #tpu.dot_dimension_numbers<[1], [0], [0], [1], [0, 0, 1, 1], [], []>} : vector<8x8xf32>, vector<8x8xf32>, vector<8x8xf32> -> vector<8x8xf32>
    %214 = vector.extract_strided_slice %40 {offsets = [24, 0], sizes = [8, 32], strides = [1, 1]} : vector<32x32xf32> to vector<8x32xf32>
    %cst_77 = arith.constant dense<0.000000e+00> : vector<8x32xf32>
    %215 = tpu.matmul %213, %214, %cst_77 {dimension_numbers = #tpu.dot_dimension_numbers<[1], [0], [0], [1], [0, 0, 1, 1], [], []>} : vector<8x8xf32>, vector<8x32xf32>, vector<8x32xf32> -> vector<8x32xf32>
    %216 = arith.addf %195, %215 : vector<8x32xf32>
    %217 = tpu.concatenate %128, %216 in 0 : vector<8x32xf32>, vector<8x32xf32> -> vector<16x32xf32>
    %c0_78 = arith.constant 0 : index
    %c0_79 = arith.constant 0 : index
    %c0_80 = arith.constant 0 : index
    %218 = vector.load %arg9[%c0_78, %c0_79, %c0_80] : memref<2x1x32xf32, #tpu.memory_space<vmem>>, vector<1x1x32xf32>
    %219 = vector.shape_cast %218 : vector<1x1x32xf32> to vector<1x32xf32>
    %220 = vector.broadcast %219 : vector<1x32xf32> to vector<16x32xf32>
    %221 = arith.addf %217, %220 : vector<16x32xf32>
    %222 = arith.addf %221, %5 : vector<16x32xf32>
    %c0_81 = arith.constant 0 : index
    %c0_82 = arith.constant 0 : index
    %c0_83 = arith.constant 0 : index
    %223 = vector.load %arg10[%c0_81, %c0_82, %c0_83] : memref<2x1x32xf32, #tpu.memory_space<vmem>>, vector<1x1x32xf32>
    %224 = vector.shape_cast %223 : vector<1x1x32xf32> to vector<1x32xf32>
    %c0_84 = arith.constant 0 : index
    %c0_85 = arith.constant 0 : index
    %c0_86 = arith.constant 0 : index
    %225 = vector.load %arg11[%c0_84, %c0_85, %c0_86] : memref<2x1x32xf32, #tpu.memory_space<vmem>>, vector<1x1x32xf32>
    %226 = vector.shape_cast %225 : vector<1x1x32xf32> to vector<1x32xf32>
    %cst_87 = arith.constant dense<0.000000e+00> : vector<16xf32>
    %227 = vector.multi_reduction <add>, %222, %cst_87 [1] : vector<16x32xf32> to vector<16xf32>
    %228 = vector.shape_cast %227 : vector<16xf32> to vector<16x1xf32>
    %cst_88 = arith.constant 3.200000e+01 : f32
    %229 = vector.broadcast %cst_88 : f32 to vector<16x1xf32>
    %230 = arith.divf %228, %229 : vector<16x1xf32>
    %231 = vector.broadcast %230 : vector<16x1xf32> to vector<16x32xf32>
    %232 = arith.subf %222, %231 : vector<16x32xf32>
    %233 = arith.mulf %232, %232 : vector<16x32xf32>
    %cst_89 = arith.constant dense<0.000000e+00> : vector<16xf32>
    %234 = vector.multi_reduction <add>, %233, %cst_89 [1] : vector<16x32xf32> to vector<16xf32>
    %235 = vector.shape_cast %234 : vector<16xf32> to vector<16x1xf32>
    %cst_90 = arith.constant 3.200000e+01 : f32
    %236 = vector.broadcast %cst_90 : f32 to vector<16x1xf32>
    %237 = arith.divf %235, %236 : vector<16x1xf32>
    %238 = vector.broadcast %230 : vector<16x1xf32> to vector<16x32xf32>
    %239 = arith.subf %222, %238 : vector<16x32xf32>
    %cst_91 = arith.constant 9.99999996E-13 : f32
    %240 = vector.broadcast %cst_91 : f32 to vector<16x1xf32>
    %241 = arith.addf %237, %240 : vector<16x1xf32>
    %242 = math.rsqrt %241 : vector<16x1xf32>
    %243 = vector.broadcast %242 : vector<16x1xf32> to vector<16x32xf32>
    %244 = arith.mulf %239, %243 : vector<16x32xf32>
    %245 = vector.broadcast %224 : vector<1x32xf32> to vector<16x32xf32>
    %246 = arith.mulf %244, %245 : vector<16x32xf32>
    %247 = vector.broadcast %226 : vector<1x32xf32> to vector<16x32xf32>
    %248 = arith.addf %246, %247 : vector<16x32xf32>
    %c0_92 = arith.constant 0 : index
    %c0_93 = arith.constant 0 : index
    %c0_94 = arith.constant 0 : index
    %249 = vector.load %arg12[%c0_92, %c0_93, %c0_94] : memref<2x32x64xf32, #tpu.memory_space<vmem>>, vector<1x32x64xf32>
    %250 = vector.shape_cast %249 : vector<1x32x64xf32> to vector<32x64xf32>
    %cst_95 = arith.constant dense<0.000000e+00> : vector<16x64xf32>
    %251 = tpu.matmul %248, %250, %cst_95 {dimension_numbers = #tpu.dot_dimension_numbers<[1], [0], [0], [1], [0, 0, 1, 1], [], []>} : vector<16x32xf32>, vector<32x64xf32>, vector<16x64xf32> -> vector<16x64xf32>
    %c0_96 = arith.constant 0 : index
    %c0_97 = arith.constant 0 : index
    %c0_98 = arith.constant 0 : index
    %252 = vector.load %arg13[%c0_96, %c0_97, %c0_98] : memref<2x1x64xf32, #tpu.memory_space<vmem>>, vector<1x1x64xf32>
    %253 = vector.shape_cast %252 : vector<1x1x64xf32> to vector<1x64xf32>
    %254 = vector.broadcast %253 : vector<1x64xf32> to vector<16x64xf32>
    %255 = arith.addf %251, %254 : vector<16x64xf32>
    %cst_99 = arith.constant 5.000000e-01 : f32
    %256 = vector.broadcast %cst_99 : f32 to vector<16x64xf32>
    %257 = arith.mulf %256, %255 : vector<16x64xf32>
    %cst_100 = arith.constant 0.707106769 : f32
    %258 = vector.broadcast %cst_100 : f32 to vector<16x64xf32>
    %259 = arith.mulf %255, %258 : vector<16x64xf32>
    %260 = math.erf %259 : vector<16x64xf32>
    %cst_101 = arith.constant 1.000000e+00 : f32
    %261 = vector.broadcast %cst_101 : f32 to vector<16x64xf32>
    %262 = arith.addf %261, %260 : vector<16x64xf32>
    %263 = arith.mulf %257, %262 : vector<16x64xf32>
    %c0_102 = arith.constant 0 : index
    %c0_103 = arith.constant 0 : index
    %c0_104 = arith.constant 0 : index
    %264 = vector.load %arg14[%c0_102, %c0_103, %c0_104] : memref<2x64x32xf32, #tpu.memory_space<vmem>>, vector<1x64x32xf32>
    %265 = vector.shape_cast %264 : vector<1x64x32xf32> to vector<64x32xf32>
    %cst_105 = arith.constant dense<0.000000e+00> : vector<16x32xf32>
    %266 = tpu.matmul %263, %265, %cst_105 {dimension_numbers = #tpu.dot_dimension_numbers<[1], [0], [0], [1], [0, 0, 1, 1], [], []>} : vector<16x64xf32>, vector<64x32xf32>, vector<16x32xf32> -> vector<16x32xf32>
    %c0_106 = arith.constant 0 : index
    %c0_107 = arith.constant 0 : index
    %c0_108 = arith.constant 0 : index
    %267 = vector.load %arg15[%c0_106, %c0_107, %c0_108] : memref<2x1x32xf32, #tpu.memory_space<vmem>>, vector<1x1x32xf32>
    %268 = vector.shape_cast %267 : vector<1x1x32xf32> to vector<1x32xf32>
    %269 = vector.broadcast %268 : vector<1x32xf32> to vector<16x32xf32>
    %270 = arith.addf %266, %269 : vector<16x32xf32>
    %271 = arith.addf %270, %222 : vector<16x32xf32>
    %c1 = arith.constant 1 : index
    %c0_109 = arith.constant 0 : index
    %c0_110 = arith.constant 0 : index
    %272 = vector.load %arg4[%c1, %c0_109, %c0_110] : memref<2x1x32xf32, #tpu.memory_space<vmem>>, vector<1x1x32xf32>
    %273 = vector.shape_cast %272 : vector<1x1x32xf32> to vector<1x32xf32>
    %c1_111 = arith.constant 1 : index
    %c0_112 = arith.constant 0 : index
    %c0_113 = arith.constant 0 : index
    %274 = vector.load %arg5[%c1_111, %c0_112, %c0_113] : memref<2x1x32xf32, #tpu.memory_space<vmem>>, vector<1x1x32xf32>
    %275 = vector.shape_cast %274 : vector<1x1x32xf32> to vector<1x32xf32>
    %cst_114 = arith.constant dense<0.000000e+00> : vector<16xf32>
    %276 = vector.multi_reduction <add>, %271, %cst_114 [1] : vector<16x32xf32> to vector<16xf32>
    %277 = vector.shape_cast %276 : vector<16xf32> to vector<16x1xf32>
    %cst_115 = arith.constant 3.200000e+01 : f32
    %278 = vector.broadcast %cst_115 : f32 to vector<16x1xf32>
    %279 = arith.divf %277, %278 : vector<16x1xf32>
    %280 = vector.broadcast %279 : vector<16x1xf32> to vector<16x32xf32>
    %281 = arith.subf %271, %280 : vector<16x32xf32>
    %282 = arith.mulf %281, %281 : vector<16x32xf32>
    %cst_116 = arith.constant dense<0.000000e+00> : vector<16xf32>
    %283 = vector.multi_reduction <add>, %282, %cst_116 [1] : vector<16x32xf32> to vector<16xf32>
    %284 = vector.shape_cast %283 : vector<16xf32> to vector<16x1xf32>
    %cst_117 = arith.constant 3.200000e+01 : f32
    %285 = vector.broadcast %cst_117 : f32 to vector<16x1xf32>
    %286 = arith.divf %284, %285 : vector<16x1xf32>
    %287 = vector.broadcast %279 : vector<16x1xf32> to vector<16x32xf32>
    %288 = arith.subf %271, %287 : vector<16x32xf32>
    %cst_118 = arith.constant 9.99999996E-13 : f32
    %289 = vector.broadcast %cst_118 : f32 to vector<16x1xf32>
    %290 = arith.addf %286, %289 : vector<16x1xf32>
    %291 = math.rsqrt %290 : vector<16x1xf32>
    %292 = vector.broadcast %291 : vector<16x1xf32> to vector<16x32xf32>
    %293 = arith.mulf %288, %292 : vector<16x32xf32>
    %294 = vector.broadcast %273 : vector<1x32xf32> to vector<16x32xf32>
    %295 = arith.mulf %293, %294 : vector<16x32xf32>
    %296 = vector.broadcast %275 : vector<1x32xf32> to vector<16x32xf32>
    %297 = arith.addf %295, %296 : vector<16x32xf32>
    %c1_119 = arith.constant 1 : index
    %c0_120 = arith.constant 0 : index
    %c0_121 = arith.constant 0 : index
    %298 = vector.load %arg6[%c1_119, %c0_120, %c0_121] : memref<2x32x96xf32, #tpu.memory_space<vmem>>, vector<1x32x96xf32>
    %299 = vector.shape_cast %298 : vector<1x32x96xf32> to vector<32x96xf32>
    %cst_122 = arith.constant dense<0.000000e+00> : vector<16x96xf32>
    %300 = tpu.matmul %297, %299, %cst_122 {dimension_numbers = #tpu.dot_dimension_numbers<[1], [0], [0], [1], [0, 0, 1, 1], [], []>} : vector<16x32xf32>, vector<32x96xf32>, vector<16x96xf32> -> vector<16x96xf32>
    %c1_123 = arith.constant 1 : index
    %c0_124 = arith.constant 0 : index
    %c0_125 = arith.constant 0 : index
    %301 = vector.load %arg7[%c1_123, %c0_124, %c0_125] : memref<2x1x96xf32, #tpu.memory_space<vmem>>, vector<1x1x96xf32>
    %302 = vector.shape_cast %301 : vector<1x1x96xf32> to vector<1x96xf32>
    %303 = vector.broadcast %302 : vector<1x96xf32> to vector<16x96xf32>
    %304 = arith.addf %300, %303 : vector<16x96xf32>
    %c1_126 = arith.constant 1 : index
    %c0_127 = arith.constant 0 : index
    %c0_128 = arith.constant 0 : index
    %305 = vector.load %arg8[%c1_126, %c0_127, %c0_128] : memref<2x32x32xf32, #tpu.memory_space<vmem>>, vector<1x32x32xf32>
    %306 = vector.shape_cast %305 : vector<1x32x32xf32> to vector<32x32xf32>
    %307 = vector.extract_strided_slice %304 {offsets = [0, 0], sizes = [8, 32], strides = [1, 1]} : vector<16x96xf32> to vector<8x32xf32>
    %308 = vector.extract_strided_slice %304 {offsets = [0, 32], sizes = [8, 32], strides = [1, 1]} : vector<16x96xf32> to vector<8x32xf32>
    %309 = vector.extract_strided_slice %304 {offsets = [0, 64], sizes = [8, 32], strides = [1, 1]} : vector<16x96xf32> to vector<8x32xf32>
    %cst_129 = arith.constant 0.000000e+00 : f32
    %310 = vector.broadcast %cst_129 : f32 to vector<8x32xf32>
    %311 = vector.extract_strided_slice %307 {offsets = [0, 0], sizes = [8, 8], strides = [1, 1]} : vector<8x32xf32> to vector<8x8xf32>
    %312 = vector.extract_strided_slice %308 {offsets = [0, 0], sizes = [8, 8], strides = [1, 1]} : vector<8x32xf32> to vector<8x8xf32>
    %313 = vector.extract_strided_slice %309 {offsets = [0, 0], sizes = [8, 8], strides = [1, 1]} : vector<8x32xf32> to vector<8x8xf32>
    %cst_130 = arith.constant dense<0.000000e+00> : vector<8x8xf32>
    %314 = tpu.matmul %311, %312, %cst_130 {dimension_numbers = #tpu.dot_dimension_numbers<[1], [1], [0], [0], [0, 0, 1, 0], [], []>} : vector<8x8xf32>, vector<8x8xf32>, vector<8x8xf32> -> vector<8x8xf32>
    %cst_131 = arith.constant 0.353553385 : f32
    %315 = vector.broadcast %cst_131 : f32 to vector<8x8xf32>
    %316 = arith.mulf %314, %315 : vector<8x8xf32>
    %317 = vector.broadcast %0 : vector<1x8xf32> to vector<8x8xf32>
    %318 = arith.addf %316, %317 : vector<8x8xf32>
    %cst_132 = arith.constant dense<0xFF800000> : vector<8xf32>
    %319 = vector.multi_reduction <maximumf>, %318, %cst_132 [1] : vector<8x8xf32> to vector<8xf32>
    %320 = vector.shape_cast %319 : vector<8xf32> to vector<8x1xf32>
    %321 = vector.broadcast %320 : vector<8x1xf32> to vector<8x8xf32>
    %322 = arith.subf %318, %321 : vector<8x8xf32>
    %323 = math.exp %322 : vector<8x8xf32>
    %cst_133 = arith.constant dense<0.000000e+00> : vector<8xf32>
    %324 = vector.multi_reduction <add>, %323, %cst_133 [1] : vector<8x8xf32> to vector<8xf32>
    %325 = vector.shape_cast %324 : vector<8xf32> to vector<8x1xf32>
    %326 = vector.broadcast %325 : vector<8x1xf32> to vector<8x8xf32>
    %327 = arith.divf %323, %326 : vector<8x8xf32>
    %cst_134 = arith.constant dense<0.000000e+00> : vector<8x8xf32>
    %328 = tpu.matmul %327, %313, %cst_134 {dimension_numbers = #tpu.dot_dimension_numbers<[1], [0], [0], [1], [0, 0, 1, 1], [], []>} : vector<8x8xf32>, vector<8x8xf32>, vector<8x8xf32> -> vector<8x8xf32>
    %329 = vector.extract_strided_slice %306 {offsets = [0, 0], sizes = [8, 32], strides = [1, 1]} : vector<32x32xf32> to vector<8x32xf32>
    %cst_135 = arith.constant dense<0.000000e+00> : vector<8x32xf32>
    %330 = tpu.matmul %328, %329, %cst_135 {dimension_numbers = #tpu.dot_dimension_numbers<[1], [0], [0], [1], [0, 0, 1, 1], [], []>} : vector<8x8xf32>, vector<8x32xf32>, vector<8x32xf32> -> vector<8x32xf32>
    %331 = arith.addf %310, %330 : vector<8x32xf32>
    %332 = vector.extract_strided_slice %307 {offsets = [0, 8], sizes = [8, 8], strides = [1, 1]} : vector<8x32xf32> to vector<8x8xf32>
    %333 = vector.extract_strided_slice %308 {offsets = [0, 8], sizes = [8, 8], strides = [1, 1]} : vector<8x32xf32> to vector<8x8xf32>
    %334 = vector.extract_strided_slice %309 {offsets = [0, 8], sizes = [8, 8], strides = [1, 1]} : vector<8x32xf32> to vector<8x8xf32>
    %cst_136 = arith.constant dense<0.000000e+00> : vector<8x8xf32>
    %335 = tpu.matmul %332, %333, %cst_136 {dimension_numbers = #tpu.dot_dimension_numbers<[1], [1], [0], [0], [0, 0, 1, 0], [], []>} : vector<8x8xf32>, vector<8x8xf32>, vector<8x8xf32> -> vector<8x8xf32>
    %cst_137 = arith.constant 0.353553385 : f32
    %336 = vector.broadcast %cst_137 : f32 to vector<8x8xf32>
    %337 = arith.mulf %335, %336 : vector<8x8xf32>
    %338 = vector.broadcast %0 : vector<1x8xf32> to vector<8x8xf32>
    %339 = arith.addf %337, %338 : vector<8x8xf32>
    %cst_138 = arith.constant dense<0xFF800000> : vector<8xf32>
    %340 = vector.multi_reduction <maximumf>, %339, %cst_138 [1] : vector<8x8xf32> to vector<8xf32>
    %341 = vector.shape_cast %340 : vector<8xf32> to vector<8x1xf32>
    %342 = vector.broadcast %341 : vector<8x1xf32> to vector<8x8xf32>
    %343 = arith.subf %339, %342 : vector<8x8xf32>
    %344 = math.exp %343 : vector<8x8xf32>
    %cst_139 = arith.constant dense<0.000000e+00> : vector<8xf32>
    %345 = vector.multi_reduction <add>, %344, %cst_139 [1] : vector<8x8xf32> to vector<8xf32>
    %346 = vector.shape_cast %345 : vector<8xf32> to vector<8x1xf32>
    %347 = vector.broadcast %346 : vector<8x1xf32> to vector<8x8xf32>
    %348 = arith.divf %344, %347 : vector<8x8xf32>
    %cst_140 = arith.constant dense<0.000000e+00> : vector<8x8xf32>
    %349 = tpu.matmul %348, %334, %cst_140 {dimension_numbers = #tpu.dot_dimension_numbers<[1], [0], [0], [1], [0, 0, 1, 1], [], []>} : vector<8x8xf32>, vector<8x8xf32>, vector<8x8xf32> -> vector<8x8xf32>
    %350 = vector.extract_strided_slice %306 {offsets = [8, 0], sizes = [8, 32], strides = [1, 1]} : vector<32x32xf32> to vector<8x32xf32>
    %cst_141 = arith.constant dense<0.000000e+00> : vector<8x32xf32>
    %351 = tpu.matmul %349, %350, %cst_141 {dimension_numbers = #tpu.dot_dimension_numbers<[1], [0], [0], [1], [0, 0, 1, 1], [], []>} : vector<8x8xf32>, vector<8x32xf32>, vector<8x32xf32> -> vector<8x32xf32>
    %352 = arith.addf %331, %351 : vector<8x32xf32>
    %353 = vector.extract_strided_slice %307 {offsets = [0, 16], sizes = [8, 8], strides = [1, 1]} : vector<8x32xf32> to vector<8x8xf32>
    %354 = vector.extract_strided_slice %308 {offsets = [0, 16], sizes = [8, 8], strides = [1, 1]} : vector<8x32xf32> to vector<8x8xf32>
    %355 = vector.extract_strided_slice %309 {offsets = [0, 16], sizes = [8, 8], strides = [1, 1]} : vector<8x32xf32> to vector<8x8xf32>
    %cst_142 = arith.constant dense<0.000000e+00> : vector<8x8xf32>
    %356 = tpu.matmul %353, %354, %cst_142 {dimension_numbers = #tpu.dot_dimension_numbers<[1], [1], [0], [0], [0, 0, 1, 0], [], []>} : vector<8x8xf32>, vector<8x8xf32>, vector<8x8xf32> -> vector<8x8xf32>
    %cst_143 = arith.constant 0.353553385 : f32
    %357 = vector.broadcast %cst_143 : f32 to vector<8x8xf32>
    %358 = arith.mulf %356, %357 : vector<8x8xf32>
    %359 = vector.broadcast %0 : vector<1x8xf32> to vector<8x8xf32>
    %360 = arith.addf %358, %359 : vector<8x8xf32>
    %cst_144 = arith.constant dense<0xFF800000> : vector<8xf32>
    %361 = vector.multi_reduction <maximumf>, %360, %cst_144 [1] : vector<8x8xf32> to vector<8xf32>
    %362 = vector.shape_cast %361 : vector<8xf32> to vector<8x1xf32>
    %363 = vector.broadcast %362 : vector<8x1xf32> to vector<8x8xf32>
    %364 = arith.subf %360, %363 : vector<8x8xf32>
    %365 = math.exp %364 : vector<8x8xf32>
    %cst_145 = arith.constant dense<0.000000e+00> : vector<8xf32>
    %366 = vector.multi_reduction <add>, %365, %cst_145 [1] : vector<8x8xf32> to vector<8xf32>
    %367 = vector.shape_cast %366 : vector<8xf32> to vector<8x1xf32>
    %368 = vector.broadcast %367 : vector<8x1xf32> to vector<8x8xf32>
    %369 = arith.divf %365, %368 : vector<8x8xf32>
    %cst_146 = arith.constant dense<0.000000e+00> : vector<8x8xf32>
    %370 = tpu.matmul %369, %355, %cst_146 {dimension_numbers = #tpu.dot_dimension_numbers<[1], [0], [0], [1], [0, 0, 1, 1], [], []>} : vector<8x8xf32>, vector<8x8xf32>, vector<8x8xf32> -> vector<8x8xf32>
    %371 = vector.extract_strided_slice %306 {offsets = [16, 0], sizes = [8, 32], strides = [1, 1]} : vector<32x32xf32> to vector<8x32xf32>
    %cst_147 = arith.constant dense<0.000000e+00> : vector<8x32xf32>
    %372 = tpu.matmul %370, %371, %cst_147 {dimension_numbers = #tpu.dot_dimension_numbers<[1], [0], [0], [1], [0, 0, 1, 1], [], []>} : vector<8x8xf32>, vector<8x32xf32>, vector<8x32xf32> -> vector<8x32xf32>
    %373 = arith.addf %352, %372 : vector<8x32xf32>
    %374 = vector.extract_strided_slice %307 {offsets = [0, 24], sizes = [8, 8], strides = [1, 1]} : vector<8x32xf32> to vector<8x8xf32>
    %375 = vector.extract_strided_slice %308 {offsets = [0, 24], sizes = [8, 8], strides = [1, 1]} : vector<8x32xf32> to vector<8x8xf32>
    %376 = vector.extract_strided_slice %309 {offsets = [0, 24], sizes = [8, 8], strides = [1, 1]} : vector<8x32xf32> to vector<8x8xf32>
    %cst_148 = arith.constant dense<0.000000e+00> : vector<8x8xf32>
    %377 = tpu.matmul %374, %375, %cst_148 {dimension_numbers = #tpu.dot_dimension_numbers<[1], [1], [0], [0], [0, 0, 1, 0], [], []>} : vector<8x8xf32>, vector<8x8xf32>, vector<8x8xf32> -> vector<8x8xf32>
    %cst_149 = arith.constant 0.353553385 : f32
    %378 = vector.broadcast %cst_149 : f32 to vector<8x8xf32>
    %379 = arith.mulf %377, %378 : vector<8x8xf32>
    %380 = vector.broadcast %0 : vector<1x8xf32> to vector<8x8xf32>
    %381 = arith.addf %379, %380 : vector<8x8xf32>
    %cst_150 = arith.constant dense<0xFF800000> : vector<8xf32>
    %382 = vector.multi_reduction <maximumf>, %381, %cst_150 [1] : vector<8x8xf32> to vector<8xf32>
    %383 = vector.shape_cast %382 : vector<8xf32> to vector<8x1xf32>
    %384 = vector.broadcast %383 : vector<8x1xf32> to vector<8x8xf32>
    %385 = arith.subf %381, %384 : vector<8x8xf32>
    %386 = math.exp %385 : vector<8x8xf32>
    %cst_151 = arith.constant dense<0.000000e+00> : vector<8xf32>
    %387 = vector.multi_reduction <add>, %386, %cst_151 [1] : vector<8x8xf32> to vector<8xf32>
    %388 = vector.shape_cast %387 : vector<8xf32> to vector<8x1xf32>
    %389 = vector.broadcast %388 : vector<8x1xf32> to vector<8x8xf32>
    %390 = arith.divf %386, %389 : vector<8x8xf32>
    %cst_152 = arith.constant dense<0.000000e+00> : vector<8x8xf32>
    %391 = tpu.matmul %390, %376, %cst_152 {dimension_numbers = #tpu.dot_dimension_numbers<[1], [0], [0], [1], [0, 0, 1, 1], [], []>} : vector<8x8xf32>, vector<8x8xf32>, vector<8x8xf32> -> vector<8x8xf32>
    %392 = vector.extract_strided_slice %306 {offsets = [24, 0], sizes = [8, 32], strides = [1, 1]} : vector<32x32xf32> to vector<8x32xf32>
    %cst_153 = arith.constant dense<0.000000e+00> : vector<8x32xf32>
    %393 = tpu.matmul %391, %392, %cst_153 {dimension_numbers = #tpu.dot_dimension_numbers<[1], [0], [0], [1], [0, 0, 1, 1], [], []>} : vector<8x8xf32>, vector<8x32xf32>, vector<8x32xf32> -> vector<8x32xf32>
    %394 = arith.addf %373, %393 : vector<8x32xf32>
    %395 = vector.extract_strided_slice %304 {offsets = [8, 0], sizes = [8, 32], strides = [1, 1]} : vector<16x96xf32> to vector<8x32xf32>
    %396 = vector.extract_strided_slice %304 {offsets = [8, 32], sizes = [8, 32], strides = [1, 1]} : vector<16x96xf32> to vector<8x32xf32>
    %397 = vector.extract_strided_slice %304 {offsets = [8, 64], sizes = [8, 32], strides = [1, 1]} : vector<16x96xf32> to vector<8x32xf32>
    %cst_154 = arith.constant 0.000000e+00 : f32
    %398 = vector.broadcast %cst_154 : f32 to vector<8x32xf32>
    %399 = vector.extract_strided_slice %395 {offsets = [0, 0], sizes = [8, 8], strides = [1, 1]} : vector<8x32xf32> to vector<8x8xf32>
    %400 = vector.extract_strided_slice %396 {offsets = [0, 0], sizes = [8, 8], strides = [1, 1]} : vector<8x32xf32> to vector<8x8xf32>
    %401 = vector.extract_strided_slice %397 {offsets = [0, 0], sizes = [8, 8], strides = [1, 1]} : vector<8x32xf32> to vector<8x8xf32>
    %cst_155 = arith.constant dense<0.000000e+00> : vector<8x8xf32>
    %402 = tpu.matmul %399, %400, %cst_155 {dimension_numbers = #tpu.dot_dimension_numbers<[1], [1], [0], [0], [0, 0, 1, 0], [], []>} : vector<8x8xf32>, vector<8x8xf32>, vector<8x8xf32> -> vector<8x8xf32>
    %cst_156 = arith.constant 0.353553385 : f32
    %403 = vector.broadcast %cst_156 : f32 to vector<8x8xf32>
    %404 = arith.mulf %402, %403 : vector<8x8xf32>
    %405 = vector.broadcast %0 : vector<1x8xf32> to vector<8x8xf32>
    %406 = arith.addf %404, %405 : vector<8x8xf32>
    %cst_157 = arith.constant dense<0xFF800000> : vector<8xf32>
    %407 = vector.multi_reduction <maximumf>, %406, %cst_157 [1] : vector<8x8xf32> to vector<8xf32>
    %408 = vector.shape_cast %407 : vector<8xf32> to vector<8x1xf32>
    %409 = vector.broadcast %408 : vector<8x1xf32> to vector<8x8xf32>
    %410 = arith.subf %406, %409 : vector<8x8xf32>
    %411 = math.exp %410 : vector<8x8xf32>
    %cst_158 = arith.constant dense<0.000000e+00> : vector<8xf32>
    %412 = vector.multi_reduction <add>, %411, %cst_158 [1] : vector<8x8xf32> to vector<8xf32>
    %413 = vector.shape_cast %412 : vector<8xf32> to vector<8x1xf32>
    %414 = vector.broadcast %413 : vector<8x1xf32> to vector<8x8xf32>
    %415 = arith.divf %411, %414 : vector<8x8xf32>
    %cst_159 = arith.constant dense<0.000000e+00> : vector<8x8xf32>
    %416 = tpu.matmul %415, %401, %cst_159 {dimension_numbers = #tpu.dot_dimension_numbers<[1], [0], [0], [1], [0, 0, 1, 1], [], []>} : vector<8x8xf32>, vector<8x8xf32>, vector<8x8xf32> -> vector<8x8xf32>
    %417 = vector.extract_strided_slice %306 {offsets = [0, 0], sizes = [8, 32], strides = [1, 1]} : vector<32x32xf32> to vector<8x32xf32>
    %cst_160 = arith.constant dense<0.000000e+00> : vector<8x32xf32>
    %418 = tpu.matmul %416, %417, %cst_160 {dimension_numbers = #tpu.dot_dimension_numbers<[1], [0], [0], [1], [0, 0, 1, 1], [], []>} : vector<8x8xf32>, vector<8x32xf32>, vector<8x32xf32> -> vector<8x32xf32>
    %419 = arith.addf %398, %418 : vector<8x32xf32>
    %420 = vector.extract_strided_slice %395 {offsets = [0, 8], sizes = [8, 8], strides = [1, 1]} : vector<8x32xf32> to vector<8x8xf32>
    %421 = vector.extract_strided_slice %396 {offsets = [0, 8], sizes = [8, 8], strides = [1, 1]} : vector<8x32xf32> to vector<8x8xf32>
    %422 = vector.extract_strided_slice %397 {offsets = [0, 8], sizes = [8, 8], strides = [1, 1]} : vector<8x32xf32> to vector<8x8xf32>
    %cst_161 = arith.constant dense<0.000000e+00> : vector<8x8xf32>
    %423 = tpu.matmul %420, %421, %cst_161 {dimension_numbers = #tpu.dot_dimension_numbers<[1], [1], [0], [0], [0, 0, 1, 0], [], []>} : vector<8x8xf32>, vector<8x8xf32>, vector<8x8xf32> -> vector<8x8xf32>
    %cst_162 = arith.constant 0.353553385 : f32
    %424 = vector.broadcast %cst_162 : f32 to vector<8x8xf32>
    %425 = arith.mulf %423, %424 : vector<8x8xf32>
    %426 = vector.broadcast %0 : vector<1x8xf32> to vector<8x8xf32>
    %427 = arith.addf %425, %426 : vector<8x8xf32>
    %cst_163 = arith.constant dense<0xFF800000> : vector<8xf32>
    %428 = vector.multi_reduction <maximumf>, %427, %cst_163 [1] : vector<8x8xf32> to vector<8xf32>
    %429 = vector.shape_cast %428 : vector<8xf32> to vector<8x1xf32>
    %430 = vector.broadcast %429 : vector<8x1xf32> to vector<8x8xf32>
    %431 = arith.subf %427, %430 : vector<8x8xf32>
    %432 = math.exp %431 : vector<8x8xf32>
    %cst_164 = arith.constant dense<0.000000e+00> : vector<8xf32>
    %433 = vector.multi_reduction <add>, %432, %cst_164 [1] : vector<8x8xf32> to vector<8xf32>
    %434 = vector.shape_cast %433 : vector<8xf32> to vector<8x1xf32>
    %435 = vector.broadcast %434 : vector<8x1xf32> to vector<8x8xf32>
    %436 = arith.divf %432, %435 : vector<8x8xf32>
    %cst_165 = arith.constant dense<0.000000e+00> : vector<8x8xf32>
    %437 = tpu.matmul %436, %422, %cst_165 {dimension_numbers = #tpu.dot_dimension_numbers<[1], [0], [0], [1], [0, 0, 1, 1], [], []>} : vector<8x8xf32>, vector<8x8xf32>, vector<8x8xf32> -> vector<8x8xf32>
    %438 = vector.extract_strided_slice %306 {offsets = [8, 0], sizes = [8, 32], strides = [1, 1]} : vector<32x32xf32> to vector<8x32xf32>
    %cst_166 = arith.constant dense<0.000000e+00> : vector<8x32xf32>
    %439 = tpu.matmul %437, %438, %cst_166 {dimension_numbers = #tpu.dot_dimension_numbers<[1], [0], [0], [1], [0, 0, 1, 1], [], []>} : vector<8x8xf32>, vector<8x32xf32>, vector<8x32xf32> -> vector<8x32xf32>
    %440 = arith.addf %419, %439 : vector<8x32xf32>
    %441 = vector.extract_strided_slice %395 {offsets = [0, 16], sizes = [8, 8], strides = [1, 1]} : vector<8x32xf32> to vector<8x8xf32>
    %442 = vector.extract_strided_slice %396 {offsets = [0, 16], sizes = [8, 8], strides = [1, 1]} : vector<8x32xf32> to vector<8x8xf32>
    %443 = vector.extract_strided_slice %397 {offsets = [0, 16], sizes = [8, 8], strides = [1, 1]} : vector<8x32xf32> to vector<8x8xf32>
    %cst_167 = arith.constant dense<0.000000e+00> : vector<8x8xf32>
    %444 = tpu.matmul %441, %442, %cst_167 {dimension_numbers = #tpu.dot_dimension_numbers<[1], [1], [0], [0], [0, 0, 1, 0], [], []>} : vector<8x8xf32>, vector<8x8xf32>, vector<8x8xf32> -> vector<8x8xf32>
    %cst_168 = arith.constant 0.353553385 : f32
    %445 = vector.broadcast %cst_168 : f32 to vector<8x8xf32>
    %446 = arith.mulf %444, %445 : vector<8x8xf32>
    %447 = vector.broadcast %0 : vector<1x8xf32> to vector<8x8xf32>
    %448 = arith.addf %446, %447 : vector<8x8xf32>
    %cst_169 = arith.constant dense<0xFF800000> : vector<8xf32>
    %449 = vector.multi_reduction <maximumf>, %448, %cst_169 [1] : vector<8x8xf32> to vector<8xf32>
    %450 = vector.shape_cast %449 : vector<8xf32> to vector<8x1xf32>
    %451 = vector.broadcast %450 : vector<8x1xf32> to vector<8x8xf32>
    %452 = arith.subf %448, %451 : vector<8x8xf32>
    %453 = math.exp %452 : vector<8x8xf32>
    %cst_170 = arith.constant dense<0.000000e+00> : vector<8xf32>
    %454 = vector.multi_reduction <add>, %453, %cst_170 [1] : vector<8x8xf32> to vector<8xf32>
    %455 = vector.shape_cast %454 : vector<8xf32> to vector<8x1xf32>
    %456 = vector.broadcast %455 : vector<8x1xf32> to vector<8x8xf32>
    %457 = arith.divf %453, %456 : vector<8x8xf32>
    %cst_171 = arith.constant dense<0.000000e+00> : vector<8x8xf32>
    %458 = tpu.matmul %457, %443, %cst_171 {dimension_numbers = #tpu.dot_dimension_numbers<[1], [0], [0], [1], [0, 0, 1, 1], [], []>} : vector<8x8xf32>, vector<8x8xf32>, vector<8x8xf32> -> vector<8x8xf32>
    %459 = vector.extract_strided_slice %306 {offsets = [16, 0], sizes = [8, 32], strides = [1, 1]} : vector<32x32xf32> to vector<8x32xf32>
    %cst_172 = arith.constant dense<0.000000e+00> : vector<8x32xf32>
    %460 = tpu.matmul %458, %459, %cst_172 {dimension_numbers = #tpu.dot_dimension_numbers<[1], [0], [0], [1], [0, 0, 1, 1], [], []>} : vector<8x8xf32>, vector<8x32xf32>, vector<8x32xf32> -> vector<8x32xf32>
    %461 = arith.addf %440, %460 : vector<8x32xf32>
    %462 = vector.extract_strided_slice %395 {offsets = [0, 24], sizes = [8, 8], strides = [1, 1]} : vector<8x32xf32> to vector<8x8xf32>
    %463 = vector.extract_strided_slice %396 {offsets = [0, 24], sizes = [8, 8], strides = [1, 1]} : vector<8x32xf32> to vector<8x8xf32>
    %464 = vector.extract_strided_slice %397 {offsets = [0, 24], sizes = [8, 8], strides = [1, 1]} : vector<8x32xf32> to vector<8x8xf32>
    %cst_173 = arith.constant dense<0.000000e+00> : vector<8x8xf32>
    %465 = tpu.matmul %462, %463, %cst_173 {dimension_numbers = #tpu.dot_dimension_numbers<[1], [1], [0], [0], [0, 0, 1, 0], [], []>} : vector<8x8xf32>, vector<8x8xf32>, vector<8x8xf32> -> vector<8x8xf32>
    %cst_174 = arith.constant 0.353553385 : f32
    %466 = vector.broadcast %cst_174 : f32 to vector<8x8xf32>
    %467 = arith.mulf %465, %466 : vector<8x8xf32>
    %468 = vector.broadcast %0 : vector<1x8xf32> to vector<8x8xf32>
    %469 = arith.addf %467, %468 : vector<8x8xf32>
    %cst_175 = arith.constant dense<0xFF800000> : vector<8xf32>
    %470 = vector.multi_reduction <maximumf>, %469, %cst_175 [1] : vector<8x8xf32> to vector<8xf32>
    %471 = vector.shape_cast %470 : vector<8xf32> to vector<8x1xf32>
    %472 = vector.broadcast %471 : vector<8x1xf32> to vector<8x8xf32>
    %473 = arith.subf %469, %472 : vector<8x8xf32>
    %474 = math.exp %473 : vector<8x8xf32>
    %cst_176 = arith.constant dense<0.000000e+00> : vector<8xf32>
    %475 = vector.multi_reduction <add>, %474, %cst_176 [1] : vector<8x8xf32> to vector<8xf32>
    %476 = vector.shape_cast %475 : vector<8xf32> to vector<8x1xf32>
    %477 = vector.broadcast %476 : vector<8x1xf32> to vector<8x8xf32>
    %478 = arith.divf %474, %477 : vector<8x8xf32>
    %cst_177 = arith.constant dense<0.000000e+00> : vector<8x8xf32>
    %479 = tpu.matmul %478, %464, %cst_177 {dimension_numbers = #tpu.dot_dimension_numbers<[1], [0], [0], [1], [0, 0, 1, 1], [], []>} : vector<8x8xf32>, vector<8x8xf32>, vector<8x8xf32> -> vector<8x8xf32>
    %480 = vector.extract_strided_slice %306 {offsets = [24, 0], sizes = [8, 32], strides = [1, 1]} : vector<32x32xf32> to vector<8x32xf32>
    %cst_178 = arith.constant dense<0.000000e+00> : vector<8x32xf32>
    %481 = tpu.matmul %479, %480, %cst_178 {dimension_numbers = #tpu.dot_dimension_numbers<[1], [0], [0], [1], [0, 0, 1, 1], [], []>} : vector<8x8xf32>, vector<8x32xf32>, vector<8x32xf32> -> vector<8x32xf32>
    %482 = arith.addf %461, %481 : vector<8x32xf32>
    %483 = tpu.concatenate %394, %482 in 0 : vector<8x32xf32>, vector<8x32xf32> -> vector<16x32xf32>
    %c1_179 = arith.constant 1 : index
    %c0_180 = arith.constant 0 : index
    %c0_181 = arith.constant 0 : index
    %484 = vector.load %arg9[%c1_179, %c0_180, %c0_181] : memref<2x1x32xf32, #tpu.memory_space<vmem>>, vector<1x1x32xf32>
    %485 = vector.shape_cast %484 : vector<1x1x32xf32> to vector<1x32xf32>
    %486 = vector.broadcast %485 : vector<1x32xf32> to vector<16x32xf32>
    %487 = arith.addf %483, %486 : vector<16x32xf32>
    %488 = arith.addf %487, %271 : vector<16x32xf32>
    %c1_182 = arith.constant 1 : index
    %c0_183 = arith.constant 0 : index
    %c0_184 = arith.constant 0 : index
    %489 = vector.load %arg10[%c1_182, %c0_183, %c0_184] : memref<2x1x32xf32, #tpu.memory_space<vmem>>, vector<1x1x32xf32>
    %490 = vector.shape_cast %489 : vector<1x1x32xf32> to vector<1x32xf32>
    %c1_185 = arith.constant 1 : index
    %c0_186 = arith.constant 0 : index
    %c0_187 = arith.constant 0 : index
    %491 = vector.load %arg11[%c1_185, %c0_186, %c0_187] : memref<2x1x32xf32, #tpu.memory_space<vmem>>, vector<1x1x32xf32>
    %492 = vector.shape_cast %491 : vector<1x1x32xf32> to vector<1x32xf32>
    %cst_188 = arith.constant dense<0.000000e+00> : vector<16xf32>
    %493 = vector.multi_reduction <add>, %488, %cst_188 [1] : vector<16x32xf32> to vector<16xf32>
    %494 = vector.shape_cast %493 : vector<16xf32> to vector<16x1xf32>
    %cst_189 = arith.constant 3.200000e+01 : f32
    %495 = vector.broadcast %cst_189 : f32 to vector<16x1xf32>
    %496 = arith.divf %494, %495 : vector<16x1xf32>
    %497 = vector.broadcast %496 : vector<16x1xf32> to vector<16x32xf32>
    %498 = arith.subf %488, %497 : vector<16x32xf32>
    %499 = arith.mulf %498, %498 : vector<16x32xf32>
    %cst_190 = arith.constant dense<0.000000e+00> : vector<16xf32>
    %500 = vector.multi_reduction <add>, %499, %cst_190 [1] : vector<16x32xf32> to vector<16xf32>
    %501 = vector.shape_cast %500 : vector<16xf32> to vector<16x1xf32>
    %cst_191 = arith.constant 3.200000e+01 : f32
    %502 = vector.broadcast %cst_191 : f32 to vector<16x1xf32>
    %503 = arith.divf %501, %502 : vector<16x1xf32>
    %504 = vector.broadcast %496 : vector<16x1xf32> to vector<16x32xf32>
    %505 = arith.subf %488, %504 : vector<16x32xf32>
    %cst_192 = arith.constant 9.99999996E-13 : f32
    %506 = vector.broadcast %cst_192 : f32 to vector<16x1xf32>
    %507 = arith.addf %503, %506 : vector<16x1xf32>
    %508 = math.rsqrt %507 : vector<16x1xf32>
    %509 = vector.broadcast %508 : vector<16x1xf32> to vector<16x32xf32>
    %510 = arith.mulf %505, %509 : vector<16x32xf32>
    %511 = vector.broadcast %490 : vector<1x32xf32> to vector<16x32xf32>
    %512 = arith.mulf %510, %511 : vector<16x32xf32>
    %513 = vector.broadcast %492 : vector<1x32xf32> to vector<16x32xf32>
    %514 = arith.addf %512, %513 : vector<16x32xf32>
    %c1_193 = arith.constant 1 : index
    %c0_194 = arith.constant 0 : index
    %c0_195 = arith.constant 0 : index
    %515 = vector.load %arg12[%c1_193, %c0_194, %c0_195] : memref<2x32x64xf32, #tpu.memory_space<vmem>>, vector<1x32x64xf32>
    %516 = vector.shape_cast %515 : vector<1x32x64xf32> to vector<32x64xf32>
    %cst_196 = arith.constant dense<0.000000e+00> : vector<16x64xf32>
    %517 = tpu.matmul %514, %516, %cst_196 {dimension_numbers = #tpu.dot_dimension_numbers<[1], [0], [0], [1], [0, 0, 1, 1], [], []>} : vector<16x32xf32>, vector<32x64xf32>, vector<16x64xf32> -> vector<16x64xf32>
    %c1_197 = arith.constant 1 : index
    %c0_198 = arith.constant 0 : index
    %c0_199 = arith.constant 0 : index
    %518 = vector.load %arg13[%c1_197, %c0_198, %c0_199] : memref<2x1x64xf32, #tpu.memory_space<vmem>>, vector<1x1x64xf32>
    %519 = vector.shape_cast %518 : vector<1x1x64xf32> to vector<1x64xf32>
    %520 = vector.broadcast %519 : vector<1x64xf32> to vector<16x64xf32>
    %521 = arith.addf %517, %520 : vector<16x64xf32>
    %cst_200 = arith.constant 5.000000e-01 : f32
    %522 = vector.broadcast %cst_200 : f32 to vector<16x64xf32>
    %523 = arith.mulf %522, %521 : vector<16x64xf32>
    %cst_201 = arith.constant 0.707106769 : f32
    %524 = vector.broadcast %cst_201 : f32 to vector<16x64xf32>
    %525 = arith.mulf %521, %524 : vector<16x64xf32>
    %526 = math.erf %525 : vector<16x64xf32>
    %cst_202 = arith.constant 1.000000e+00 : f32
    %527 = vector.broadcast %cst_202 : f32 to vector<16x64xf32>
    %528 = arith.addf %527, %526 : vector<16x64xf32>
    %529 = arith.mulf %523, %528 : vector<16x64xf32>
    %c1_203 = arith.constant 1 : index
    %c0_204 = arith.constant 0 : index
    %c0_205 = arith.constant 0 : index
    %530 = vector.load %arg14[%c1_203, %c0_204, %c0_205] : memref<2x64x32xf32, #tpu.memory_space<vmem>>, vector<1x64x32xf32>
    %531 = vector.shape_cast %530 : vector<1x64x32xf32> to vector<64x32xf32>
    %cst_206 = arith.constant dense<0.000000e+00> : vector<16x32xf32>
    %532 = tpu.matmul %529, %531, %cst_206 {dimension_numbers = #tpu.dot_dimension_numbers<[1], [0], [0], [1], [0, 0, 1, 1], [], []>} : vector<16x64xf32>, vector<64x32xf32>, vector<16x32xf32> -> vector<16x32xf32>
    %c1_207 = arith.constant 1 : index
    %c0_208 = arith.constant 0 : index
    %c0_209 = arith.constant 0 : index
    %533 = vector.load %arg15[%c1_207, %c0_208, %c0_209] : memref<2x1x32xf32, #tpu.memory_space<vmem>>, vector<1x1x32xf32>
    %534 = vector.shape_cast %533 : vector<1x1x32xf32> to vector<1x32xf32>
    %535 = vector.broadcast %534 : vector<1x32xf32> to vector<16x32xf32>
    %536 = arith.addf %532, %535 : vector<16x32xf32>
    %537 = arith.addf %536, %488 : vector<16x32xf32>
    %c0_210 = arith.constant 0 : index
    %c0_211 = arith.constant 0 : index
    %538 = vector.load %arg16[%c0_210, %c0_211] : memref<1x32xf32, #tpu.memory_space<vmem>>, vector<1x32xf32>
    %c0_212 = arith.constant 0 : index
    %c0_213 = arith.constant 0 : index
    %539 = vector.load %arg17[%c0_212, %c0_213] : memref<1x32xf32, #tpu.memory_space<vmem>>, vector<1x32xf32>
    %cst_214 = arith.constant dense<0.000000e+00> : vector<16xf32>
    %540 = vector.multi_reduction <add>, %537, %cst_214 [1] : vector<16x32xf32> to vector<16xf32>
    %541 = vector.shape_cast %540 : vector<16xf32> to vector<16x1xf32>
    %cst_215 = arith.constant 3.200000e+01 : f32
    %542 = vector.broadcast %cst_215 : f32 to vector<16x1xf32>
    %543 = arith.divf %541, %542 : vector<16x1xf32>
    %544 = vector.broadcast %543 : vector<16x1xf32> to vector<16x32xf32>
    %545 = arith.subf %537, %544 : vector<16x32xf32>
    %546 = arith.mulf %545, %545 : vector<16x32xf32>
    %cst_216 = arith.constant dense<0.000000e+00> : vector<16xf32>
    %547 = vector.multi_reduction <add>, %546, %cst_216 [1] : vector<16x32xf32> to vector<16xf32>
    %548 = vector.shape_cast %547 : vector<16xf32> to vector<16x1xf32>
    %cst_217 = arith.constant 3.200000e+01 : f32
    %549 = vector.broadcast %cst_217 : f32 to vector<16x1xf32>
    %550 = arith.divf %548, %549 : vector<16x1xf32>
    %551 = vector.broadcast %543 : vector<16x1xf32> to vector<16x32xf32>
    %552 = arith.subf %537, %551 : vector<16x32xf32>
    %cst_218 = arith.constant 9.99999996E-13 : f32
    %553 = vector.broadcast %cst_218 : f32 to vector<16x1xf32>
    %554 = arith.addf %550, %553 : vector<16x1xf32>
    %555 = math.rsqrt %554 : vector<16x1xf32>
    %556 = vector.broadcast %555 : vector<16x1xf32> to vector<16x32xf32>
    %557 = arith.mulf %552, %556 : vector<16x32xf32>
    %558 = vector.broadcast %538 : vector<1x32xf32> to vector<16x32xf32>
    %559 = arith.mulf %557, %558 : vector<16x32xf32>
    %560 = vector.broadcast %539 : vector<1x32xf32> to vector<16x32xf32>
    %561 = arith.addf %559, %560 : vector<16x32xf32>
    %c0_219 = arith.constant 0 : index
    %c0_220 = arith.constant 0 : index
    %562 = vector.load %arg18[%c0_219, %c0_220] : memref<16x32xf32, #tpu.memory_space<vmem>>, vector<16x32xf32>
    tpu.vector_store %arg18[%c0_219, %c0_220], %561 {strides = array<i32>} : memref<16x32xf32, #tpu.memory_space<vmem>>, vector<16x32xf32>,
    return
  }
}

</mosaic_0001>

<llo_original>
// kernel: vit_forward.1
$region0: #{vit_forward.1}
  #allocation0 [shape = 'u32[]', space=smem, size = 0x4, offset = 0x4, fixed_abs, tag = 'smem constant byte address 0x4 - core index']
  #allocation1 [shape = 'u32[144,128]{1,0:T(1,128)}', space=vmem, size = 0x12000, scoped, tag = 'internal scratch']
  %s0 = inlined_call_operand.vmem [shape: f32[16,192], index: 0, kind: input, shape index: {}]
  %s1 = inlined_call_operand.vmem [shape: f32[192,32], index: 1, kind: input, shape index: {}]
  %s2 = inlined_call_operand.vmem [shape: f32[16,32], index: 2, kind: input, shape index: {}]
  %s3 = inlined_call_operand.vmem [shape: f32[1,8], index: 3, kind: input, shape index: {}]
  %s4 = inlined_call_operand.vmem [shape: f32[2,1,32], index: 4, kind: input, shape index: {}]
  %s5 = inlined_call_operand.vmem [shape: f32[2,1,32], index: 5, kind: input, shape index: {}]
  %s6 = inlined_call_operand.vmem [shape: f32[2,32,96], index: 6, kind: input, shape index: {}]
  %s7 = inlined_call_operand.vmem [shape: f32[2,1,96], index: 7, kind: input, shape index: {}]
  %s8 = inlined_call_operand.vmem [shape: f32[2,32,32], index: 8, kind: input, shape index: {}]
  %s9 = inlined_call_operand.vmem [shape: f32[2,1,32], index: 9, kind: input, shape index: {}]
  %s10 = inlined_call_operand.vmem [shape: f32[2,1,32], index: 10, kind: input, shape index: {}]
  %s11 = inlined_call_operand.vmem [shape: f32[2,1,32], index: 11, kind: input, shape index: {}]
  %s12 = inlined_call_operand.vmem [shape: f32[2,32,64], index: 12, kind: input, shape index: {}]
  %s13 = inlined_call_operand.vmem [shape: f32[2,1,64], index: 13, kind: input, shape index: {}]
  %s14 = inlined_call_operand.vmem [shape: f32[2,64,32], index: 14, kind: input, shape index: {}]
  %s15 = inlined_call_operand.vmem [shape: f32[2,1,32], index: 15, kind: input, shape index: {}]
  %s16 = inlined_call_operand.vmem [shape: f32[1,32], index: 16, kind: input, shape index: {}]
  %s17 = inlined_call_operand.vmem [shape: f32[1,32], index: 17, kind: input, shape index: {}]
  %s18 = inlined_call_operand.vmem [shape: f32[16,32], index: 18, kind: output, shape index: {}]
  %s19 = sld [smem:[#allocation0]]
  $region82: #{vit_forward.1} parent=0
    _
  %s21 = ssub.s32 1, %s19
  %s22 = scalar_select 0, %s21, %s19
  // Predicated region
  $region2: #{vit_forward.1} parent=0 // pred_check
    _
  $region3: #{vit_forward.1} parent=0 // pred_check_branch
    %24 = sbr.rel (0) target = $region5
  $region4: #{vit_forward.1} parent=0 // pred_region
    _
  $region5: #{vit_forward.1} parent=0 // pred_fallthru
    _
  // Predicated region
  $region6: #{vit_forward.1} parent=0 // pred_check
    _
  $region7: #{vit_forward.1} parent=0 // pred_check_branch
    %26 = sbr.rel (0) target = $region9
  $region8: #{vit_forward.1} parent=0 // pred_region
    _
  $region9: #{vit_forward.1} parent=0 // pred_fallthru
    _
  // Predicated region
  $region10: #{vit_forward.1} parent=0 // pred_check
    _
  $region11: #{vit_forward.1} parent=0 // pred_check_branch
    %28 = sbr.rel (0) target = $region13
  $region12: #{vit_forward.1} parent=0 // pred_region
    _
  $region13: #{vit_forward.1} parent=0 // pred_fallthru
    _
  // Predicated region
  $region14: #{vit_forward.1} parent=0 // pred_check
    _
  $region15: #{vit_forward.1} parent=0 // pred_check_branch
    %30 = sbr.rel (0) target = $region17
  $region16: #{vit_forward.1} parent=0 // pred_region
    _
  $region17: #{vit_forward.1} parent=0 // pred_fallthru
    _
  // Predicated region
  $region18: #{vit_forward.1} parent=0 // pred_check
    _
  $region19: #{vit_forward.1} parent=0 // pred_check_branch
    %32 = sbr.rel (0) target = $region21
  $region20: #{vit_forward.1} parent=0 // pred_region
    _
  $region21: #{vit_forward.1} parent=0 // pred_fallthru
    _
  // Predicated region
  $region22: #{vit_forward.1} parent=0 // pred_check
    _
  $region23: #{vit_forward.1} parent=0 // pred_check_branch
    %34 = sbr.rel (0) target = $region25
  $region24: #{vit_forward.1} parent=0 // pred_region
    _
  $region25: #{vit_forward.1} parent=0 // pred_fallthru
    _
  // Predicated region
  $region26: #{vit_forward.1} parent=0 // pred_check
    _
  $region27: #{vit_forward.1} parent=0 // pred_check_branch
    %36 = sbr.rel (0) target = $region29
  $region28: #{vit_forward.1} parent=0 // pred_region
    _
  $region29: #{vit_forward.1} parent=0 // pred_fallthru
    _
  // Predicated region
  $region30: #{vit_forward.1} parent=0 // pred_check
    _
  $region31: #{vit_forward.1} parent=0 // pred_check_branch
    %38 = sbr.rel (0) target = $region33
  $region32: #{vit_forward.1} parent=0 // pred_region
    _
  $region33: #{vit_forward.1} parent=0 // pred_fallthru
    _
  // Predicated region
  $region34: #{vit_forward.1} parent=0 // pred_check
    _
  $region35: #{vit_forward.1} parent=0 // pred_check_branch
    %40 = sbr.rel (0) target = $region37
  $region36: #{vit_forward.1} parent=0 // pred_region
    _
  $region37: #{vit_forward.1} parent=0 // pred_fallthru
    _
  // Predicated region
  $region38: #{vit_forward.1} parent=0 // pred_check
    _
  $region39: #{vit_forward.1} parent=0 // pred_check_branch
    %42 = sbr.rel (0) target = $region41
  $region40: #{vit_forward.1} parent=0 // pred_region
    _
  $region41: #{vit_forward.1} parent=0 // pred_fallthru
    _
  // Predicated region
  $region42: #{vit_forward.1} parent=0 // pred_check
    _
  $region43: #{vit_forward.1} parent=0 // pred_check_branch
    %44 = sbr.rel (0) target = $region45
  $region44: #{vit_forward.1} parent=0 // pred_region
    _
  $region45: #{vit_forward.1} parent=0 // pred_fallthru
    _
  // Predicated region
  $region46: #{vit_forward.1} parent=0 // pred_check
    _
  $region47: #{vit_forward.1} parent=0 // pred_check_branch
    %46 = sbr.rel (0) target = $region49
  $region48: #{vit_forward.1} parent=0 // pred_region
    _
  $region49: #{vit_forward.1} parent=0 // pred_fallthru
    _
  // Predicated region
  $region50: #{vit_forward.1} parent=0 // pred_check
    _
  $region51: #{vit_forward.1} parent=0 // pred_check_branch
    %48 = sbr.rel (0) target = $region53
  $region52: #{vit_forward.1} parent=0 // pred_region
    _
  $region53: #{vit_forward.1} parent=0 // pred_fallthru
    _
  // Predicated region
  $region54: #{vit_forward.1} parent=0 // pred_check
    _
  $region55: #{vit_forward.1} parent=0 // pred_check_branch
    %50 = sbr.rel (0) target = $region57
  $region56: #{vit_forward.1} parent=0 // pred_region
    _
  $region57: #{vit_forward.1} parent=0 // pred_fallthru
    _
  // Predicated region
  $region58: #{vit_forward.1} parent=0 // pred_check
    _
  $region59: #{vit_forward.1} parent=0 // pred_check_branch
    %52 = sbr.rel (0) target = $region61
  $region60: #{vit_forward.1} parent=0 // pred_region
    _
  $region61: #{vit_forward.1} parent=0 // pred_fallthru
    _
  // Predicated region
  $region62: #{vit_forward.1} parent=0 // pred_check
    _
  $region63: #{vit_forward.1} parent=0 // pred_check_branch
    %54 = sbr.rel (0) target = $region65
  $region64: #{vit_forward.1} parent=0 // pred_region
    _
  $region65: #{vit_forward.1} parent=0 // pred_fallthru
    _
  // Predicated region
  $region66: #{vit_forward.1} parent=0 // pred_check
    _
  $region67: #{vit_forward.1} parent=0 // pred_check_branch
    %56 = sbr.rel (0) target = $region69
  $region68: #{vit_forward.1} parent=0 // pred_region
    _
  $region69: #{vit_forward.1} parent=0 // pred_fallthru
    _
  // Predicated region
  $region70: #{vit_forward.1} parent=0 // pred_check
    _
  $region71: #{vit_forward.1} parent=0 // pred_check_branch
    %58 = sbr.rel (0) target = $region73
  $region72: #{vit_forward.1} parent=0 // pred_region
    _
  $region73: #{vit_forward.1} parent=0 // pred_fallthru
    _
  %v59 = vld [vmem:[%s3] sm:$0x1]
  %v60 = vld [vmem:[%s0] sm:$0xff]
  %v61 = vld [vmem:[%s0 + $0x8] sm:$0xff]
  %v62 = vld [vmem:[%s0 + $0x10] sm:$0xff]
  %v63 = vld [vmem:[%s0 + $0x18] sm:$0xff]
  %v64 = vld [vmem:[%s1] sm:$0xff]
  %v65 = vld [vmem:[%s1 + $0x8] sm:$0xff]
  %v66 = vld [vmem:[%s1 + $0x10] sm:$0xff]
  %v67 = vld [vmem:[%s1 + $0x18] sm:$0xff]
  %v68 = vld [vmem:[%s1 + $0x20] sm:$0xff]
  %v69 = vld [vmem:[%s1 + $0x28] sm:$0xff]
  %v70 = vld [vmem:[%s1 + $0x30] sm:$0xff]
  %v71 = vld [vmem:[%s1 + $0x38] sm:$0xff]
  %v72 = vld [vmem:[%s1 + $0x40] sm:$0xff]
  %v73 = vld [vmem:[%s1 + $0x48] sm:$0xff]
  %v74 = vld [vmem:[%s1 + $0x50] sm:$0xff]
  %v75 = vld [vmem:[%s1 + $0x58] sm:$0xff]
  %v76 = vld [vmem:[%s1 + $0x60] sm:$0xff]
  %v77 = vld [vmem:[%s1 + $0x68] sm:$0xff]
  %v78 = vld [vmem:[%s1 + $0x70] sm:$0xff]
  %v79 = vld [vmem:[%s1 + $0x78] sm:$0xff]
  %v80 = vld [vmem:[%s1 + $0x80] sm:$0xff]
  %v81 = vld [vmem:[%s1 + $0x88] sm:$0xff]
  %v82 = vld [vmem:[%s1 + $0x90] sm:$0xff]
  %v83 = vld [vmem:[%s1 + $0x98] sm:$0xff]
  %v84 = vld [vmem:[%s1 + $0xa0] sm:$0xff]
  %v85 = vld [vmem:[%s1 + $0xa8] sm:$0xff]
  %v86 = vld [vmem:[%s1 + $0xb0] sm:$0xff]
  %v87 = vld [vmem:[%s1 + $0xb8] sm:$0xff]
  %v88 = vld [vmem:[%s2] sm:$0xff]
  %v89 = vld [vmem:[%s2 + $0x8] sm:$0xff]
  %vm90 = vcmask 523264
  %v92 = vsel %vm90, %v61, 0
  %v95 = vsel %vm90, %v63, 0
  %97 = vmatprep.subr.mxu0 0.0
  %98 = vmatpush1.msra.mxu0 %v64
  %99 = vmatprep.subr.mxu0 0.0
  %100 = vmatpush1.msra.mxu0 %v65
  %101 = vmatprep.subr.mxu0 0.0
  %102 = vmatpush1.msra.mxu0 %v66
  %103 = vmatprep.subr.mxu0 0.0
  %104 = vmatpush1.msra.mxu0 %v67
  %105 = vmatprep.subr.mxu0 0.0
  %106 = vmatpush1.msra.mxu0 %v68
  %107 = vmatprep.subr.mxu0 0.0
  %108 = vmatpush1.msra.mxu0 %v69
  %109 = vmatprep.subr.mxu0 0.0
  %110 = vmatpush1.msra.mxu0 %v70
  %111 = vmatprep.subr.mxu0 0.0
  %112 = vmatpush1.msra.mxu0 %v71
  %113 = vmatprep.subr.mxu0 0.0
  %114 = vmatpush1.msra.mxu0 %v72
  %115 = vmatprep.subr.mxu0 0.0
  %116 = vmatpush1.msra.mxu0 %v73
  %117 = vmatprep.subr.mxu0 0.0
  %118 = vmatpush1.msra.mxu0 %v74
  %119 = vmatprep.subr.mxu0 0.0
  %120 = vmatpush1.msra.mxu0 %v75
  %121 = vmatprep.subr.mxu0 0.0
  %122 = vmatpush1.msra.mxu0 %v76
  %123 = vmatprep.subr.mxu0 0.0
  %124 = vmatpush1.msra.mxu0 %v77
  %125 = vmatprep.subr.mxu0 0.0
  %126 = vmatpush1.msra.mxu0 %v78
  %127 = vmatprep.subr.mxu0 0.0
  %128 = vmatpush1.msra.mxu0 %v79
  %129 = vmatprep.subr.mxu0 0.0
  %130 = vmatpush1.msra.mxu0 %v80
  %131 = vmatprep.subr.mxu0 0.0
  %132 = vmatpush1.msra.mxu0 %v81
  %133 = vmatprep.subr.mxu0 0.0
  %134 = vmatpush1.msra.mxu0 %v82
  %135 = vmatprep.subr.mxu0 0.0
  %136 = vmatpush1.msra.mxu0 %v83
  %137 = vmatprep.subr.mxu0 0.0
  %138 = vmatpush1.msra.mxu0 %v84
  %139 = vmatprep.subr.mxu0 0.0
  %140 = vmatpush1.msra.mxu0 %v85
  %141 = vmatprep.subr.mxu0 0.0
  %142 = vmatpush1.msra.mxu0 %v86
  %143 = vmatprep.subr.mxu0 0.0
  %144 = vmatpush1.msra.mxu0 %v87
  %145 = vmatprep.subr.mxu0 0.0
  %146 = vmatpush1.msra.mxu0 0.0
  %147 = vmatprep.subr.mxu0 0.0
  %148 = vmatpush1.msra.mxu0 0.0
  %149 = vmatprep.subr.mxu0 0.0
  %150 = vmatpush1.msra.mxu0 0.0
  %151 = vmatprep.subr.mxu0 0.0
  %152 = vmatpush1.msra.mxu0 0.0
  %153 = vmatprep.subr.mxu0 0.0
  %154 = vmatpush1.msra.mxu0 0.0
  %155 = vmatprep.subr.mxu0 0.0
  %156 = vmatpush1.msra.mxu0 0.0
  %157 = vmatprep.subr.mxu0 0.0
  %158 = vmatpush1.msra.mxu0 0.0
  %159 = vmatprep.subr.mxu0 0.0
  %160 = vmatpush1.msra.mxu0 0.0
  %161 = vmatprep.mubr.f32.mxu0 %v92
  %162 = vmatmul.mubr.f32.gmra.mrb[0].mxu0 %v60
  %v163 = vpop.f32.mrb[0].mxu0
  %v164 = vadd.f32 %v88, %v163
  %v165 = vpop.f32.mrb[0].mxu0
  %166 = vmatprep.mubr.f32.mxu0 %v95
  %167 = vmatmul.mubr.f32.gmra.mrb[0].mxu0 %v62
  %v168 = vpop.f32.mrb[0].mxu0
  %v169 = vadd.f32 %v89, %v168
  %v170 = vpop.f32.mrb[0].mxu0
  %171 = vdwg.mxu0
  %v172 = vld [vmem:[%s4] sm:$0x1]
  %v173 = vld [vmem:[%s5] sm:$0x1]
  %vm174 = vcmask 261120
  %v175 = vsel %vm174, %v164, 0.0
  %176 = vadd.xlane.f32.xlu0 %v175
  %v177 = vpop.xlane.xlu0 %176
  %v178 = vsel %vm174, %v169, 0.0
  %179 = vadd.xlane.f32.xlu0 %v178
  %v180 = vpop.xlane.xlu0 %179
  %v181 = vrcp.pop 32.0
  %v182 = vmul.f32 %v177, %v181
  %v183 = vmul.f32 %v180, %v181
  %v184 = vsub.f32 %v164, %v182
  %v185 = vsub.f32 %v169, %v183
  %v186 = vmul.f32 %v184, %v184
  %v187 = vmul.f32 %v185, %v185
  %v188 = vsel %vm174, %v186, 0.0
  %189 = vadd.xlane.f32.xlu0 %v188
  %v190 = vpop.xlane.xlu0 %189
  %v191 = vsel %vm174, %v187, 0.0
  %192 = vadd.xlane.f32.xlu0 %v191
  %v193 = vpop.xlane.xlu0 %192
  %v194 = vmul.f32 %v190, %v181
  %v195 = vmul.f32 %v193, %v181
  %v196 = vadd.f32 %v194, 1e-12
  %v197 = vadd.f32 %v195, 1e-12
  %v198 = vrsqrt.pop %v196
  %v199 = vrsqrt.pop %v197
  %v200 = vmul.f32 %v184, %v198
  %v201 = vmul.f32 %v185, %v199
  %v203 = vlaneseq
  %v204 = vshrl.u32 %v203, 7
  %v205 = vsub.s32 0, %v204
  %v206 = vrot.slane %v172, %v205
  %v208 = vmul.f32 %v200, %v206
  %v209 = vmul.f32 %v201, %v206
  %v211 = vlaneseq
  %v212 = vshrl.u32 %v211, 7
  %v213 = vsub.s32 0, %v212
  %v214 = vrot.slane %v173, %v213
  %v216 = vadd.f32 %v208, %v214
  %v217 = vadd.f32 %v209, %v214
  %v218 = vld [vmem:[%s6] sm:$0xff]
  %v219 = vld [vmem:[%s6 + $0x8] sm:$0xff]
  %v220 = vld [vmem:[%s6 + $0x10] sm:$0xff]
  %v221 = vld [vmem:[%s6 + $0x18] sm:$0xff]
  %v222 = vld [vmem:[%s7] sm:$0x1]
  %v224 = vlaneseq
  %v225 = vshrl.u32 %v224, 7
  %v226 = vsub.s32 0, %v225
  %v227 = vrot.slane %v222, %v226
  %v230 = vsel %vm174, %v216, 0
  %v233 = vsel %vm174, %v217, 0
  %235 = vmatprep.subr.mxu0 0.0
  %236 = vmatpush1.msra.mxu0 %v218
  %237 = vmatprep.subr.mxu0 0.0
  %238 = vmatpush1.msra.mxu0 %v219
  %239 = vmatprep.subr.mxu0 0.0
  %240 = vmatpush1.msra.mxu0 %v220
  %241 = vmatprep.subr.mxu0 0.0
  %242 = vmatpush1.msra.mxu0 %v221
  %243 = vmatprep.subr.mxu0 0.0
  %244 = vmatpush1.msra.mxu0 0.0
  %245 = vmatprep.subr.mxu0 0.0
  %246 = vmatpush1.msra.mxu0 0.0
  %247 = vmatprep.subr.mxu0 0.0
  %248 = vmatpush1.msra.mxu0 0.0
  %249 = vmatprep.subr.mxu0 0.0
  %250 = vmatpush1.msra.mxu0 0.0
  %251 = vmatprep.subr.mxu0 0.0
  %252 = vmatpush1.msra.mxu0 0.0
  %253 = vmatprep.subr.mxu0 0.0
  %254 = vmatpush1.msra.mxu0 0.0
  %255 = vmatprep.subr.mxu0 0.0
  %256 = vmatpush1.msra.mxu0 0.0
  %257 = vmatprep.subr.mxu0 0.0
  %258 = vmatpush1.msra.mxu0 0.0
  %259 = vmatprep.subr.mxu0 0.0
  %260 = vmatpush1.msra.mxu0 0.0
  %261 = vmatprep.subr.mxu0 0.0
  %262 = vmatpush1.msra.mxu0 0.0
  %263 = vmatprep.subr.mxu0 0.0
  %264 = vmatpush1.msra.mxu0 0.0
  %265 = vmatprep.subr.mxu0 0.0
  %266 = vmatpush1.msra.mxu0 0.0
  %267 = vmatprep.subr.mxu0 0.0
  %268 = vmatpush1.msra.mxu0 0.0
  %269 = vmatprep.subr.mxu0 0.0
  %270 = vmatpush1.msra.mxu0 0.0
  %271 = vmatprep.subr.mxu0 0.0
  %272 = vmatpush1.msra.mxu0 0.0
  %273 = vmatprep.subr.mxu0 0.0
  %274 = vmatpush1.msra.mxu0 0.0
  %275 = vmatprep.subr.mxu0 0.0
  %276 = vmatpush1.msra.mxu0 0.0
  %277 = vmatprep.subr.mxu0 0.0
  %278 = vmatpush1.msra.mxu0 0.0
  %279 = vmatprep.subr.mxu0 0.0
  %280 = vmatpush1.msra.mxu0 0.0
  %281 = vmatprep.subr.mxu0 0.0
  %282 = vmatpush1.msra.mxu0 0.0
  %283 = vmatprep.subr.mxu0 0.0
  %284 = vmatpush1.msra.mxu0 0.0
  %285 = vmatprep.subr.mxu0 0.0
  %286 = vmatpush1.msra.mxu0 0.0
  %287 = vmatprep.subr.mxu0 0.0
  %288 = vmatpush1.msra.mxu0 0.0
  %289 = vmatprep.subr.mxu0 0.0
  %290 = vmatpush1.msra.mxu0 0.0
  %291 = vmatprep.subr.mxu0 0.0
  %292 = vmatpush1.msra.mxu0 0.0
  %293 = vmatprep.subr.mxu0 0.0
  %294 = vmatpush1.msra.mxu0 0.0
  %295 = vmatprep.subr.mxu0 0.0
  %296 = vmatpush1.msra.mxu0 0.0
  %297 = vmatprep.subr.mxu0 0.0
  %298 = vmatpush1.msra.mxu0 0.0
  %299 = vmatprep.mubr.f32.mxu0 0.0
  %300 = vmatmul.mubr.f32.gmra.mrb[0].mxu0 %v230
  %v301 = vpop.f32.mrb[0].mxu0
  %v302 = vadd.f32 %v227, %v301
  %v303 = vpop.f32.mrb[0].mxu0
  %304 = vmatprep.mubr.f32.mxu0 0.0
  %305 = vmatmul.mubr.f32.gmra.mrb[0].mxu0 %v233
  %v306 = vpop.f32.mrb[0].mxu0
  %v307 = vadd.f32 %v227, %v306
  %v308 = vpop.f32.mrb[0].mxu0
  %309 = vdwg.mxu0
  %v310 = vld [vmem:[%s8] sm:$0xff]
  %v311 = vld [vmem:[%s8 + $0x8] sm:$0xff]
  %v312 = vld [vmem:[%s8 + $0x10] sm:$0xff]
  %v313 = vld [vmem:[%s8 + $0x18] sm:$0xff]
  %315 = vrot.lane.b32.xlu0 %v302, 96
  %v316 = vpop.permute.xlu0 %315
  %vm317 = vcmask 64512
  %v318 = vsel %vm317, %v302, 0
  %v320 = vsel %vm317, %v316, 0
  %322 = vmatprep.subr.mxu0 0.0
  %323 = vmatpush1.xpose.msra.mxu0 %v320
  %324 = vmatprep.subr.mxu0 0.0
  %325 = vmatpush1.xpose.msra.mxu0 0.0
  %326 = vmatprep.subr.mxu0 0.0
  %327 = vmatpush1.xpose.msra.mxu0 0.0
  %328 = vmatprep.subr.mxu0 0.0
  %329 = vmatpush1.xpose.msra.mxu0 0.0
  %330 = vmatprep.subr.mxu0 0.0
  %331 = vmatpush1.xpose.msra.mxu0 0.0
  %332 = vmatprep.subr.mxu0 0.0
  %333 = vmatpush1.xpose.msra.mxu0 0.0
  %334 = vmatprep.subr.mxu0 0.0
  %335 = vmatpush1.xpose.msra.mxu0 0.0
  %336 = vmatprep.subr.mxu0 0.0
  %337 = vmatpush1.xpose.msra.mxu0 0.0
  %338 = vmatprep.subr.mxu0 0.0
  %339 = vmatpush1.xpose.msra.mxu0 0.0
  %340 = vmatprep.subr.mxu0 0.0
  %341 = vmatpush1.xpose.msra.mxu0 0.0
  %342 = vmatprep.subr.mxu0 0.0
  %343 = vmatpush1.xpose.msra.mxu0 0.0
  %344 = vmatprep.subr.mxu0 0.0
  %345 = vmatpush1.xpose.msra.mxu0 0.0
  %346 = vmatprep.subr.mxu0 0.0
  %347 = vmatpush1.xpose.msra.mxu0 0.0
  %348 = vmatprep.subr.mxu0 0.0
  %349 = vmatpush1.xpose.msra.mxu0 0.0
  %350 = vmatprep.subr.mxu0 0.0
  %351 = vmatpush1.xpose.msra.mxu0 0.0
  %352 = vmatprep.subr.mxu0 0.0
  %353 = vmatpush1.xpose.msra.mxu0 0.0
  %354 = vmatprep.subr.mxu0 0.0
  %355 = vmatpush1.xpose.msra.mxu0 0.0
  %356 = vmatprep.subr.mxu0 0.0
  %357 = vmatpush1.xpose.msra.mxu0 0.0
  %358 = vmatprep.subr.mxu0 0.0
  %359 = vmatpush1.xpose.msra.mxu0 0.0
  %360 = vmatprep.subr.mxu0 0.0
  %361 = vmatpush1.xpose.msra.mxu0 0.0
  %362 = vmatprep.subr.mxu0 0.0
  %363 = vmatpush1.xpose.msra.mxu0 0.0
  %364 = vmatprep.subr.mxu0 0.0
  %365 = vmatpush1.xpose.msra.mxu0 0.0
  %366 = vmatprep.subr.mxu0 0.0
  %367 = vmatpush1.xpose.msra.mxu0 0.0
  %368 = vmatprep.subr.mxu0 0.0
  %369 = vmatpush1.xpose.msra.mxu0 0.0
  %370 = vmatprep.subr.mxu0 0.0
  %371 = vmatpush1.xpose.msra.mxu0 0.0
  %372 = vmatprep.subr.mxu0 0.0
  %373 = vmatpush1.xpose.msra.mxu0 0.0
  %374 = vmatprep.subr.mxu0 0.0
  %375 = vmatpush1.xpose.msra.mxu0 0.0
  %376 = vmatprep.subr.mxu0 0.0
  %377 = vmatpush1.xpose.msra.mxu0 0.0
  %378 = vmatprep.subr.mxu0 0.0
  %379 = vmatpush1.xpose.msra.mxu0 0.0
  %380 = vmatprep.subr.mxu0 0.0
  %381 = vmatpush1.xpose.msra.mxu0 0.0
  %382 = vmatprep.subr.mxu0 0.0
  %383 = vmatpush1.xpose.msra.mxu0 0.0
  %384 = vmatprep.subr.mxu0 0.0
  %385 = vmatpush1.xpose.msra.mxu0 0.0
  %386 = vmatprep.mubr.f32.mxu0 0.0
  %387 = vmatmul.mubr.f32.gmra.mrb[0].mxu0 %v318
  %v388 = vpop.f32.mrb[0].mxu0
  %v389 = vadd.f32 0.0, %v388
  %v390 = vpop.f32.mrb[0].mxu0
  %391 = vdwg.mxu0
  %v392 = vmul.f32 %v389, 0.35355338
  %v394 = vlaneseq
  %v395 = vshrl.u32 %v394, 7
  %v396 = vsub.s32 0, %v395
  %v397 = vrot.slane %v59, %v396
  %v399 = vadd.f32 %v392, %v397
  %v400 = vsel %vm317, %v399, -inf
  %401 = vmax.xlane.f32.xlu0 %v400
  %v402 = vpop.xlane.xlu0 %401
  %v403 = vsub.f32 %v399, %v402
  %v404 = vmul.f32 %v403, 1.442695
  %v405 = vpow.pop %v404
  %v406 = vsel %vm317, %v405, 0.0
  %407 = vadd.xlane.f32.xlu0 %v406
  %v408 = vpop.xlane.xlu0 %407
  %v409 = vrcp.pop %v408
  %v410 = vmul.f32 %v405, %v409
  %411 = vrot.lane.b32.xlu0 %v302, 64
  %v412 = vpop.permute.xlu0 %411
  %v415 = vsel %vm317, %v410, 0
  %417 = vmatprep.subr.mxu0 0.0
  %418 = vmatpush1.msra.mxu0 %v412
  %419 = vmatprep.subr.mxu0 0.0
  %420 = vmatpush1.msra.mxu0 0.0
  %421 = vmatprep.subr.mxu0 0.0
  %422 = vmatpush1.msra.mxu0 0.0
  %423 = vmatprep.subr.mxu0 0.0
  %424 = vmatpush1.msra.mxu0 0.0
  %425 = vmatprep.subr.mxu0 0.0
  %426 = vmatpush1.msra.mxu0 0.0
  %427 = vmatprep.subr.mxu0 0.0
  %428 = vmatpush1.msra.mxu0 0.0
  %429 = vmatprep.subr.mxu0 0.0
  %430 = vmatpush1.msra.mxu0 0.0
  %431 = vmatprep.subr.mxu0 0.0
  %432 = vmatpush1.msra.mxu0 0.0
  %433 = vmatprep.subr.mxu0 0.0
  %434 = vmatpush1.msra.mxu0 0.0
  %435 = vmatprep.subr.mxu0 0.0
  %436 = vmatpush1.msra.mxu0 0.0
  %437 = vmatprep.subr.mxu0 0.0
  %438 = vmatpush1.msra.mxu0 0.0
  %439 = vmatprep.subr.mxu0 0.0
  %440 = vmatpush1.msra.mxu0 0.0
  %441 = vmatprep.subr.mxu0 0.0
  %442 = vmatpush1.msra.mxu0 0.0
  %443 = vmatprep.subr.mxu0 0.0
  %444 = vmatpush1.msra.mxu0 0.0
  %445 = vmatprep.subr.mxu0 0.0
  %446 = vmatpush1.msra.mxu0 0.0
  %447 = vmatprep.subr.mxu0 0.0
  %448 = vmatpush1.msra.mxu0 0.0
  %449 = vmatprep.subr.mxu0 0.0
  %450 = vmatpush1.msra.mxu0 0.0
  %451 = vmatprep.subr.mxu0 0.0
  %452 = vmatpush1.msra.mxu0 0.0
  %453 = vmatprep.subr.mxu0 0.0
  %454 = vmatpush1.msra.mxu0 0.0
  %455 = vmatprep.subr.mxu0 0.0
  %456 = vmatpush1.msra.mxu0 0.0
  %457 = vmatprep.subr.mxu0 0.0
  %458 = vmatpush1.msra.mxu0 0.0
  %459 = vmatprep.subr.mxu0 0.0
  %460 = vmatpush1.msra.mxu0 0.0
  %461 = vmatprep.subr.mxu0 0.0
  %462 = vmatpush1.msra.mxu0 0.0
  %463 = vmatprep.subr.mxu0 0.0
  %464 = vmatpush1.msra.mxu0 0.0
  %465 = vmatprep.subr.mxu0 0.0
  %466 = vmatpush1.msra.mxu0 0.0
  %467 = vmatprep.subr.mxu0 0.0
  %468 = vmatpush1.msra.mxu0 0.0
  %469 = vmatprep.subr.mxu0 0.0
  %470 = vmatpush1.msra.mxu0 0.0
  %471 = vmatprep.subr.mxu0 0.0
  %472 = vmatpush1.msra.mxu0 0.0
  %473 = vmatprep.subr.mxu0 0.0
  %474 = vmatpush1.msra.mxu0 0.0
  %475 = vmatprep.subr.mxu0 0.0
  %476 = vmatpush1.msra.mxu0 0.0
  %477 = vmatprep.subr.mxu0 0.0
  %478 = vmatpush1.msra.mxu0 0.0
  %479 = vmatprep.subr.mxu0 0.0
  %480 = vmatpush1.msra.mxu0 0.0
  %481 = vmatprep.mubr.f32.mxu0 0.0
  %482 = vmatmul.mubr.f32.gmra.mrb[0].mxu0 %v415
  %v483 = vpop.f32.mrb[0].mxu0
  %v484 = vadd.f32 0.0, %v483
  %v485 = vpop.f32.mrb[0].mxu0
  %486 = vdwg.mxu0
  %487 = vrot.lane.b32.xlu0 %v302, 120
  %v488 = vpop.permute.xlu0 %487
  %489 = vrot.lane.b32.xlu0 %v302, 88
  %v490 = vpop.permute.xlu0 %489
  %v491 = vsel %vm317, %v488, 0
  %v493 = vsel %vm317, %v490, 0
  %495 = vmatprep.subr.mxu0 0.0
  %496 = vmatpush1.xpose.msra.mxu0 %v493
  %497 = vmatprep.subr.mxu0 0.0
  %498 = vmatpush1.xpose.msra.mxu0 0.0
  %499 = vmatprep.subr.mxu0 0.0
  %500 = vmatpush1.xpose.msra.mxu0 0.0
  %501 = vmatprep.subr.mxu0 0.0
  %502 = vmatpush1.xpose.msra.mxu0 0.0
  %503 = vmatprep.subr.mxu0 0.0
  %504 = vmatpush1.xpose.msra.mxu0 0.0
  %505 = vmatprep.subr.mxu0 0.0
  %506 = vmatpush1.xpose.msra.mxu0 0.0
  %507 = vmatprep.subr.mxu0 0.0
  %508 = vmatpush1.xpose.msra.mxu0 0.0
  %509 = vmatprep.subr.mxu0 0.0
  %510 = vmatpush1.xpose.msra.mxu0 0.0
  %511 = vmatprep.subr.mxu0 0.0
  %512 = vmatpush1.xpose.msra.mxu0 0.0
  %513 = vmatprep.subr.mxu0 0.0
  %514 = vmatpush1.xpose.msra.mxu0 0.0
  %515 = vmatprep.subr.mxu0 0.0
  %516 = vmatpush1.xpose.msra.mxu0 0.0
  %517 = vmatprep.subr.mxu0 0.0
  %518 = vmatpush1.xpose.msra.mxu0 0.0
  %519 = vmatprep.subr.mxu0 0.0
  %520 = vmatpush1.xpose.msra.mxu0 0.0
  %521 = vmatprep.subr.mxu0 0.0
  %522 = vmatpush1.xpose.msra.mxu0 0.0
  %523 = vmatprep.subr.mxu0 0.0
  %524 = vmatpush1.xpose.msra.mxu0 0.0
  %525 = vmatprep.subr.mxu0 0.0
  %526 = vmatpush1.xpose.msra.mxu0 0.0
  %527 = vmatprep.subr.mxu0 0.0
  %528 = vmatpush1.xpose.msra.mxu0 0.0
  %529 = vmatprep.subr.mxu0 0.0
  %530 = vmatpush1.xpose.msra.mxu0 0.0
  %531 = vmatprep.subr.mxu0 0.0
  %532 = vmatpush1.xpose.msra.mxu0 0.0
  %533 = vmatprep.subr.mxu0 0.0
  %534 = vmatpush1.xpose.msra.mxu0 0.0
  %535 = vmatprep.subr.mxu0 0.0
  %536 = vmatpush1.xpose.msra.mxu0 0.0
  %537 = vmatprep.subr.mxu0 0.0
  %538 = vmatpush1.xpose.msra.mxu0 0.0
  %539 = vmatprep.subr.mxu0 0.0
  %540 = vmatpush1.xpose.msra.mxu0 0.0
  %541 = vmatprep.subr.mxu0 0.0
  %542 = vmatpush1.xpose.msra.mxu0 0.0
  %543 = vmatprep.subr.mxu0 0.0
  %544 = vmatpush1.xpose.msra.mxu0 0.0
  %545 = vmatprep.subr.mxu0 0.0
  %546 = vmatpush1.xpose.msra.mxu0 0.0
  %547 = vmatprep.subr.mxu0 0.0
  %548 = vmatpush1.xpose.msra.mxu0 0.0
  %549 = vmatprep.subr.mxu0 0.0
  %550 = vmatpush1.xpose.msra.mxu0 0.0
  %551 = vmatprep.subr.mxu0 0.0
  %552 = vmatpush1.xpose.msra.mxu0 0.0
  %553 = vmatprep.subr.mxu0 0.0
  %554 = vmatpush1.xpose.msra.mxu0 0.0
  %555 = vmatprep.subr.mxu0 0.0
  %556 = vmatpush1.xpose.msra.mxu0 0.0
  %557 = vmatprep.subr.mxu0 0.0
  %558 = vmatpush1.xpose.msra.mxu0 0.0
  %559 = vmatprep.mubr.f32.mxu0 0.0
  %560 = vmatmul.mubr.f32.gmra.mrb[0].mxu0 %v491
  %v561 = vpop.f32.mrb[0].mxu0
  %v562 = vadd.f32 0.0, %v561
  %v563 = vpop.f32.mrb[0].mxu0
  %564 = vdwg.mxu0
  %v565 = vmul.f32 %v562, 0.35355338
  %v566 = vadd.f32 %v565, %v397
  %v567 = vsel %vm317, %v566, -inf
  %568 = vmax.xlane.f32.xlu0 %v567
  %v569 = vpop.xlane.xlu0 %568
  %v570 = vsub.f32 %v566, %v569
  %v571 = vmul.f32 %v570, 1.442695
  %v572 = vpow.pop %v571
  %v573 = vsel %vm317, %v572, 0.0
  %574 = vadd.xlane.f32.xlu0 %v573
  %v575 = vpop.xlane.xlu0 %574
  %v576 = vrcp.pop %v575
  %v577 = vmul.f32 %v572, %v576
  %578 = vrot.lane.b32.xlu0 %v302, 56
  %v579 = vpop.permute.xlu0 %578
  %v582 = vsel %vm317, %v577, 0
  %584 = vmatprep.subr.mxu0 0.0
  %585 = vmatpush1.msra.mxu0 %v579
  %586 = vmatprep.subr.mxu0 0.0
  %587 = vmatpush1.msra.mxu0 0.0
  %588 = vmatprep.subr.mxu0 0.0
  %589 = vmatpush1.msra.mxu0 0.0
  %590 = vmatprep.subr.mxu0 0.0
  %591 = vmatpush1.msra.mxu0 0.0
  %592 = vmatprep.subr.mxu0 0.0
  %593 = vmatpush1.msra.mxu0 0.0
  %594 = vmatprep.subr.mxu0 0.0
  %595 = vmatpush1.msra.mxu0 0.0
  %596 = vmatprep.subr.mxu0 0.0
  %597 = vmatpush1.msra.mxu0 0.0
  %598 = vmatprep.subr.mxu0 0.0
  %599 = vmatpush1.msra.mxu0 0.0
  %600 = vmatprep.subr.mxu0 0.0
  %601 = vmatpush1.msra.mxu0 0.0
  %602 = vmatprep.subr.mxu0 0.0
  %603 = vmatpush1.msra.mxu0 0.0
  %604 = vmatprep.subr.mxu0 0.0
  %605 = vmatpush1.msra.mxu0 0.0
  %606 = vmatprep.subr.mxu0 0.0
  %607 = vmatpush1.msra.mxu0 0.0
  %608 = vmatprep.subr.mxu0 0.0
  %609 = vmatpush1.msra.mxu0 0.0
  %610 = vmatprep.subr.mxu0 0.0
  %611 = vmatpush1.msra.mxu0 0.0
  %612 = vmatprep.subr.mxu0 0.0
  %613 = vmatpush1.msra.mxu0 0.0
  %614 = vmatprep.subr.mxu0 0.0
  %615 = vmatpush1.msra.mxu0 0.0
  %616 = vmatprep.subr.mxu0 0.0
  %617 = vmatpush1.msra.mxu0 0.0
  %618 = vmatprep.subr.mxu0 0.0
  %619 = vmatpush1.msra.mxu0 0.0
  %620 = vmatprep.subr.mxu0 0.0
  %621 = vmatpush1.msra.mxu0 0.0
  %622 = vmatprep.subr.mxu0 0.0
  %623 = vmatpush1.msra.mxu0 0.0
  %624 = vmatprep.subr.mxu0 0.0
  %625 = vmatpush1.msra.mxu0 0.0
  %626 = vmatprep.subr.mxu0 0.0
  %627 = vmatpush1.msra.mxu0 0.0
  %628 = vmatprep.subr.mxu0 0.0
  %629 = vmatpush1.msra.mxu0 0.0
  %630 = vmatprep.subr.mxu0 0.0
  %631 = vmatpush1.msra.mxu0 0.0
  %632 = vmatprep.subr.mxu0 0.0
  %633 = vmatpush1.msra.mxu0 0.0
  %634 = vmatprep.subr.mxu0 0.0
  %635 = vmatpush1.msra.mxu0 0.0
  %636 = vmatprep.subr.mxu0 0.0
  %637 = vmatpush1.msra.mxu0 0.0
  %638 = vmatprep.subr.mxu0 0.0
  %639 = vmatpush1.msra.mxu0 0.0
  %640 = vmatprep.subr.mxu0 0.0
  %641 = vmatpush1.msra.mxu0 0.0
  %642 = vmatprep.subr.mxu0 0.0
  %643 = vmatpush1.msra.mxu0 0.0
  %644 = vmatprep.subr.mxu0 0.0
  %645 = vmatpush1.msra.mxu0 0.0
  %646 = vmatprep.subr.mxu0 0.0
  %647 = vmatpush1.msra.mxu0 0.0
  %648 = vmatprep.mubr.f32.mxu0 0.0
  %649 = vmatmul.mubr.f32.gmra.mrb[0].mxu0 %v582
  %v650 = vpop.f32.mrb[0].mxu0
  %v651 = vadd.f32 0.0, %v650
  %v652 = vpop.f32.mrb[0].mxu0
  %653 = vdwg.mxu0
  %v655 = vsel %vm317, %v651, 0
  %657 = vmatprep.subr.mxu0 0.0
  %658 = vmatpush1.msra.mxu0 %v311
  %659 = vmatprep.subr.mxu0 0.0
  %660 = vmatpush1.msra.mxu0 0.0
  %661 = vmatprep.subr.mxu0 0.0
  %662 = vmatpush1.msra.mxu0 0.0
  %663 = vmatprep.subr.mxu0 0.0
  %664 = vmatpush1.msra.mxu0 0.0
  %665 = vmatprep.subr.mxu0 0.0
  %666 = vmatpush1.msra.mxu0 0.0
  %667 = vmatprep.subr.mxu0 0.0
  %668 = vmatpush1.msra.mxu0 0.0
  %669 = vmatprep.subr.mxu0 0.0
  %670 = vmatpush1.msra.mxu0 0.0
  %671 = vmatprep.subr.mxu0 0.0
  %672 = vmatpush1.msra.mxu0 0.0
  %673 = vmatprep.subr.mxu0 0.0
  %674 = vmatpush1.msra.mxu0 0.0
  %675 = vmatprep.subr.mxu0 0.0
  %676 = vmatpush1.msra.mxu0 0.0
  %677 = vmatprep.subr.mxu0 0.0
  %678 = vmatpush1.msra.mxu0 0.0
  %679 = vmatprep.subr.mxu0 0.0
  %680 = vmatpush1.msra.mxu0 0.0
  %681 = vmatprep.subr.mxu0 0.0
  %682 = vmatpush1.msra.mxu0 0.0
  %683 = vmatprep.subr.mxu0 0.0
  %684 = vmatpush1.msra.mxu0 0.0
  %685 = vmatprep.subr.mxu0 0.0
  %686 = vmatpush1.msra.mxu0 0.0
  %687 = vmatprep.subr.mxu0 0.0
  %688 = vmatpush1.msra.mxu0 0.0
  %689 = vmatprep.subr.mxu0 0.0
  %690 = vmatpush1.msra.mxu0 0.0
  %691 = vmatprep.subr.mxu0 0.0
  %692 = vmatpush1.msra.mxu0 0.0
  %693 = vmatprep.subr.mxu0 0.0
  %694 = vmatpush1.msra.mxu0 0.0
  %695 = vmatprep.subr.mxu0 0.0
  %696 = vmatpush1.msra.mxu0 0.0
  %697 = vmatprep.subr.mxu0 0.0
  %698 = vmatpush1.msra.mxu0 0.0
  %699 = vmatprep.subr.mxu0 0.0
  %700 = vmatpush1.msra.mxu0 0.0
  %701 = vmatprep.subr.mxu0 0.0
  %702 = vmatpush1.msra.mxu0 0.0
  %703 = vmatprep.subr.mxu0 0.0
  %704 = vmatpush1.msra.mxu0 0.0
  %705 = vmatprep.subr.mxu0 0.0
  %706 = vmatpush1.msra.mxu0 0.0
  %707 = vmatprep.subr.mxu0 0.0
  %708 = vmatpush1.msra.mxu0 0.0
  %709 = vmatprep.subr.mxu0 0.0
  %710 = vmatpush1.msra.mxu0 0.0
  %711 = vmatprep.subr.mxu0 0.0
  %712 = vmatpush1.msra.mxu0 0.0
  %713 = vmatprep.subr.mxu0 0.0
  %714 = vmatpush1.msra.mxu0 0.0
  %715 = vmatprep.subr.mxu0 0.0
  %716 = vmatpush1.msra.mxu0 0.0
  %717 = vmatprep.subr.mxu0 0.0
  %718 = vmatpush1.msra.mxu0 0.0
  %719 = vmatprep.subr.mxu0 0.0
  %720 = vmatpush1.msra.mxu0 0.0
  %721 = vmatprep.mubr.f32.mxu0 0.0
  %722 = vmatmul.mubr.f32.gmra.mrb[0].mxu0 %v655
  %v723 = vpop.f32.mrb[0].mxu0
  %v724 = vadd.f32 0.0, %v723
  %v725 = vpop.f32.mrb[0].mxu0
  %726 = vdwg.mxu0
  %v728 = vsel %vm317, %v484, 0
  %730 = vmatprep.subr.mxu0 0.0
  %731 = vmatpush1.msra.mxu0 %v310
  %732 = vmatprep.subr.mxu0 0.0
  %733 = vmatpush1.msra.mxu0 0.0
  %734 = vmatprep.subr.mxu0 0.0
  %735 = vmatpush1.msra.mxu0 0.0
  %736 = vmatprep.subr.mxu0 0.0
  %737 = vmatpush1.msra.mxu0 0.0
  %738 = vmatprep.subr.mxu0 0.0
  %739 = vmatpush1.msra.mxu0 0.0
  %740 = vmatprep.subr.mxu0 0.0
  %741 = vmatpush1.msra.mxu0 0.0
  %742 = vmatprep.subr.mxu0 0.0
  %743 = vmatpush1.msra.mxu0 0.0
  %744 = vmatprep.subr.mxu0 0.0
  %745 = vmatpush1.msra.mxu0 0.0
  %746 = vmatprep.subr.mxu0 0.0
  %747 = vmatpush1.msra.mxu0 0.0
  %748 = vmatprep.subr.mxu0 0.0
  %749 = vmatpush1.msra.mxu0 0.0
  %750 = vmatprep.subr.mxu0 0.0
  %751 = vmatpush1.msra.mxu0 0.0
  %752 = vmatprep.subr.mxu0 0.0
  %753 = vmatpush1.msra.mxu0 0.0
  %754 = vmatprep.subr.mxu0 0.0
  %755 = vmatpush1.msra.mxu0 0.0
  %756 = vmatprep.subr.mxu0 0.0
  %757 = vmatpush1.msra.mxu0 0.0
  %758 = vmatprep.subr.mxu0 0.0
  %759 = vmatpush1.msra.mxu0 0.0
  %760 = vmatprep.subr.mxu0 0.0
  %761 = vmatpush1.msra.mxu0 0.0
  %762 = vmatprep.subr.mxu0 0.0
  %763 = vmatpush1.msra.mxu0 0.0
  %764 = vmatprep.subr.mxu0 0.0
  %765 = vmatpush1.msra.mxu0 0.0
  %766 = vmatprep.subr.mxu0 0.0
  %767 = vmatpush1.msra.mxu0 0.0
  %768 = vmatprep.subr.mxu0 0.0
  %769 = vmatpush1.msra.mxu0 0.0
  %770 = vmatprep.subr.mxu0 0.0
  %771 = vmatpush1.msra.mxu0 0.0
  %772 = vmatprep.subr.mxu0 0.0
  %773 = vmatpush1.msra.mxu0 0.0
  %774 = vmatprep.subr.mxu0 0.0
  %775 = vmatpush1.msra.mxu0 0.0
  %776 = vmatprep.subr.mxu0 0.0
  %777 = vmatpush1.msra.mxu0 0.0
  %778 = vmatprep.subr.mxu0 0.0
  %779 = vmatpush1.msra.mxu0 0.0
  %780 = vmatprep.subr.mxu0 0.0
  %781 = vmatpush1.msra.mxu0 0.0
  %782 = vmatprep.subr.mxu0 0.0
  %783 = vmatpush1.msra.mxu0 0.0
  %784 = vmatprep.subr.mxu0 0.0
  %785 = vmatpush1.msra.mxu0 0.0
  %786 = vmatprep.subr.mxu0 0.0
  %787 = vmatpush1.msra.mxu0 0.0
  %788 = vmatprep.subr.mxu0 0.0
  %789 = vmatpush1.msra.mxu0 0.0
  %790 = vmatprep.subr.mxu0 0.0
  %791 = vmatpush1.msra.mxu0 0.0
  %792 = vmatprep.subr.mxu0 0.0
  %793 = vmatpush1.msra.mxu0 0.0
  %794 = vmatprep.mubr.f32.mxu0 0.0
  %795 = vmatmul.mubr.f32.gmra.mrb[0].mxu0 %v728
  %v796 = vpop.f32.mrb[0].mxu0
  %v797 = vadd.f32 %v724, %v796
  %v798 = vpop.f32.mrb[0].mxu0
  %799 = vdwg.mxu0
  %800 = vrot.lane.b32.xlu0 %v302, 112
  %v801 = vpop.permute.xlu0 %800
  %802 = vrot.lane.b32.xlu0 %v302, 80
  %v803 = vpop.permute.xlu0 %802
  %v804 = vsel %vm317, %v801, 0
  %v806 = vsel %vm317, %v803, 0
  %808 = vmatprep.subr.mxu0 0.0
  %809 = vmatpush1.xpose.msra.mxu0 %v806
  %810 = vmatprep.subr.mxu0 0.0
  %811 = vmatpush1.xpose.msra.mxu0 0.0
  %812 = vmatprep.subr.mxu0 0.0
  %813 = vmatpush1.xpose.msra.mxu0 0.0
  %814 = vmatprep.subr.mxu0 0.0
  %815 = vmatpush1.xpose.msra.mxu0 0.0
  %816 = vmatprep.subr.mxu0 0.0
  %817 = vmatpush1.xpose.msra.mxu0 0.0
  %818 = vmatprep.subr.mxu0 0.0
  %819 = vmatpush1.xpose.msra.mxu0 0.0
  %820 = vmatprep.subr.mxu0 0.0
  %821 = vmatpush1.xpose.msra.mxu0 0.0
  %822 = vmatprep.subr.mxu0 0.0
  %823 = vmatpush1.xpose.msra.mxu0 0.0
  %824 = vmatprep.subr.mxu0 0.0
  %825 = vmatpush1.xpose.msra.mxu0 0.0
  %826 = vmatprep.subr.mxu0 0.0
  %827 = vmatpush1.xpose.msra.mxu0 0.0
  %828 = vmatprep.subr.mxu0 0.0
  %829 = vmatpush1.xpose.msra.mxu0 0.0
  %830 = vmatprep.subr.mxu0 0.0
  %831 = vmatpush1.xpose.msra.mxu0 0.0
  %832 = vmatprep.subr.mxu0 0.0
  %833 = vmatpush1.xpose.msra.mxu0 0.0
  %834 = vmatprep.subr.mxu0 0.0
  %835 = vmatpush1.xpose.msra.mxu0 0.0
  %836 = vmatprep.subr.mxu0 0.0
  %837 = vmatpush1.xpose.msra.mxu0 0.0
  %838 = vmatprep.subr.mxu0 0.0
  %839 = vmatpush1.xpose.msra.mxu0 0.0
  %840 = vmatprep.subr.mxu0 0.0
  %841 = vmatpush1.xpose.msra.mxu0 0.0
  %842 = vmatprep.subr.mxu0 0.0
  %843 = vmatpush1.xpose.msra.mxu0 0.0
  %844 = vmatprep.subr.mxu0 0.0
  %845 = vmatpush1.xpose.msra.mxu0 0.0
  %846 = vmatprep.subr.mxu0 0.0
  %847 = vmatpush1.xpose.msra.mxu0 0.0
  %848 = vmatprep.subr.mxu0 0.0
  %849 = vmatpush1.xpose.msra.mxu0 0.0
  %850 = vmatprep.subr.mxu0 0.0
  %851 = vmatpush1.xpose.msra.mxu0 0.0
  %852 = vmatprep.subr.mxu0 0.0
  %853 = vmatpush1.xpose.msra.mxu0 0.0
  %854 = vmatprep.subr.mxu0 0.0
  %855 = vmatpush1.xpose.msra.mxu0 0.0
  %856 = vmatprep.subr.mxu0 0.0
  %857 = vmatpush1.xpose.msra.mxu0 0.0
  %858 = vmatprep.subr.mxu0 0.0
  %859 = vmatpush1.xpose.msra.mxu0 0.0
  %860 = vmatprep.subr.mxu0 0.0
  %861 = vmatpush1.xpose.msra.mxu0 0.0
  %862 = vmatprep.subr.mxu0 0.0
  %863 = vmatpush1.xpose.msra.mxu0 0.0
  %864 = vmatprep.subr.mxu0 0.0
  %865 = vmatpush1.xpose.msra.mxu0 0.0
  %866 = vmatprep.subr.mxu0 0.0
  %867 = vmatpush1.xpose.msra.mxu0 0.0
  %868 = vmatprep.subr.mxu0 0.0
  %869 = vmatpush1.xpose.msra.mxu0 0.0
  %870 = vmatprep.subr.mxu0 0.0
  %871 = vmatpush1.xpose.msra.mxu0 0.0
  %872 = vmatprep.mubr.f32.mxu0 0.0
  %873 = vmatmul.mubr.f32.gmra.mrb[0].mxu0 %v804
  %v874 = vpop.f32.mrb[0].mxu0
  %v875 = vadd.f32 0.0, %v874
  %v876 = vpop.f32.mrb[0].mxu0
  %877 = vdwg.mxu0
  %v878 = vmul.f32 %v875, 0.35355338
  %v879 = vadd.f32 %v878, %v397
  %v880 = vsel %vm317, %v879, -inf
  %881 = vmax.xlane.f32.xlu0 %v880
  %v882 = vpop.xlane.xlu0 %881
  %v883 = vsub.f32 %v879, %v882
  %v884 = vmul.f32 %v883, 1.442695
  %v885 = vpow.pop %v884
  %v886 = vsel %vm317, %v885, 0.0
  %887 = vadd.xlane.f32.xlu0 %v886
  %v888 = vpop.xlane.xlu0 %887
  %v889 = vrcp.pop %v888
  %v890 = vmul.f32 %v885, %v889
  %891 = vrot.lane.b32.xlu0 %v302, 48
  %v892 = vpop.permute.xlu0 %891
  %v895 = vsel %vm317, %v890, 0
  %897 = vmatprep.subr.mxu0 0.0
  %898 = vmatpush1.msra.mxu0 %v892
  %899 = vmatprep.subr.mxu0 0.0
  %900 = vmatpush1.msra.mxu0 0.0
  %901 = vmatprep.subr.mxu0 0.0
  %902 = vmatpush1.msra.mxu0 0.0
  %903 = vmatprep.subr.mxu0 0.0
  %904 = vmatpush1.msra.mxu0 0.0
  %905 = vmatprep.subr.mxu0 0.0
  %906 = vmatpush1.msra.mxu0 0.0
  %907 = vmatprep.subr.mxu0 0.0
  %908 = vmatpush1.msra.mxu0 0.0
  %909 = vmatprep.subr.mxu0 0.0
  %910 = vmatpush1.msra.mxu0 0.0
  %911 = vmatprep.subr.mxu0 0.0
  %912 = vmatpush1.msra.mxu0 0.0
  %913 = vmatprep.subr.mxu0 0.0
  %914 = vmatpush1.msra.mxu0 0.0
  %915 = vmatprep.subr.mxu0 0.0
  %916 = vmatpush1.msra.mxu0 0.0
  %917 = vmatprep.subr.mxu0 0.0
  %918 = vmatpush1.msra.mxu0 0.0
  %919 = vmatprep.subr.mxu0 0.0
  %920 = vmatpush1.msra.mxu0 0.0
  %921 = vmatprep.subr.mxu0 0.0
  %922 = vmatpush1.msra.mxu0 0.0
  %923 = vmatprep.subr.mxu0 0.0
  %924 = vmatpush1.msra.mxu0 0.0
  %925 = vmatprep.subr.mxu0 0.0
  %926 = vmatpush1.msra.mxu0 0.0
  %927 = vmatprep.subr.mxu0 0.0
  %928 = vmatpush1.msra.mxu0 0.0
  %929 = vmatprep.subr.mxu0 0.0
  %930 = vmatpush1.msra.mxu0 0.0
  %931 = vmatprep.subr.mxu0 0.0
  %932 = vmatpush1.msra.mxu0 0.0
  %933 = vmatprep.subr.mxu0 0.0
  %934 = vmatpush1.msra.mxu0 0.0
  %935 = vmatprep.subr.mxu0 0.0
  %936 = vmatpush1.msra.mxu0 0.0
  %937 = vmatprep.subr.mxu0 0.0
  %938 = vmatpush1.msra.mxu0 0.0
  %939 = vmatprep.subr.mxu0 0.0
  %940 = vmatpush1.msra.mxu0 0.0
  %941 = vmatprep.subr.mxu0 0.0
  %942 = vmatpush1.msra.mxu0 0.0
  %943 = vmatprep.subr.mxu0 0.0
  %944 = vmatpush1.msra.mxu0 0.0
  %945 = vmatprep.subr.mxu0 0.0
  %946 = vmatpush1.msra.mxu0 0.0
  %947 = vmatprep.subr.mxu0 0.0
  %948 = vmatpush1.msra.mxu0 0.0
  %949 = vmatprep.subr.mxu0 0.0
  %950 = vmatpush1.msra.mxu0 0.0
  %951 = vmatprep.subr.mxu0 0.0
  %952 = vmatpush1.msra.mxu0 0.0
  %953 = vmatprep.subr.mxu0 0.0
  %954 = vmatpush1.msra.mxu0 0.0
  %955 = vmatprep.subr.mxu0 0.0
  %956 = vmatpush1.msra.mxu0 0.0
  %957 = vmatprep.subr.mxu0 0.0
  %958 = vmatpush1.msra.mxu0 0.0
  %959 = vmatprep.subr.mxu0 0.0
  %960 = vmatpush1.msra.mxu0 0.0
  %961 = vmatprep.mubr.f32.mxu0 0.0
  %962 = vmatmul.mubr.f32.gmra.mrb[0].mxu0 %v895
  %v963 = vpop.f32.mrb[0].mxu0
  %v964 = vadd.f32 0.0, %v963
  %v965 = vpop.f32.mrb[0].mxu0
  %966 = vdwg.mxu0
  %v968 = vsel %vm317, %v964, 0
  %970 = vmatprep.subr.mxu0 0.0
  %971 = vmatpush1.msra.mxu0 %v312
  %972 = vmatprep.subr.mxu0 0.0
  %973 = vmatpush1.msra.mxu0 0.0
  %974 = vmatprep.subr.mxu0 0.0
  %975 = vmatpush1.msra.mxu0 0.0
  %976 = vmatprep.subr.mxu0 0.0
  %977 = vmatpush1.msra.mxu0 0.0
  %978 = vmatprep.subr.mxu0 0.0
  %979 = vmatpush1.msra.mxu0 0.0
  %980 = vmatprep.subr.mxu0 0.0
  %981 = vmatpush1.msra.mxu0 0.0
  %982 = vmatprep.subr.mxu0 0.0
  %983 = vmatpush1.msra.mxu0 0.0
  %984 = vmatprep.subr.mxu0 0.0
  %985 = vmatpush1.msra.mxu0 0.0
  %986 = vmatprep.subr.mxu0 0.0
  %987 = vmatpush1.msra.mxu0 0.0
  %988 = vmatprep.subr.mxu0 0.0
  %989 = vmatpush1.msra.mxu0 0.0
  %990 = vmatprep.subr.mxu0 0.0
  %991 = vmatpush1.msra.mxu0 0.0
  %992 = vmatprep.subr.mxu0 0.0
  %993 = vmatpush1.msra.mxu0 0.0
  %994 = vmatprep.subr.mxu0 0.0
  %995 = vmatpush1.msra.mxu0 0.0
  %996 = vmatprep.subr.mxu0 0.0
  %997 = vmatpush1.msra.mxu0 0.0
  %998 = vmatprep.subr.mxu0 0.0
  %999 = vmatpush1.msra.mxu0 0.0
  %1000 = vmatprep.subr.mxu0 0.0
  %1001 = vmatpush1.msra.mxu0 0.0
  %1002 = vmatprep.subr.mxu0 0.0
  %1003 = vmatpush1.msra.mxu0 0.0
  %1004 = vmatprep.subr.mxu0 0.0
  %1005 = vmatpush1.msra.mxu0 0.0
  %1006 = vmatprep.subr.mxu0 0.0
  %1007 = vmatpush1.msra.mxu0 0.0
  %1008 = vmatprep.subr.mxu0 0.0
  %1009 = vmatpush1.msra.mxu0 0.0
  %1010 = vmatprep.subr.mxu0 0.0
  %1011 = vmatpush1.msra.mxu0 0.0
  %1012 = vmatprep.subr.mxu0 0.0
  %1013 = vmatpush1.msra.mxu0 0.0
  %1014 = vmatprep.subr.mxu0 0.0
  %1015 = vmatpush1.msra.mxu0 0.0
  %1016 = vmatprep.subr.mxu0 0.0
  %1017 = vmatpush1.msra.mxu0 0.0
  %1018 = vmatprep.subr.mxu0 0.0
  %1019 = vmatpush1.msra.mxu0 0.0
  %1020 = vmatprep.subr.mxu0 0.0
  %1021 = vmatpush1.msra.mxu0 0.0
  %1022 = vmatprep.subr.mxu0 0.0
  %1023 = vmatpush1.msra.mxu0 0.0
  %1024 = vmatprep.subr.mxu0 0.0
  %1025 = vmatpush1.msra.mxu0 0.0
  %1026 = vmatprep.subr.mxu0 0.0
  %1027 = vmatpush1.msra.mxu0 0.0
  %1028 = vmatprep.subr.mxu0 0.0
  %1029 = vmatpush1.msra.mxu0 0.0
  %1030 = vmatprep.subr.mxu0 0.0
  %1031 = vmatpush1.msra.mxu0 0.0
  %1032 = vmatprep.subr.mxu0 0.0
  %1033 = vmatpush1.msra.mxu0 0.0
  %1034 = vmatprep.mubr.f32.mxu0 0.0
  %1035 = vmatmul.mubr.f32.gmra.mrb[0].mxu0 %v968
  %v1036 = vpop.f32.mrb[0].mxu0
  %v1037 = vadd.f32 0.0, %v1036
  %v1038 = vpop.f32.mrb[0].mxu0
  %1039 = vdwg.mxu0
  %v1040 = vadd.f32 %v797, %v1037
  %1041 = vrot.lane.b32.xlu0 %v302, 104
  %v1042 = vpop.permute.xlu0 %1041
  %1043 = vrot.lane.b32.xlu0 %v302, 72
  %v1044 = vpop.permute.xlu0 %1043
  %v1045 = vsel %vm317, %v1042, 0
  %v1047 = vsel %vm317, %v1044, 0
  %1049 = vmatprep.subr.mxu0 0.0
  %1050 = vmatpush1.xpose.msra.mxu0 %v1047
  %1051 = vmatprep.subr.mxu0 0.0
  %1052 = vmatpush1.xpose.msra.mxu0 0.0
  %1053 = vmatprep.subr.mxu0 0.0
  %1054 = vmatpush1.xpose.msra.mxu0 0.0
  %1055 = vmatprep.subr.mxu0 0.0
  %1056 = vmatpush1.xpose.msra.mxu0 0.0
  %1057 = vmatprep.subr.mxu0 0.0
  %1058 = vmatpush1.xpose.msra.mxu0 0.0
  %1059 = vmatprep.subr.mxu0 0.0
  %1060 = vmatpush1.xpose.msra.mxu0 0.0
  %1061 = vmatprep.subr.mxu0 0.0
  %1062 = vmatpush1.xpose.msra.mxu0 0.0
  %1063 = vmatprep.subr.mxu0 0.0
  %1064 = vmatpush1.xpose.msra.mxu0 0.0
  %1065 = vmatprep.subr.mxu0 0.0
  %1066 = vmatpush1.xpose.msra.mxu0 0.0
  %1067 = vmatprep.subr.mxu0 0.0
  %1068 = vmatpush1.xpose.msra.mxu0 0.0
  %1069 = vmatprep.subr.mxu0 0.0
  %1070 = vmatpush1.xpose.msra.mxu0 0.0
  %1071 = vmatprep.subr.mxu0 0.0
  %1072 = vmatpush1.xpose.msra.mxu0 0.0
  %1073 = vmatprep.subr.mxu0 0.0
  %1074 = vmatpush1.xpose.msra.mxu0 0.0
  %1075 = vmatprep.subr.mxu0 0.0
  %1076 = vmatpush1.xpose.msra.mxu0 0.0
  %1077 = vmatprep.subr.mxu0 0.0
  %1078 = vmatpush1.xpose.msra.mxu0 0.0
  %1079 = vmatprep.subr.mxu0 0.0
  %1080 = vmatpush1.xpose.msra.mxu0 0.0
  %1081 = vmatprep.subr.mxu0 0.0
  %1082 = vmatpush1.xpose.msra.mxu0 0.0
  %1083 = vmatprep.subr.mxu0 0.0
  %1084 = vmatpush1.xpose.msra.mxu0 0.0
  %1085 = vmatprep.subr.mxu0 0.0
  %1086 = vmatpush1.xpose.msra.mxu0 0.0
  %1087 = vmatprep.subr.mxu0 0.0
  %1088 = vmatpush1.xpose.msra.mxu0 0.0
  %1089 = vmatprep.subr.mxu0 0.0
  %1090 = vmatpush1.xpose.msra.mxu0 0.0
  %1091 = vmatprep.subr.mxu0 0.0
  %1092 = vmatpush1.xpose.msra.mxu0 0.0
  %1093 = vmatprep.subr.mxu0 0.0
  %1094 = vmatpush1.xpose.msra.mxu0 0.0
  %1095 = vmatprep.subr.mxu0 0.0
  %1096 = vmatpush1.xpose.msra.mxu0 0.0
  %1097 = vmatprep.subr.mxu0 0.0
  %1098 = vmatpush1.xpose.msra.mxu0 0.0
  %1099 = vmatprep.subr.mxu0 0.0
  %1100 = vmatpush1.xpose.msra.mxu0 0.0
  %1101 = vmatprep.subr.mxu0 0.0
  %1102 = vmatpush1.xpose.msra.mxu0 0.0
  %1103 = vmatprep.subr.mxu0 0.0
  %1104 = vmatpush1.xpose.msra.mxu0 0.0
  %1105 = vmatprep.subr.mxu0 0.0
  %1106 = vmatpush1.xpose.msra.mxu0 0.0
  %1107 = vmatprep.subr.mxu0 0.0
  %1108 = vmatpush1.xpose.msra.mxu0 0.0
  %1109 = vmatprep.subr.mxu0 0.0
  %1110 = vmatpush1.xpose.msra.mxu0 0.0
  %1111 = vmatprep.subr.mxu0 0.0
  %1112 = vmatpush1.xpose.msra.mxu0 0.0
  %1113 = vmatprep.mubr.f32.mxu0 0.0
  %1114 = vmatmul.mubr.f32.gmra.mrb[0].mxu0 %v1045
  %v1115 = vpop.f32.mrb[0].mxu0
  %v1116 = vadd.f32 0.0, %v1115
  %v1117 = vpop.f32.mrb[0].mxu0
  %1118 = vdwg.mxu0
  %v1119 = vmul.f32 %v1116, 0.35355338
  %v1120 = vadd.f32 %v1119, %v397
  %v1121 = vsel %vm317, %v1120, -inf
  %1122 = vmax.xlane.f32.xlu0 %v1121
  %v1123 = vpop.xlane.xlu0 %1122
  %v1124 = vsub.f32 %v1120, %v1123
  %v1125 = vmul.f32 %v1124, 1.442695
  %v1126 = vpow.pop %v1125
  %v1127 = vsel %vm317, %v1126, 0.0
  %1128 = vadd.xlane.f32.xlu0 %v1127
  %v1129 = vpop.xlane.xlu0 %1128
  %v1130 = vrcp.pop %v1129
  %v1131 = vmul.f32 %v1126, %v1130
  %1132 = vrot.lane.b32.xlu0 %v302, 40
  %v1133 = vpop.permute.xlu0 %1132
  %v1136 = vsel %vm317, %v1131, 0
  %1138 = vmatprep.subr.mxu0 0.0
  %1139 = vmatpush1.msra.mxu0 %v1133
  %1140 = vmatprep.subr.mxu0 0.0
  %1141 = vmatpush1.msra.mxu0 0.0
  %1142 = vmatprep.subr.mxu0 0.0
  %1143 = vmatpush1.msra.mxu0 0.0
  %1144 = vmatprep.subr.mxu0 0.0
  %1145 = vmatpush1.msra.mxu0 0.0
  %1146 = vmatprep.subr.mxu0 0.0
  %1147 = vmatpush1.msra.mxu0 0.0
  %1148 = vmatprep.subr.mxu0 0.0
  %1149 = vmatpush1.msra.mxu0 0.0
  %1150 = vmatprep.subr.mxu0 0.0
  %1151 = vmatpush1.msra.mxu0 0.0
  %1152 = vmatprep.subr.mxu0 0.0
  %1153 = vmatpush1.msra.mxu0 0.0
  %1154 = vmatprep.subr.mxu0 0.0
  %1155 = vmatpush1.msra.mxu0 0.0
  %1156 = vmatprep.subr.mxu0 0.0
  %1157 = vmatpush1.msra.mxu0 0.0
  %1158 = vmatprep.subr.mxu0 0.0
  %1159 = vmatpush1.msra.mxu0 0.0
  %1160 = vmatprep.subr.mxu0 0.0
  %1161 = vmatpush1.msra.mxu0 0.0
  %1162 = vmatprep.subr.mxu0 0.0
  %1163 = vmatpush1.msra.mxu0 0.0
  %1164 = vmatprep.subr.mxu0 0.0
  %1165 = vmatpush1.msra.mxu0 0.0
  %1166 = vmatprep.subr.mxu0 0.0
  %1167 = vmatpush1.msra.mxu0 0.0
  %1168 = vmatprep.subr.mxu0 0.0
  %1169 = vmatpush1.msra.mxu0 0.0
  %1170 = vmatprep.subr.mxu0 0.0
  %1171 = vmatpush1.msra.mxu0 0.0
  %1172 = vmatprep.subr.mxu0 0.0
  %1173 = vmatpush1.msra.mxu0 0.0
  %1174 = vmatprep.subr.mxu0 0.0
  %1175 = vmatpush1.msra.mxu0 0.0
  %1176 = vmatprep.subr.mxu0 0.0
  %1177 = vmatpush1.msra.mxu0 0.0
  %1178 = vmatprep.subr.mxu0 0.0
  %1179 = vmatpush1.msra.mxu0 0.0
  %1180 = vmatprep.subr.mxu0 0.0
  %1181 = vmatpush1.msra.mxu0 0.0
  %1182 = vmatprep.subr.mxu0 0.0
  %1183 = vmatpush1.msra.mxu0 0.0
  %1184 = vmatprep.subr.mxu0 0.0
  %1185 = vmatpush1.msra.mxu0 0.0
  %1186 = vmatprep.subr.mxu0 0.0
  %1187 = vmatpush1.msra.mxu0 0.0
  %1188 = vmatprep.subr.mxu0 0.0
  %1189 = vmatpush1.msra.mxu0 0.0
  %1190 = vmatprep.subr.mxu0 0.0
  %1191 = vmatpush1.msra.mxu0 0.0
  %1192 = vmatprep.subr.mxu0 0.0
  %1193 = vmatpush1.msra.mxu0 0.0
  %1194 = vmatprep.subr.mxu0 0.0
  %1195 = vmatpush1.msra.mxu0 0.0
  %1196 = vmatprep.subr.mxu0 0.0
  %1197 = vmatpush1.msra.mxu0 0.0
  %1198 = vmatprep.subr.mxu0 0.0
  %1199 = vmatpush1.msra.mxu0 0.0
  %1200 = vmatprep.subr.mxu0 0.0
  %1201 = vmatpush1.msra.mxu0 0.0
  %1202 = vmatprep.mubr.f32.mxu0 0.0
  %1203 = vmatmul.mubr.f32.gmra.mrb[0].mxu0 %v1136
  %v1204 = vpop.f32.mrb[0].mxu0
  %v1205 = vadd.f32 0.0, %v1204
  %v1206 = vpop.f32.mrb[0].mxu0
  %1207 = vdwg.mxu0
  %v1209 = vsel %vm317, %v1205, 0
  %1211 = vmatprep.subr.mxu0 0.0
  %1212 = vmatpush1.msra.mxu0 %v313
  %1213 = vmatprep.subr.mxu0 0.0
  %1214 = vmatpush1.msra.mxu0 0.0
  %1215 = vmatprep.subr.mxu0 0.0
  %1216 = vmatpush1.msra.mxu0 0.0
  %1217 = vmatprep.subr.mxu0 0.0
  %1218 = vmatpush1.msra.mxu0 0.0
  %1219 = vmatprep.subr.mxu0 0.0
  %1220 = vmatpush1.msra.mxu0 0.0
  %1221 = vmatprep.subr.mxu0 0.0
  %1222 = vmatpush1.msra.mxu0 0.0
  %1223 = vmatprep.subr.mxu0 0.0
  %1224 = vmatpush1.msra.mxu0 0.0
  %1225 = vmatprep.subr.mxu0 0.0
  %1226 = vmatpush1.msra.mxu0 0.0
  %1227 = vmatprep.subr.mxu0 0.0
  %1228 = vmatpush1.msra.mxu0 0.0
  %1229 = vmatprep.subr.mxu0 0.0
  %1230 = vmatpush1.msra.mxu0 0.0
  %1231 = vmatprep.subr.mxu0 0.0
  %1232 = vmatpush1.msra.mxu0 0.0
  %1233 = vmatprep.subr.mxu0 0.0
  %1234 = vmatpush1.msra.mxu0 0.0
  %1235 = vmatprep.subr.mxu0 0.0
  %1236 = vmatpush1.msra.mxu0 0.0
  %1237 = vmatprep.subr.mxu0 0.0
  %1238 = vmatpush1.msra.mxu0 0.0
  %1239 = vmatprep.subr.mxu0 0.0
  %1240 = vmatpush1.msra.mxu0 0.0
  %1241 = vmatprep.subr.mxu0 0.0
  %1242 = vmatpush1.msra.mxu0 0.0
  %1243 = vmatprep.subr.mxu0 0.0
  %1244 = vmatpush1.msra.mxu0 0.0
  %1245 = vmatprep.subr.mxu0 0.0
  %1246 = vmatpush1.msra.mxu0 0.0
  %1247 = vmatprep.subr.mxu0 0.0
  %1248 = vmatpush1.msra.mxu0 0.0
  %1249 = vmatprep.subr.mxu0 0.0
  %1250 = vmatpush1.msra.mxu0 0.0
  %1251 = vmatprep.subr.mxu0 0.0
  %1252 = vmatpush1.msra.mxu0 0.0
  %1253 = vmatprep.subr.mxu0 0.0
  %1254 = vmatpush1.msra.mxu0 0.0
  %1255 = vmatprep.subr.mxu0 0.0
  %1256 = vmatpush1.msra.mxu0 0.0
  %1257 = vmatprep.subr.mxu0 0.0
  %1258 = vmatpush1.msra.mxu0 0.0
  %1259 = vmatprep.subr.mxu0 0.0
  %1260 = vmatpush1.msra.mxu0 0.0
  %1261 = vmatprep.subr.mxu0 0.0
  %1262 = vmatpush1.msra.mxu0 0.0
  %1263 = vmatprep.subr.mxu0 0.0
  %1264 = vmatpush1.msra.mxu0 0.0
  %1265 = vmatprep.subr.mxu0 0.0
  %1266 = vmatpush1.msra.mxu0 0.0
  %1267 = vmatprep.subr.mxu0 0.0
  %1268 = vmatpush1.msra.mxu0 0.0
  %1269 = vmatprep.subr.mxu0 0.0
  %1270 = vmatpush1.msra.mxu0 0.0
  %1271 = vmatprep.subr.mxu0 0.0
  %1272 = vmatpush1.msra.mxu0 0.0
  %1273 = vmatprep.subr.mxu0 0.0
  %1274 = vmatpush1.msra.mxu0 0.0
  %1275 = vmatprep.mubr.f32.mxu0 0.0
  %1276 = vmatmul.mubr.f32.gmra.mrb[0].mxu0 %v1209
  %v1277 = vpop.f32.mrb[0].mxu0
  %v1278 = vadd.f32 0.0, %v1277
  %v1279 = vpop.f32.mrb[0].mxu0
  %1280 = vdwg.mxu0
  %v1281 = vadd.f32 %v1040, %v1278
  %1283 = vrot.lane.b32.xlu0 %v307, 96
  %v1284 = vpop.permute.xlu0 %1283
  %v1285 = vsel %vm317, %v307, 0
  %v1287 = vsel %vm317, %v1284, 0
  %1289 = vmatprep.subr.mxu0 0.0
  %1290 = vmatpush1.xpose.msra.mxu0 %v1287
  %1291 = vmatprep.subr.mxu0 0.0
  %1292 = vmatpush1.xpose.msra.mxu0 0.0
  %1293 = vmatprep.subr.mxu0 0.0
  %1294 = vmatpush1.xpose.msra.mxu0 0.0
  %1295 = vmatprep.subr.mxu0 0.0
  %1296 = vmatpush1.xpose.msra.mxu0 0.0
  %1297 = vmatprep.subr.mxu0 0.0
  %1298 = vmatpush1.xpose.msra.mxu0 0.0
  %1299 = vmatprep.subr.mxu0 0.0
  %1300 = vmatpush1.xpose.msra.mxu0 0.0
  %1301 = vmatprep.subr.mxu0 0.0
  %1302 = vmatpush1.xpose.msra.mxu0 0.0
  %1303 = vmatprep.subr.mxu0 0.0
  %1304 = vmatpush1.xpose.msra.mxu0 0.0
  %1305 = vmatprep.subr.mxu0 0.0
  %1306 = vmatpush1.xpose.msra.mxu0 0.0
  %1307 = vmatprep.subr.mxu0 0.0
  %1308 = vmatpush1.xpose.msra.mxu0 0.0
  %1309 = vmatprep.subr.mxu0 0.0
  %1310 = vmatpush1.xpose.msra.mxu0 0.0
  %1311 = vmatprep.subr.mxu0 0.0
  %1312 = vmatpush1.xpose.msra.mxu0 0.0
  %1313 = vmatprep.subr.mxu0 0.0
  %1314 = vmatpush1.xpose.msra.mxu0 0.0
  %1315 = vmatprep.subr.mxu0 0.0
  %1316 = vmatpush1.xpose.msra.mxu0 0.0
  %1317 = vmatprep.subr.mxu0 0.0
  %1318 = vmatpush1.xpose.msra.mxu0 0.0
  %1319 = vmatprep.subr.mxu0 0.0
  %1320 = vmatpush1.xpose.msra.mxu0 0.0
  %1321 = vmatprep.subr.mxu0 0.0
  %1322 = vmatpush1.xpose.msra.mxu0 0.0
  %1323 = vmatprep.subr.mxu0 0.0
  %1324 = vmatpush1.xpose.msra.mxu0 0.0
  %1325 = vmatprep.subr.mxu0 0.0
  %1326 = vmatpush1.xpose.msra.mxu0 0.0
  %1327 = vmatprep.subr.mxu0 0.0
  %1328 = vmatpush1.xpose.msra.mxu0 0.0
  %1329 = vmatprep.subr.mxu0 0.0
  %1330 = vmatpush1.xpose.msra.mxu0 0.0
  %1331 = vmatprep.subr.mxu0 0.0
  %1332 = vmatpush1.xpose.msra.mxu0 0.0
  %1333 = vmatprep.subr.mxu0 0.0
  %1334 = vmatpush1.xpose.msra.mxu0 0.0
  %1335 = vmatprep.subr.mxu0 0.0
  %1336 = vmatpush1.xpose.msra.mxu0 0.0
  %1337 = vmatprep.subr.mxu0 0.0
  %1338 = vmatpush1.xpose.msra.mxu0 0.0
  %1339 = vmatprep.subr.mxu0 0.0
  %1340 = vmatpush1.xpose.msra.mxu0 0.0
  %1341 = vmatprep.subr.mxu0 0.0
  %1342 = vmatpush1.xpose.msra.mxu0 0.0
  %1343 = vmatprep.subr.mxu0 0.0
  %1344 = vmatpush1.xpose.msra.mxu0 0.0
  %1345 = vmatprep.subr.mxu0 0.0
  %1346 = vmatpush1.xpose.msra.mxu0 0.0
  %1347 = vmatprep.subr.mxu0 0.0
  %1348 = vmatpush1.xpose.msra.mxu0 0.0
  %1349 = vmatprep.subr.mxu0 0.0
  %1350 = vmatpush1.xpose.msra.mxu0 0.0
  %1351 = vmatprep.subr.mxu0 0.0
  %1352 = vmatpush1.xpose.msra.mxu0 0.0
  %1353 = vmatprep.mubr.f32.mxu0 0.0
  %1354 = vmatmul.mubr.f32.gmra.mrb[0].mxu0 %v1285
  %v1355 = vpop.f32.mrb[0].mxu0
  %v1356 = vadd.f32 0.0, %v1355
  %v1357 = vpop.f32.mrb[0].mxu0
  %1358 = vdwg.mxu0
  %v1359 = vmul.f32 %v1356, 0.35355338
  %v1360 = vadd.f32 %v1359, %v397
  %v1361 = vsel %vm317, %v1360, -inf
  %1362 = vmax.xlane.f32.xlu0 %v1361
  %v1363 = vpop.xlane.xlu0 %1362
  %v1364 = vsub.f32 %v1360, %v1363
  %v1365 = vmul.f32 %v1364, 1.442695
  %v1366 = vpow.pop %v1365
  %v1367 = vsel %vm317, %v1366, 0.0
  %1368 = vadd.xlane.f32.xlu0 %v1367
  %v1369 = vpop.xlane.xlu0 %1368
  %v1370 = vrcp.pop %v1369
  %v1371 = vmul.f32 %v1366, %v1370
  %1372 = vrot.lane.b32.xlu0 %v307, 64
  %v1373 = vpop.permute.xlu0 %1372
  %v1376 = vsel %vm317, %v1371, 0
  %1378 = vmatprep.subr.mxu0 0.0
  %1379 = vmatpush1.msra.mxu0 %v1373
  %1380 = vmatprep.subr.mxu0 0.0
  %1381 = vmatpush1.msra.mxu0 0.0
  %1382 = vmatprep.subr.mxu0 0.0
  %1383 = vmatpush1.msra.mxu0 0.0
  %1384 = vmatprep.subr.mxu0 0.0
  %1385 = vmatpush1.msra.mxu0 0.0
  %1386 = vmatprep.subr.mxu0 0.0
  %1387 = vmatpush1.msra.mxu0 0.0
  %1388 = vmatprep.subr.mxu0 0.0
  %1389 = vmatpush1.msra.mxu0 0.0
  %1390 = vmatprep.subr.mxu0 0.0
  %1391 = vmatpush1.msra.mxu0 0.0
  %1392 = vmatprep.subr.mxu0 0.0
  %1393 = vmatpush1.msra.mxu0 0.0
  %1394 = vmatprep.subr.mxu0 0.0
  %1395 = vmatpush1.msra.mxu0 0.0
  %1396 = vmatprep.subr.mxu0 0.0
  %1397 = vmatpush1.msra.mxu0 0.0
  %1398 = vmatprep.subr.mxu0 0.0
  %1399 = vmatpush1.msra.mxu0 0.0
  %1400 = vmatprep.subr.mxu0 0.0
  %1401 = vmatpush1.msra.mxu0 0.0
  %1402 = vmatprep.subr.mxu0 0.0
  %1403 = vmatpush1.msra.mxu0 0.0
  %1404 = vmatprep.subr.mxu0 0.0
  %1405 = vmatpush1.msra.mxu0 0.0
  %1406 = vmatprep.subr.mxu0 0.0
  %1407 = vmatpush1.msra.mxu0 0.0
  %1408 = vmatprep.subr.mxu0 0.0
  %1409 = vmatpush1.msra.mxu0 0.0
  %1410 = vmatprep.subr.mxu0 0.0
  %1411 = vmatpush1.msra.mxu0 0.0
  %1412 = vmatprep.subr.mxu0 0.0
  %1413 = vmatpush1.msra.mxu0 0.0
  %1414 = vmatprep.subr.mxu0 0.0
  %1415 = vmatpush1.msra.mxu0 0.0
  %1416 = vmatprep.subr.mxu0 0.0
  %1417 = vmatpush1.msra.mxu0 0.0
  %1418 = vmatprep.subr.mxu0 0.0
  %1419 = vmatpush1.msra.mxu0 0.0
  %1420 = vmatprep.subr.mxu0 0.0
  %1421 = vmatpush1.msra.mxu0 0.0
  %1422 = vmatprep.subr.mxu0 0.0
  %1423 = vmatpush1.msra.mxu0 0.0
  %1424 = vmatprep.subr.mxu0 0.0
  %1425 = vmatpush1.msra.mxu0 0.0
  %1426 = vmatprep.subr.mxu0 0.0
  %1427 = vmatpush1.msra.mxu0 0.0
  %1428 = vmatprep.subr.mxu0 0.0
  %1429 = vmatpush1.msra.mxu0 0.0
  %1430 = vmatprep.subr.mxu0 0.0
  %1431 = vmatpush1.msra.mxu0 0.0
  %1432 = vmatprep.subr.mxu0 0.0
  %1433 = vmatpush1.msra.mxu0 0.0
  %1434 = vmatprep.subr.mxu0 0.0
  %1435 = vmatpush1.msra.mxu0 0.0
  %1436 = vmatprep.subr.mxu0 0.0
  %1437 = vmatpush1.msra.mxu0 0.0
  %1438 = vmatprep.subr.mxu0 0.0
  %1439 = vmatpush1.msra.mxu0 0.0
  %1440 = vmatprep.subr.mxu0 0.0
  %1441 = vmatpush1.msra.mxu0 0.0
  %1442 = vmatprep.mubr.f32.mxu0 0.0
  %1443 = vmatmul.mubr.f32.gmra.mrb[0].mxu0 %v1376
  %v1444 = vpop.f32.mrb[0].mxu0
  %v1445 = vadd.f32 0.0, %v1444
  %v1446 = vpop.f32.mrb[0].mxu0
  %1447 = vdwg.mxu0
  %1448 = vrot.lane.b32.xlu0 %v307, 120
  %v1449 = vpop.permute.xlu0 %1448
  %1450 = vrot.lane.b32.xlu0 %v307, 88
  %v1451 = vpop.permute.xlu0 %1450
  %v1452 = vsel %vm317, %v1449, 0
  %v1454 = vsel %vm317, %v1451, 0
  %1456 = vmatprep.subr.mxu0 0.0
  %1457 = vmatpush1.xpose.msra.mxu0 %v1454
  %1458 = vmatprep.subr.mxu0 0.0
  %1459 = vmatpush1.xpose.msra.mxu0 0.0
  %1460 = vmatprep.subr.mxu0 0.0
  %1461 = vmatpush1.xpose.msra.mxu0 0.0
  %1462 = vmatprep.subr.mxu0 0.0
  %1463 = vmatpush1.xpose.msra.mxu0 0.0
  %1464 = vmatprep.subr.mxu0 0.0
  %1465 = vmatpush1.xpose.msra.mxu0 0.0
  %1466 = vmatprep.subr.mxu0 0.0
  %1467 = vmatpush1.xpose.msra.mxu0 0.0
  %1468 = vmatprep.subr.mxu0 0.0
  %1469 = vmatpush1.xpose.msra.mxu0 0.0
  %1470 = vmatprep.subr.mxu0 0.0
  %1471 = vmatpush1.xpose.msra.mxu0 0.0
  %1472 = vmatprep.subr.mxu0 0.0
  %1473 = vmatpush1.xpose.msra.mxu0 0.0
  %1474 = vmatprep.subr.mxu0 0.0
  %1475 = vmatpush1.xpose.msra.mxu0 0.0
  %1476 = vmatprep.subr.mxu0 0.0
  %1477 = vmatpush1.xpose.msra.mxu0 0.0
  %1478 = vmatprep.subr.mxu0 0.0
  %1479 = vmatpush1.xpose.msra.mxu0 0.0
  %1480 = vmatprep.subr.mxu0 0.0
  %1481 = vmatpush1.xpose.msra.mxu0 0.0
  %1482 = vmatprep.subr.mxu0 0.0
  %1483 = vmatpush1.xpose.msra.mxu0 0.0
  %1484 = vmatprep.subr.mxu0 0.0
  %1485 = vmatpush1.xpose.msra.mxu0 0.0
  %1486 = vmatprep.subr.mxu0 0.0
  %1487 = vmatpush1.xpose.msra.mxu0 0.0
  %1488 = vmatprep.subr.mxu0 0.0
  %1489 = vmatpush1.xpose.msra.mxu0 0.0
  %1490 = vmatprep.subr.mxu0 0.0
  %1491 = vmatpush1.xpose.msra.mxu0 0.0
  %1492 = vmatprep.subr.mxu0 0.0
  %1493 = vmatpush1.xpose.msra.mxu0 0.0
  %1494 = vmatprep.subr.mxu0 0.0
  %1495 = vmatpush1.xpose.msra.mxu0 0.0
  %1496 = vmatprep.subr.mxu0 0.0
  %1497 = vmatpush1.xpose.msra.mxu0 0.0
  %1498 = vmatprep.subr.mxu0 0.0
  %1499 = vmatpush1.xpose.msra.mxu0 0.0
  %1500 = vmatprep.subr.mxu0 0.0
  %1501 = vmatpush1.xpose.msra.mxu0 0.0
  %1502 = vmatprep.subr.mxu0 0.0
  %1503 = vmatpush1.xpose.msra.mxu0 0.0
  %1504 = vmatprep.subr.mxu0 0.0
  %1505 = vmatpush1.xpose.msra.mxu0 0.0
  %1506 = vmatprep.subr.mxu0 0.0
  %1507 = vmatpush1.xpose.msra.mxu0 0.0
  %1508 = vmatprep.subr.mxu0 0.0
  %1509 = vmatpush1.xpose.msra.mxu0 0.0
  %1510 = vmatprep.subr.mxu0 0.0
  %1511 = vmatpush1.xpose.msra.mxu0 0.0
  %1512 = vmatprep.subr.mxu0 0.0
  %1513 = vmatpush1.xpose.msra.mxu0 0.0
  %1514 = vmatprep.subr.mxu0 0.0
  %1515 = vmatpush1.xpose.msra.mxu0 0.0
  %1516 = vmatprep.subr.mxu0 0.0
  %1517 = vmatpush1.xpose.msra.mxu0 0.0
  %1518 = vmatprep.subr.mxu0 0.0
  %1519 = vmatpush1.xpose.msra.mxu0 0.0
  %1520 = vmatprep.mubr.f32.mxu0 0.0
  %1521 = vmatmul.mubr.f32.gmra.mrb[0].mxu0 %v1452
  %v1522 = vpop.f32.mrb[0].mxu0
  %v1523 = vadd.f32 0.0, %v1522
  %v1524 = vpop.f32.mrb[0].mxu0
  %1525 = vdwg.mxu0
  %v1526 = vmul.f32 %v1523, 0.35355338
  %v1527 = vadd.f32 %v1526, %v397
  %v1528 = vsel %vm317, %v1527, -inf
  %1529 = vmax.xlane.f32.xlu0 %v1528
  %v1530 = vpop.xlane.xlu0 %1529
  %v1531 = vsub.f32 %v1527, %v1530
  %v1532 = vmul.f32 %v1531, 1.442695
  %v1533 = vpow.pop %v1532
  %v1534 = vsel %vm317, %v1533, 0.0
  %1535 = vadd.xlane.f32.xlu0 %v1534
  %v1536 = vpop.xlane.xlu0 %1535
  %v1537 = vrcp.pop %v1536
  %v1538 = vmul.f32 %v1533, %v1537
  %1539 = vrot.lane.b32.xlu0 %v307, 56
  %v1540 = vpop.permute.xlu0 %1539
  %v1543 = vsel %vm317, %v1538, 0
  %1545 = vmatprep.subr.mxu0 0.0
  %1546 = vmatpush1.msra.mxu0 %v1540
  %1547 = vmatprep.subr.mxu0 0.0
  %1548 = vmatpush1.msra.mxu0 0.0
  %1549 = vmatprep.subr.mxu0 0.0
  %1550 = vmatpush1.msra.mxu0 0.0
  %1551 = vmatprep.subr.mxu0 0.0
  %1552 = vmatpush1.msra.mxu0 0.0
  %1553 = vmatprep.subr.mxu0 0.0
  %1554 = vmatpush1.msra.mxu0 0.0
  %1555 = vmatprep.subr.mxu0 0.0
  %1556 = vmatpush1.msra.mxu0 0.0
  %1557 = vmatprep.subr.mxu0 0.0
  %1558 = vmatpush1.msra.mxu0 0.0
  %1559 = vmatprep.subr.mxu0 0.0
  %1560 = vmatpush1.msra.mxu0 0.0
  %1561 = vmatprep.subr.mxu0 0.0
  %1562 = vmatpush1.msra.mxu0 0.0
  %1563 = vmatprep.subr.mxu0 0.0
  %1564 = vmatpush1.msra.mxu0 0.0
  %1565 = vmatprep.subr.mxu0 0.0
  %1566 = vmatpush1.msra.mxu0 0.0
  %1567 = vmatprep.subr.mxu0 0.0
  %1568 = vmatpush1.msra.mxu0 0.0
  %1569 = vmatprep.subr.mxu0 0.0
  %1570 = vmatpush1.msra.mxu0 0.0
  %1571 = vmatprep.subr.mxu0 0.0
  %1572 = vmatpush1.msra.mxu0 0.0
  %1573 = vmatprep.subr.mxu0 0.0
  %1574 = vmatpush1.msra.mxu0 0.0
  %1575 = vmatprep.subr.mxu0 0.0
  %1576 = vmatpush1.msra.mxu0 0.0
  %1577 = vmatprep.subr.mxu0 0.0
  %1578 = vmatpush1.msra.mxu0 0.0
  %1579 = vmatprep.subr.mxu0 0.0
  %1580 = vmatpush1.msra.mxu0 0.0
  %1581 = vmatprep.subr.mxu0 0.0
  %1582 = vmatpush1.msra.mxu0 0.0
  %1583 = vmatprep.subr.mxu0 0.0
  %1584 = vmatpush1.msra.mxu0 0.0
  %1585 = vmatprep.subr.mxu0 0.0
  %1586 = vmatpush1.msra.mxu0 0.0
  %1587 = vmatprep.subr.mxu0 0.0
  %1588 = vmatpush1.msra.mxu0 0.0
  %1589 = vmatprep.subr.mxu0 0.0
  %1590 = vmatpush1.msra.mxu0 0.0
  %1591 = vmatprep.subr.mxu0 0.0
  %1592 = vmatpush1.msra.mxu0 0.0
  %1593 = vmatprep.subr.mxu0 0.0
  %1594 = vmatpush1.msra.mxu0 0.0
  %1595 = vmatprep.subr.mxu0 0.0
  %1596 = vmatpush1.msra.mxu0 0.0
  %1597 = vmatprep.subr.mxu0 0.0
  %1598 = vmatpush1.msra.mxu0 0.0
  %1599 = vmatprep.subr.mxu0 0.0
  %1600 = vmatpush1.msra.mxu0 0.0
  %1601 = vmatprep.subr.mxu0 0.0
  %1602 = vmatpush1.msra.mxu0 0.0
  %1603 = vmatprep.subr.mxu0 0.0
  %1604 = vmatpush1.msra.mxu0 0.0
  %1605 = vmatprep.subr.mxu0 0.0
  %1606 = vmatpush1.msra.mxu0 0.0
  %1607 = vmatprep.subr.mxu0 0.0
  %1608 = vmatpush1.msra.mxu0 0.0
  %1609 = vmatprep.mubr.f32.mxu0 0.0
  %1610 = vmatmul.mubr.f32.gmra.mrb[0].mxu0 %v1543
  %v1611 = vpop.f32.mrb[0].mxu0
  %v1612 = vadd.f32 0.0, %v1611
  %v1613 = vpop.f32.mrb[0].mxu0
  %1614 = vdwg.mxu0
  %v1616 = vsel %vm317, %v1612, 0
  %1618 = vmatprep.subr.mxu0 0.0
  %1619 = vmatpush1.msra.mxu0 %v311
  %1620 = vmatprep.subr.mxu0 0.0
  %1621 = vmatpush1.msra.mxu0 0.0
  %1622 = vmatprep.subr.mxu0 0.0
  %1623 = vmatpush1.msra.mxu0 0.0
  %1624 = vmatprep.subr.mxu0 0.0
  %1625 = vmatpush1.msra.mxu0 0.0
  %1626 = vmatprep.subr.mxu0 0.0
  %1627 = vmatpush1.msra.mxu0 0.0
  %1628 = vmatprep.subr.mxu0 0.0
  %1629 = vmatpush1.msra.mxu0 0.0
  %1630 = vmatprep.subr.mxu0 0.0
  %1631 = vmatpush1.msra.mxu0 0.0
  %1632 = vmatprep.subr.mxu0 0.0
  %1633 = vmatpush1.msra.mxu0 0.0
  %1634 = vmatprep.subr.mxu0 0.0
  %1635 = vmatpush1.msra.mxu0 0.0
  %1636 = vmatprep.subr.mxu0 0.0
  %1637 = vmatpush1.msra.mxu0 0.0
  %1638 = vmatprep.subr.mxu0 0.0
  %1639 = vmatpush1.msra.mxu0 0.0
  %1640 = vmatprep.subr.mxu0 0.0
  %1641 = vmatpush1.msra.mxu0 0.0
  %1642 = vmatprep.subr.mxu0 0.0
  %1643 = vmatpush1.msra.mxu0 0.0
  %1644 = vmatprep.subr.mxu0 0.0
  %1645 = vmatpush1.msra.mxu0 0.0
  %1646 = vmatprep.subr.mxu0 0.0
  %1647 = vmatpush1.msra.mxu0 0.0
  %1648 = vmatprep.subr.mxu0 0.0
  %1649 = vmatpush1.msra.mxu0 0.0
  %1650 = vmatprep.subr.mxu0 0.0
  %1651 = vmatpush1.msra.mxu0 0.0
  %1652 = vmatprep.subr.mxu0 0.0
  %1653 = vmatpush1.msra.mxu0 0.0
  %1654 = vmatprep.subr.mxu0 0.0
  %1655 = vmatpush1.msra.mxu0 0.0
  %1656 = vmatprep.subr.mxu0 0.0
  %1657 = vmatpush1.msra.mxu0 0.0
  %1658 = vmatprep.subr.mxu0 0.0
  %1659 = vmatpush1.msra.mxu0 0.0
  %1660 = vmatprep.subr.mxu0 0.0
  %1661 = vmatpush1.msra.mxu0 0.0
  %1662 = vmatprep.subr.mxu0 0.0
  %1663 = vmatpush1.msra.mxu0 0.0
  %1664 = vmatprep.subr.mxu0 0.0
  %1665 = vmatpush1.msra.mxu0 0.0
  %1666 = vmatprep.subr.mxu0 0.0
  %1667 = vmatpush1.msra.mxu0 0.0
  %1668 = vmatprep.subr.mxu0 0.0
  %1669 = vmatpush1.msra.mxu0 0.0
  %1670 = vmatprep.subr.mxu0 0.0
  %1671 = vmatpush1.msra.mxu0 0.0
  %1672 = vmatprep.subr.mxu0 0.0
  %1673 = vmatpush1.msra.mxu0 0.0
  %1674 = vmatprep.subr.mxu0 0.0
  %1675 = vmatpush1.msra.mxu0 0.0
  %1676 = vmatprep.subr.mxu0 0.0
  %1677 = vmatpush1.msra.mxu0 0.0
  %1678 = vmatprep.subr.mxu0 0.0
  %1679 = vmatpush1.msra.mxu0 0.0
  %1680 = vmatprep.subr.mxu0 0.0
  %1681 = vmatpush1.msra.mxu0 0.0
  %1682 = vmatprep.mubr.f32.mxu0 0.0
  %1683 = vmatmul.mubr.f32.gmra.mrb[0].mxu0 %v1616
  %v1684 = vpop.f32.mrb[0].mxu0
  %v1685 = vadd.f32 0.0, %v1684
  %v1686 = vpop.f32.mrb[0].mxu0
  %1687 = vdwg.mxu0
  %v1689 = vsel %vm317, %v1445, 0
  %1691 = vmatprep.subr.mxu0 0.0
  %1692 = vmatpush1.msra.mxu0 %v310
  %1693 = vmatprep.subr.mxu0 0.0
  %1694 = vmatpush1.msra.mxu0 0.0
  %1695 = vmatprep.subr.mxu0 0.0
  %1696 = vmatpush1.msra.mxu0 0.0
  %1697 = vmatprep.subr.mxu0 0.0
  %1698 = vmatpush1.msra.mxu0 0.0
  %1699 = vmatprep.subr.mxu0 0.0
  %1700 = vmatpush1.msra.mxu0 0.0
  %1701 = vmatprep.subr.mxu0 0.0
  %1702 = vmatpush1.msra.mxu0 0.0
  %1703 = vmatprep.subr.mxu0 0.0
  %1704 = vmatpush1.msra.mxu0 0.0
  %1705 = vmatprep.subr.mxu0 0.0
  %1706 = vmatpush1.msra.mxu0 0.0
  %1707 = vmatprep.subr.mxu0 0.0
  %1708 = vmatpush1.msra.mxu0 0.0
  %1709 = vmatprep.subr.mxu0 0.0
  %1710 = vmatpush1.msra.mxu0 0.0
  %1711 = vmatprep.subr.mxu0 0.0
  %1712 = vmatpush1.msra.mxu0 0.0
  %1713 = vmatprep.subr.mxu0 0.0
  %1714 = vmatpush1.msra.mxu0 0.0
  %1715 = vmatprep.subr.mxu0 0.0
  %1716 = vmatpush1.msra.mxu0 0.0
  %1717 = vmatprep.subr.mxu0 0.0
  %1718 = vmatpush1.msra.mxu0 0.0
  %1719 = vmatprep.subr.mxu0 0.0
  %1720 = vmatpush1.msra.mxu0 0.0
  %1721 = vmatprep.subr.mxu0 0.0
  %1722 = vmatpush1.msra.mxu0 0.0
  %1723 = vmatprep.subr.mxu0 0.0
  %1724 = vmatpush1.msra.mxu0 0.0
  %1725 = vmatprep.subr.mxu0 0.0
  %1726 = vmatpush1.msra.mxu0 0.0
  %1727 = vmatprep.subr.mxu0 0.0
  %1728 = vmatpush1.msra.mxu0 0.0
  %1729 = vmatprep.subr.mxu0 0.0
  %1730 = vmatpush1.msra.mxu0 0.0
  %1731 = vmatprep.subr.mxu0 0.0
  %1732 = vmatpush1.msra.mxu0 0.0
  %1733 = vmatprep.subr.mxu0 0.0
  %1734 = vmatpush1.msra.mxu0 0.0
  %1735 = vmatprep.subr.mxu0 0.0
  %1736 = vmatpush1.msra.mxu0 0.0
  %1737 = vmatprep.subr.mxu0 0.0
  %1738 = vmatpush1.msra.mxu0 0.0
  %1739 = vmatprep.subr.mxu0 0.0
  %1740 = vmatpush1.msra.mxu0 0.0
  %1741 = vmatprep.subr.mxu0 0.0
  %1742 = vmatpush1.msra.mxu0 0.0
  %1743 = vmatprep.subr.mxu0 0.0
  %1744 = vmatpush1.msra.mxu0 0.0
  %1745 = vmatprep.subr.mxu0 0.0
  %1746 = vmatpush1.msra.mxu0 0.0
  %1747 = vmatprep.subr.mxu0 0.0
  %1748 = vmatpush1.msra.mxu0 0.0
  %1749 = vmatprep.subr.mxu0 0.0
  %1750 = vmatpush1.msra.mxu0 0.0
  %1751 = vmatprep.subr.mxu0 0.0
  %1752 = vmatpush1.msra.mxu0 0.0
  %1753 = vmatprep.subr.mxu0 0.0
  %1754 = vmatpush1.msra.mxu0 0.0
  %1755 = vmatprep.mubr.f32.mxu0 0.0
  %1756 = vmatmul.mubr.f32.gmra.mrb[0].mxu0 %v1689
  %v1757 = vpop.f32.mrb[0].mxu0
  %v1758 = vadd.f32 %v1685, %v1757
  %v1759 = vpop.f32.mrb[0].mxu0
  %1760 = vdwg.mxu0
  %1761 = vrot.lane.b32.xlu0 %v307, 112
  %v1762 = vpop.permute.xlu0 %1761
  %1763 = vrot.lane.b32.xlu0 %v307, 80
  %v1764 = vpop.permute.xlu0 %1763
  %v1765 = vsel %vm317, %v1762, 0
  %v1767 = vsel %vm317, %v1764, 0
  %1769 = vmatprep.subr.mxu0 0.0
  %1770 = vmatpush1.xpose.msra.mxu0 %v1767
  %1771 = vmatprep.subr.mxu0 0.0
  %1772 = vmatpush1.xpose.msra.mxu0 0.0
  %1773 = vmatprep.subr.mxu0 0.0
  %1774 = vmatpush1.xpose.msra.mxu0 0.0
  %1775 = vmatprep.subr.mxu0 0.0
  %1776 = vmatpush1.xpose.msra.mxu0 0.0
  %1777 = vmatprep.subr.mxu0 0.0
  %1778 = vmatpush1.xpose.msra.mxu0 0.0
  %1779 = vmatprep.subr.mxu0 0.0
  %1780 = vmatpush1.xpose.msra.mxu0 0.0
  %1781 = vmatprep.subr.mxu0 0.0
  %1782 = vmatpush1.xpose.msra.mxu0 0.0
  %1783 = vmatprep.subr.mxu0 0.0
  %1784 = vmatpush1.xpose.msra.mxu0 0.0
  %1785 = vmatprep.subr.mxu0 0.0
  %1786 = vmatpush1.xpose.msra.mxu0 0.0
  %1787 = vmatprep.subr.mxu0 0.0
  %1788 = vmatpush1.xpose.msra.mxu0 0.0
  %1789 = vmatprep.subr.mxu0 0.0
  %1790 = vmatpush1.xpose.msra.mxu0 0.0
  %1791 = vmatprep.subr.mxu0 0.0
  %1792 = vmatpush1.xpose.msra.mxu0 0.0
  %1793 = vmatprep.subr.mxu0 0.0
  %1794 = vmatpush1.xpose.msra.mxu0 0.0
  %1795 = vmatprep.subr.mxu0 0.0
  %1796 = vmatpush1.xpose.msra.mxu0 0.0
  %1797 = vmatprep.subr.mxu0 0.0
  %1798 = vmatpush1.xpose.msra.mxu0 0.0
  %1799 = vmatprep.subr.mxu0 0.0
  %1800 = vmatpush1.xpose.msra.mxu0 0.0
  %1801 = vmatprep.subr.mxu0 0.0
  %1802 = vmatpush1.xpose.msra.mxu0 0.0
  %1803 = vmatprep.subr.mxu0 0.0
  %1804 = vmatpush1.xpose.msra.mxu0 0.0
  %1805 = vmatprep.subr.mxu0 0.0
  %1806 = vmatpush1.xpose.msra.mxu0 0.0
  %1807 = vmatprep.subr.mxu0 0.0
  %1808 = vmatpush1.xpose.msra.mxu0 0.0
  %1809 = vmatprep.subr.mxu0 0.0
  %1810 = vmatpush1.xpose.msra.mxu0 0.0
  %1811 = vmatprep.subr.mxu0 0.0
  %1812 = vmatpush1.xpose.msra.mxu0 0.0
  %1813 = vmatprep.subr.mxu0 0.0
  %1814 = vmatpush1.xpose.msra.mxu0 0.0
  %1815 = vmatprep.subr.mxu0 0.0
  %1816 = vmatpush1.xpose.msra.mxu0 0.0
  %1817 = vmatprep.subr.mxu0 0.0
  %1818 = vmatpush1.xpose.msra.mxu0 0.0
  %1819 = vmatprep.subr.mxu0 0.0
  %1820 = vmatpush1.xpose.msra.mxu0 0.0
  %1821 = vmatprep.subr.mxu0 0.0
  %1822 = vmatpush1.xpose.msra.mxu0 0.0
  %1823 = vmatprep.subr.mxu0 0.0
  %1824 = vmatpush1.xpose.msra.mxu0 0.0
  %1825 = vmatprep.subr.mxu0 0.0
  %1826 = vmatpush1.xpose.msra.mxu0 0.0
  %1827 = vmatprep.subr.mxu0 0.0
  %1828 = vmatpush1.xpose.msra.mxu0 0.0
  %1829 = vmatprep.subr.mxu0 0.0
  %1830 = vmatpush1.xpose.msra.mxu0 0.0
  %1831 = vmatprep.subr.mxu0 0.0
  %1832 = vmatpush1.xpose.msra.mxu0 0.0
  %1833 = vmatprep.mubr.f32.mxu0 0.0
  %1834 = vmatmul.mubr.f32.gmra.mrb[0].mxu0 %v1765
  %v1835 = vpop.f32.mrb[0].mxu0
  %v1836 = vadd.f32 0.0, %v1835
  %v1837 = vpop.f32.mrb[0].mxu0
  %1838 = vdwg.mxu0
  %v1839 = vmul.f32 %v1836, 0.35355338
  %v1840 = vadd.f32 %v1839, %v397
  %v1841 = vsel %vm317, %v1840, -inf
  %1842 = vmax.xlane.f32.xlu0 %v1841
  %v1843 = vpop.xlane.xlu0 %1842
  %v1844 = vsub.f32 %v1840, %v1843
  %v1845 = vmul.f32 %v1844, 1.442695
  %v1846 = vpow.pop %v1845
  %v1847 = vsel %vm317, %v1846, 0.0
  %1848 = vadd.xlane.f32.xlu0 %v1847
  %v1849 = vpop.xlane.xlu0 %1848
  %v1850 = vrcp.pop %v1849
  %v1851 = vmul.f32 %v1846, %v1850
  %1852 = vrot.lane.b32.xlu0 %v307, 48
  %v1853 = vpop.permute.xlu0 %1852
  %v1856 = vsel %vm317, %v1851, 0
  %1858 = vmatprep.subr.mxu0 0.0
  %1859 = vmatpush1.msra.mxu0 %v1853
  %1860 = vmatprep.subr.mxu0 0.0
  %1861 = vmatpush1.msra.mxu0 0.0
  %1862 = vmatprep.subr.mxu0 0.0
  %1863 = vmatpush1.msra.mxu0 0.0
  %1864 = vmatprep.subr.mxu0 0.0
  %1865 = vmatpush1.msra.mxu0 0.0
  %1866 = vmatprep.subr.mxu0 0.0
  %1867 = vmatpush1.msra.mxu0 0.0
  %1868 = vmatprep.subr.mxu0 0.0
  %1869 = vmatpush1.msra.mxu0 0.0
  %1870 = vmatprep.subr.mxu0 0.0
  %1871 = vmatpush1.msra.mxu0 0.0
  %1872 = vmatprep.subr.mxu0 0.0
  %1873 = vmatpush1.msra.mxu0 0.0
  %1874 = vmatprep.subr.mxu0 0.0
  %1875 = vmatpush1.msra.mxu0 0.0
  %1876 = vmatprep.subr.mxu0 0.0
  %1877 = vmatpush1.msra.mxu0 0.0
  %1878 = vmatprep.subr.mxu0 0.0
  %1879 = vmatpush1.msra.mxu0 0.0
  %1880 = vmatprep.subr.mxu0 0.0
  %1881 = vmatpush1.msra.mxu0 0.0
  %1882 = vmatprep.subr.mxu0 0.0
  %1883 = vmatpush1.msra.mxu0 0.0
  %1884 = vmatprep.subr.mxu0 0.0
  %1885 = vmatpush1.msra.mxu0 0.0
  %1886 = vmatprep.subr.mxu0 0.0
  %1887 = vmatpush1.msra.mxu0 0.0
  %1888 = vmatprep.subr.mxu0 0.0
  %1889 = vmatpush1.msra.mxu0 0.0
  %1890 = vmatprep.subr.mxu0 0.0
  %1891 = vmatpush1.msra.mxu0 0.0
  %1892 = vmatprep.subr.mxu0 0.0
  %1893 = vmatpush1.msra.mxu0 0.0
  %1894 = vmatprep.subr.mxu0 0.0
  %1895 = vmatpush1.msra.mxu0 0.0
  %1896 = vmatprep.subr.mxu0 0.0
  %1897 = vmatpush1.msra.mxu0 0.0
  %1898 = vmatprep.subr.mxu0 0.0
  %1899 = vmatpush1.msra.mxu0 0.0
  %1900 = vmatprep.subr.mxu0 0.0
  %1901 = vmatpush1.msra.mxu0 0.0
  %1902 = vmatprep.subr.mxu0 0.0
  %1903 = vmatpush1.msra.mxu0 0.0
  %1904 = vmatprep.subr.mxu0 0.0
  %1905 = vmatpush1.msra.mxu0 0.0
  %1906 = vmatprep.subr.mxu0 0.0
  %1907 = vmatpush1.msra.mxu0 0.0
  %1908 = vmatprep.subr.mxu0 0.0
  %1909 = vmatpush1.msra.mxu0 0.0
  %1910 = vmatprep.subr.mxu0 0.0
  %1911 = vmatpush1.msra.mxu0 0.0
  %1912 = vmatprep.subr.mxu0 0.0
  %1913 = vmatpush1.msra.mxu0 0.0
  %1914 = vmatprep.subr.mxu0 0.0
  %1915 = vmatpush1.msra.mxu0 0.0
  %1916 = vmatprep.subr.mxu0 0.0
  %1917 = vmatpush1.msra.mxu0 0.0
  %1918 = vmatprep.subr.mxu0 0.0
  %1919 = vmatpush1.msra.mxu0 0.0
  %1920 = vmatprep.subr.mxu0 0.0
  %1921 = vmatpush1.msra.mxu0 0.0
  %1922 = vmatprep.mubr.f32.mxu0 0.0
  %1923 = vmatmul.mubr.f32.gmra.mrb[0].mxu0 %v1856
  %v1924 = vpop.f32.mrb[0].mxu0
  %v1925 = vadd.f32 0.0, %v1924
  %v1926 = vpop.f32.mrb[0].mxu0
  %1927 = vdwg.mxu0
  %v1929 = vsel %vm317, %v1925, 0
  %1931 = vmatprep.subr.mxu0 0.0
  %1932 = vmatpush1.msra.mxu0 %v312
  %1933 = vmatprep.subr.mxu0 0.0
  %1934 = vmatpush1.msra.mxu0 0.0
  %1935 = vmatprep.subr.mxu0 0.0
  %1936 = vmatpush1.msra.mxu0 0.0
  %1937 = vmatprep.subr.mxu0 0.0
  %1938 = vmatpush1.msra.mxu0 0.0
  %1939 = vmatprep.subr.mxu0 0.0
  %1940 = vmatpush1.msra.mxu0 0.0
  %1941 = vmatprep.subr.mxu0 0.0
  %1942 = vmatpush1.msra.mxu0 0.0
  %1943 = vmatprep.subr.mxu0 0.0
  %1944 = vmatpush1.msra.mxu0 0.0
  %1945 = vmatprep.subr.mxu0 0.0
  %1946 = vmatpush1.msra.mxu0 0.0
  %1947 = vmatprep.subr.mxu0 0.0
  %1948 = vmatpush1.msra.mxu0 0.0
  %1949 = vmatprep.subr.mxu0 0.0
  %1950 = vmatpush1.msra.mxu0 0.0
  %1951 = vmatprep.subr.mxu0 0.0
  %1952 = vmatpush1.msra.mxu0 0.0
  %1953 = vmatprep.subr.mxu0 0.0
  %1954 = vmatpush1.msra.mxu0 0.0
  %1955 = vmatprep.subr.mxu0 0.0
  %1956 = vmatpush1.msra.mxu0 0.0
  %1957 = vmatprep.subr.mxu0 0.0
  %1958 = vmatpush1.msra.mxu0 0.0
  %1959 = vmatprep.subr.mxu0 0.0
  %1960 = vmatpush1.msra.mxu0 0.0
  %1961 = vmatprep.subr.mxu0 0.0
  %1962 = vmatpush1.msra.mxu0 0.0
  %1963 = vmatprep.subr.mxu0 0.0
  %1964 = vmatpush1.msra.mxu0 0.0
  %1965 = vmatprep.subr.mxu0 0.0
  %1966 = vmatpush1.msra.mxu0 0.0
  %1967 = vmatprep.subr.mxu0 0.0
  %1968 = vmatpush1.msra.mxu0 0.0
  %1969 = vmatprep.subr.mxu0 0.0
  %1970 = vmatpush1.msra.mxu0 0.0
  %1971 = vmatprep.subr.mxu0 0.0
  %1972 = vmatpush1.msra.mxu0 0.0
  %1973 = vmatprep.subr.mxu0 0.0
  %1974 = vmatpush1.msra.mxu0 0.0
  %1975 = vmatprep.subr.mxu0 0.0
  %1976 = vmatpush1.msra.mxu0 0.0
  %1977 = vmatprep.subr.mxu0 0.0
  %1978 = vmatpush1.msra.mxu0 0.0
  %1979 = vmatprep.subr.mxu0 0.0
  %1980 = vmatpush1.msra.mxu0 0.0
  %1981 = vmatprep.subr.mxu0 0.0
  %1982 = vmatpush1.msra.mxu0 0.0
  %1983 = vmatprep.subr.mxu0 0.0
  %1984 = vmatpush1.msra.mxu0 0.0
  %1985 = vmatprep.subr.mxu0 0.0
  %1986 = vmatpush1.msra.mxu0 0.0
  %1987 = vmatprep.subr.mxu0 0.0
  %1988 = vmatpush1.msra.mxu0 0.0
  %1989 = vmatprep.subr.mxu0 0.0
  %1990 = vmatpush1.msra.mxu0 0.0
  %1991 = vmatprep.subr.mxu0 0.0
  %1992 = vmatpush1.msra.mxu0 0.0
  %1993 = vmatprep.subr.mxu0 0.0
  %1994 = vmatpush1.msra.mxu0 0.0
  %1995 = vmatprep.mubr.f32.mxu0 0.0
  %1996 = vmatmul.mubr.f32.gmra.mrb[0].mxu0 %v1929
  %v1997 = vpop.f32.mrb[0].mxu0
  %v1998 = vadd.f32 0.0, %v1997
  %v1999 = vpop.f32.mrb[0].mxu0
  %2000 = vdwg.mxu0
  %v2001 = vadd.f32 %v1758, %v1998
  %2002 = vrot.lane.b32.xlu0 %v307, 104
  %v2003 = vpop.permute.xlu0 %2002
  %2004 = vrot.lane.b32.xlu0 %v307, 72
  %v2005 = vpop.permute.xlu0 %2004
  %v2006 = vsel %vm317, %v2003, 0
  %v2008 = vsel %vm317, %v2005, 0
  %2010 = vmatprep.subr.mxu0 0.0
  %2011 = vmatpush1.xpose.msra.mxu0 %v2008
  %2012 = vmatprep.subr.mxu0 0.0
  %2013 = vmatpush1.xpose.msra.mxu0 0.0
  %2014 = vmatprep.subr.mxu0 0.0
  %2015 = vmatpush1.xpose.msra.mxu0 0.0
  %2016 = vmatprep.subr.mxu0 0.0
  %2017 = vmatpush1.xpose.msra.mxu0 0.0
  %2018 = vmatprep.subr.mxu0 0.0
  %2019 = vmatpush1.xpose.msra.mxu0 0.0
  %2020 = vmatprep.subr.mxu0 0.0
  %2021 = vmatpush1.xpose.msra.mxu0 0.0
  %2022 = vmatprep.subr.mxu0 0.0
  %2023 = vmatpush1.xpose.msra.mxu0 0.0
  %2024 = vmatprep.subr.mxu0 0.0
  %2025 = vmatpush1.xpose.msra.mxu0 0.0
  %2026 = vmatprep.subr.mxu0 0.0
  %2027 = vmatpush1.xpose.msra.mxu0 0.0
  %2028 = vmatprep.subr.mxu0 0.0
  %2029 = vmatpush1.xpose.msra.mxu0 0.0
  %2030 = vmatprep.subr.mxu0 0.0
  %2031 = vmatpush1.xpose.msra.mxu0 0.0
  %2032 = vmatprep.subr.mxu0 0.0
  %2033 = vmatpush1.xpose.msra.mxu0 0.0
  %2034 = vmatprep.subr.mxu0 0.0
  %2035 = vmatpush1.xpose.msra.mxu0 0.0
  %2036 = vmatprep.subr.mxu0 0.0
  %2037 = vmatpush1.xpose.msra.mxu0 0.0
  %2038 = vmatprep.subr.mxu0 0.0
  %2039 = vmatpush1.xpose.msra.mxu0 0.0
  %2040 = vmatprep.subr.mxu0 0.0
  %2041 = vmatpush1.xpose.msra.mxu0 0.0
  %2042 = vmatprep.subr.mxu0 0.0
  %2043 = vmatpush1.xpose.msra.mxu0 0.0
  %2044 = vmatprep.subr.mxu0 0.0
  %2045 = vmatpush1.xpose.msra.mxu0 0.0
  %2046 = vmatprep.subr.mxu0 0.0
  %2047 = vmatpush1.xpose.msra.mxu0 0.0
  %2048 = vmatprep.subr.mxu0 0.0
  %2049 = vmatpush1.xpose.msra.mxu0 0.0
  %2050 = vmatprep.subr.mxu0 0.0
  %2051 = vmatpush1.xpose.msra.mxu0 0.0
  %2052 = vmatprep.subr.mxu0 0.0
  %2053 = vmatpush1.xpose.msra.mxu0 0.0
  %2054 = vmatprep.subr.mxu0 0.0
  %2055 = vmatpush1.xpose.msra.mxu0 0.0
  %2056 = vmatprep.subr.mxu0 0.0
  %2057 = vmatpush1.xpose.msra.mxu0 0.0
  %2058 = vmatprep.subr.mxu0 0.0
  %2059 = vmatpush1.xpose.msra.mxu0 0.0
  %2060 = vmatprep.subr.mxu0 0.0
  %2061 = vmatpush1.xpose.msra.mxu0 0.0
  %2062 = vmatprep.subr.mxu0 0.0
  %2063 = vmatpush1.xpose.msra.mxu0 0.0
  %2064 = vmatprep.subr.mxu0 0.0
  %2065 = vmatpush1.xpose.msra.mxu0 0.0
  %2066 = vmatprep.subr.mxu0 0.0
  %2067 = vmatpush1.xpose.msra.mxu0 0.0
  %2068 = vmatprep.subr.mxu0 0.0
  %2069 = vmatpush1.xpose.msra.mxu0 0.0
  %2070 = vmatprep.subr.mxu0 0.0
  %2071 = vmatpush1.xpose.msra.mxu0 0.0
  %2072 = vmatprep.subr.mxu0 0.0
  %2073 = vmatpush1.xpose.msra.mxu0 0.0
  %2074 = vmatprep.mubr.f32.mxu0 0.0
  %2075 = vmatmul.mubr.f32.gmra.mrb[0].mxu0 %v2006
  %v2076 = vpop.f32.mrb[0].mxu0
  %v2077 = vadd.f32 0.0, %v2076
  %v2078 = vpop.f32.mrb[0].mxu0
  %2079 = vdwg.mxu0
  %v2080 = vmul.f32 %v2077, 0.35355338
  %v2081 = vadd.f32 %v2080, %v397
  %v2082 = vsel %vm317, %v2081, -inf
  %2083 = vmax.xlane.f32.xlu0 %v2082
  %v2084 = vpop.xlane.xlu0 %2083
  %v2085 = vsub.f32 %v2081, %v2084
  %v2086 = vmul.f32 %v2085, 1.442695
  %v2087 = vpow.pop %v2086
  %v2088 = vsel %vm317, %v2087, 0.0
  %2089 = vadd.xlane.f32.xlu0 %v2088
  %v2090 = vpop.xlane.xlu0 %2089
  %v2091 = vrcp.pop %v2090
  %v2092 = vmul.f32 %v2087, %v2091
  %2093 = vrot.lane.b32.xlu0 %v307, 40
  %v2094 = vpop.permute.xlu0 %2093
  %v2097 = vsel %vm317, %v2092, 0
  %2099 = vmatprep.subr.mxu0 0.0
  %2100 = vmatpush1.msra.mxu0 %v2094
  %2101 = vmatprep.subr.mxu0 0.0
  %2102 = vmatpush1.msra.mxu0 0.0
  %2103 = vmatprep.subr.mxu0 0.0
  %2104 = vmatpush1.msra.mxu0 0.0
  %2105 = vmatprep.subr.mxu0 0.0
  %2106 = vmatpush1.msra.mxu0 0.0
  %2107 = vmatprep.subr.mxu0 0.0
  %2108 = vmatpush1.msra.mxu0 0.0
  %2109 = vmatprep.subr.mxu0 0.0
  %2110 = vmatpush1.msra.mxu0 0.0
  %2111 = vmatprep.subr.mxu0 0.0
  %2112 = vmatpush1.msra.mxu0 0.0
  %2113 = vmatprep.subr.mxu0 0.0
  %2114 = vmatpush1.msra.mxu0 0.0
  %2115 = vmatprep.subr.mxu0 0.0
  %2116 = vmatpush1.msra.mxu0 0.0
  %2117 = vmatprep.subr.mxu0 0.0
  %2118 = vmatpush1.msra.mxu0 0.0
  %2119 = vmatprep.subr.mxu0 0.0
  %2120 = vmatpush1.msra.mxu0 0.0
  %2121 = vmatprep.subr.mxu0 0.0
  %2122 = vmatpush1.msra.mxu0 0.0
  %2123 = vmatprep.subr.mxu0 0.0
  %2124 = vmatpush1.msra.mxu0 0.0
  %2125 = vmatprep.subr.mxu0 0.0
  %2126 = vmatpush1.msra.mxu0 0.0
  %2127 = vmatprep.subr.mxu0 0.0
  %2128 = vmatpush1.msra.mxu0 0.0
  %2129 = vmatprep.subr.mxu0 0.0
  %2130 = vmatpush1.msra.mxu0 0.0
  %2131 = vmatprep.subr.mxu0 0.0
  %2132 = vmatpush1.msra.mxu0 0.0
  %2133 = vmatprep.subr.mxu0 0.0
  %2134 = vmatpush1.msra.mxu0 0.0
  %2135 = vmatprep.subr.mxu0 0.0
  %2136 = vmatpush1.msra.mxu0 0.0
  %2137 = vmatprep.subr.mxu0 0.0
  %2138 = vmatpush1.msra.mxu0 0.0
  %2139 = vmatprep.subr.mxu0 0.0
  %2140 = vmatpush1.msra.mxu0 0.0
  %2141 = vmatprep.subr.mxu0 0.0
  %2142 = vmatpush1.msra.mxu0 0.0
  %2143 = vmatprep.subr.mxu0 0.0
  %2144 = vmatpush1.msra.mxu0 0.0
  %2145 = vmatprep.subr.mxu0 0.0
  %2146 = vmatpush1.msra.mxu0 0.0
  %2147 = vmatprep.subr.mxu0 0.0
  %2148 = vmatpush1.msra.mxu0 0.0
  %2149 = vmatprep.subr.mxu0 0.0
  %2150 = vmatpush1.msra.mxu0 0.0
  %2151 = vmatprep.subr.mxu0 0.0
  %2152 = vmatpush1.msra.mxu0 0.0
  %2153 = vmatprep.subr.mxu0 0.0
  %2154 = vmatpush1.msra.mxu0 0.0
  %2155 = vmatprep.subr.mxu0 0.0
  %2156 = vmatpush1.msra.mxu0 0.0
  %2157 = vmatprep.subr.mxu0 0.0
  %2158 = vmatpush1.msra.mxu0 0.0
  %2159 = vmatprep.subr.mxu0 0.0
  %2160 = vmatpush1.msra.mxu0 0.0
  %2161 = vmatprep.subr.mxu0 0.0
  %2162 = vmatpush1.msra.mxu0 0.0
  %2163 = vmatprep.mubr.f32.mxu0 0.0
  %2164 = vmatmul.mubr.f32.gmra.mrb[0].mxu0 %v2097
  %v2165 = vpop.f32.mrb[0].mxu0
  %v2166 = vadd.f32 0.0, %v2165
  %v2167 = vpop.f32.mrb[0].mxu0
  %2168 = vdwg.mxu0
  %v2170 = vsel %vm317, %v2166, 0
  %2172 = vmatprep.subr.mxu0 0.0
  %2173 = vmatpush1.msra.mxu0 %v313
  %2174 = vmatprep.subr.mxu0 0.0
  %2175 = vmatpush1.msra.mxu0 0.0
  %2176 = vmatprep.subr.mxu0 0.0
  %2177 = vmatpush1.msra.mxu0 0.0
  %2178 = vmatprep.subr.mxu0 0.0
  %2179 = vmatpush1.msra.mxu0 0.0
  %2180 = vmatprep.subr.mxu0 0.0
  %2181 = vmatpush1.msra.mxu0 0.0
  %2182 = vmatprep.subr.mxu0 0.0
  %2183 = vmatpush1.msra.mxu0 0.0
  %2184 = vmatprep.subr.mxu0 0.0
  %2185 = vmatpush1.msra.mxu0 0.0
  %2186 = vmatprep.subr.mxu0 0.0
  %2187 = vmatpush1.msra.mxu0 0.0
  %2188 = vmatprep.subr.mxu0 0.0
  %2189 = vmatpush1.msra.mxu0 0.0
  %2190 = vmatprep.subr.mxu0 0.0
  %2191 = vmatpush1.msra.mxu0 0.0
  %2192 = vmatprep.subr.mxu0 0.0
  %2193 = vmatpush1.msra.mxu0 0.0
  %2194 = vmatprep.subr.mxu0 0.0
  %2195 = vmatpush1.msra.mxu0 0.0
  %2196 = vmatprep.subr.mxu0 0.0
  %2197 = vmatpush1.msra.mxu0 0.0
  %2198 = vmatprep.subr.mxu0 0.0
  %2199 = vmatpush1.msra.mxu0 0.0
  %2200 = vmatprep.subr.mxu0 0.0
  %2201 = vmatpush1.msra.mxu0 0.0
  %2202 = vmatprep.subr.mxu0 0.0
  %2203 = vmatpush1.msra.mxu0 0.0
  %2204 = vmatprep.subr.mxu0 0.0
  %2205 = vmatpush1.msra.mxu0 0.0
  %2206 = vmatprep.subr.mxu0 0.0
  %2207 = vmatpush1.msra.mxu0 0.0
  %2208 = vmatprep.subr.mxu0 0.0
  %2209 = vmatpush1.msra.mxu0 0.0
  %2210 = vmatprep.subr.mxu0 0.0
  %2211 = vmatpush1.msra.mxu0 0.0
  %2212 = vmatprep.subr.mxu0 0.0
  %2213 = vmatpush1.msra.mxu0 0.0
  %2214 = vmatprep.subr.mxu0 0.0
  %2215 = vmatpush1.msra.mxu0 0.0
  %2216 = vmatprep.subr.mxu0 0.0
  %2217 = vmatpush1.msra.mxu0 0.0
  %2218 = vmatprep.subr.mxu0 0.0
  %2219 = vmatpush1.msra.mxu0 0.0
  %2220 = vmatprep.subr.mxu0 0.0
  %2221 = vmatpush1.msra.mxu0 0.0
  %2222 = vmatprep.subr.mxu0 0.0
  %2223 = vmatpush1.msra.mxu0 0.0
  %2224 = vmatprep.subr.mxu0 0.0
  %2225 = vmatpush1.msra.mxu0 0.0
  %2226 = vmatprep.subr.mxu0 0.0
  %2227 = vmatpush1.msra.mxu0 0.0
  %2228 = vmatprep.subr.mxu0 0.0
  %2229 = vmatpush1.msra.mxu0 0.0
  %2230 = vmatprep.subr.mxu0 0.0
  %2231 = vmatpush1.msra.mxu0 0.0
  %2232 = vmatprep.subr.mxu0 0.0
  %2233 = vmatpush1.msra.mxu0 0.0
  %2234 = vmatprep.subr.mxu0 0.0
  %2235 = vmatpush1.msra.mxu0 0.0
  %2236 = vmatprep.mubr.f32.mxu0 0.0
  %2237 = vmatmul.mubr.f32.gmra.mrb[0].mxu0 %v2170
  %v2238 = vpop.f32.mrb[0].mxu0
  %v2239 = vadd.f32 0.0, %v2238
  %v2240 = vpop.f32.mrb[0].mxu0
  %2241 = vdwg.mxu0
  %v2242 = vadd.f32 %v2001, %v2239
  %v2243 = vld [vmem:[%s9] sm:$0x1]
  %v2245 = vlaneseq
  %v2246 = vshrl.u32 %v2245, 7
  %v2247 = vsub.s32 0, %v2246
  %v2248 = vrot.slane %v2243, %v2247
  %v2250 = vadd.f32 %v1281, %v2248
  %v2251 = vadd.f32 %v2242, %v2248
  %v2252 = vadd.f32 %v2250, %v164
  %v2253 = vadd.f32 %v2251, %v169
  %v2254 = vld [vmem:[%s10] sm:$0x1]
  %v2255 = vld [vmem:[%s11] sm:$0x1]
  %v2256 = vsel %vm174, %v2252, 0.0
  %2257 = vadd.xlane.f32.xlu0 %v2256
  %v2258 = vpop.xlane.xlu0 %2257
  %v2259 = vsel %vm174, %v2253, 0.0
  %2260 = vadd.xlane.f32.xlu0 %v2259
  %v2261 = vpop.xlane.xlu0 %2260
  %v2262 = vmul.f32 %v2258, %v181
  %v2263 = vmul.f32 %v2261, %v181
  %v2264 = vsub.f32 %v2252, %v2262
  %v2265 = vsub.f32 %v2253, %v2263
  %v2266 = vmul.f32 %v2264, %v2264
  %v2267 = vmul.f32 %v2265, %v2265
  %v2268 = vsel %vm174, %v2266, 0.0
  %2269 = vadd.xlane.f32.xlu0 %v2268
  %v2270 = vpop.xlane.xlu0 %2269
  %v2271 = vsel %vm174, %v2267, 0.0
  %2272 = vadd.xlane.f32.xlu0 %v2271
  %v2273 = vpop.xlane.xlu0 %2272
  %v2274 = vmul.f32 %v2270, %v181
  %v2275 = vmul.f32 %v2273, %v181
  %v2276 = vadd.f32 %v2274, 1e-12
  %v2277 = vadd.f32 %v2275, 1e-12
  %v2278 = vrsqrt.pop %v2276
  %v2279 = vrsqrt.pop %v2277
  %v2280 = vmul.f32 %v2264, %v2278
  %v2281 = vmul.f32 %v2265, %v2279
  %v2283 = vlaneseq
  %v2284 = vshrl.u32 %v2283, 7
  %v2285 = vsub.s32 0, %v2284
  %v2286 = vrot.slane %v2254, %v2285
  %v2288 = vmul.f32 %v2280, %v2286
  %v2289 = vmul.f32 %v2281, %v2286
  %v2291 = vlaneseq
  %v2292 = vshrl.u32 %v2291, 7
  %v2293 = vsub.s32 0, %v2292
  %v2294 = vrot.slane %v2255, %v2293
  %v2296 = vadd.f32 %v2288, %v2294
  %v2297 = vadd.f32 %v2289, %v2294
  %v2298 = vld [vmem:[%s12] sm:$0xff]
  %v2299 = vld [vmem:[%s12 + $0x8] sm:$0xff]
  %v2300 = vld [vmem:[%s12 + $0x10] sm:$0xff]
  %v2301 = vld [vmem:[%s12 + $0x18] sm:$0xff]
  %v2302 = vld [vmem:[%s13] sm:$0x1]
  %v2304 = vlaneseq
  %v2305 = vshrl.u32 %v2304, 7
  %v2306 = vsub.s32 0, %v2305
  %v2307 = vrot.slane %v2302, %v2306
  %v2310 = vsel %vm174, %v2296, 0
  %v2313 = vsel %vm174, %v2297, 0
  %2315 = vmatprep.subr.mxu0 0.0
  %2316 = vmatpush1.msra.mxu0 %v2298
  %2317 = vmatprep.subr.mxu0 0.0
  %2318 = vmatpush1.msra.mxu0 %v2299
  %2319 = vmatprep.subr.mxu0 0.0
  %2320 = vmatpush1.msra.mxu0 %v2300
  %2321 = vmatprep.subr.mxu0 0.0
  %2322 = vmatpush1.msra.mxu0 %v2301
  %2323 = vmatprep.subr.mxu0 0.0
  %2324 = vmatpush1.msra.mxu0 0.0
  %2325 = vmatprep.subr.mxu0 0.0
  %2326 = vmatpush1.msra.mxu0 0.0
  %2327 = vmatprep.subr.mxu0 0.0
  %2328 = vmatpush1.msra.mxu0 0.0
  %2329 = vmatprep.subr.mxu0 0.0
  %2330 = vmatpush1.msra.mxu0 0.0
  %2331 = vmatprep.subr.mxu0 0.0
  %2332 = vmatpush1.msra.mxu0 0.0
  %2333 = vmatprep.subr.mxu0 0.0
  %2334 = vmatpush1.msra.mxu0 0.0
  %2335 = vmatprep.subr.mxu0 0.0
  %2336 = vmatpush1.msra.mxu0 0.0
  %2337 = vmatprep.subr.mxu0 0.0
  %2338 = vmatpush1.msra.mxu0 0.0
  %2339 = vmatprep.subr.mxu0 0.0
  %2340 = vmatpush1.msra.mxu0 0.0
  %2341 = vmatprep.subr.mxu0 0.0
  %2342 = vmatpush1.msra.mxu0 0.0
  %2343 = vmatprep.subr.mxu0 0.0
  %2344 = vmatpush1.msra.mxu0 0.0
  %2345 = vmatprep.subr.mxu0 0.0
  %2346 = vmatpush1.msra.mxu0 0.0
  %2347 = vmatprep.subr.mxu0 0.0
  %2348 = vmatpush1.msra.mxu0 0.0
  %2349 = vmatprep.subr.mxu0 0.0
  %2350 = vmatpush1.msra.mxu0 0.0
  %2351 = vmatprep.subr.mxu0 0.0
  %2352 = vmatpush1.msra.mxu0 0.0
  %2353 = vmatprep.subr.mxu0 0.0
  %2354 = vmatpush1.msra.mxu0 0.0
  %2355 = vmatprep.subr.mxu0 0.0
  %2356 = vmatpush1.msra.mxu0 0.0
  %2357 = vmatprep.subr.mxu0 0.0
  %2358 = vmatpush1.msra.mxu0 0.0
  %2359 = vmatprep.subr.mxu0 0.0
  %2360 = vmatpush1.msra.mxu0 0.0
  %2361 = vmatprep.subr.mxu0 0.0
  %2362 = vmatpush1.msra.mxu0 0.0
  %2363 = vmatprep.subr.mxu0 0.0
  %2364 = vmatpush1.msra.mxu0 0.0
  %2365 = vmatprep.subr.mxu0 0.0
  %2366 = vmatpush1.msra.mxu0 0.0
  %2367 = vmatprep.subr.mxu0 0.0
  %2368 = vmatpush1.msra.mxu0 0.0
  %2369 = vmatprep.subr.mxu0 0.0
  %2370 = vmatpush1.msra.mxu0 0.0
  %2371 = vmatprep.subr.mxu0 0.0
  %2372 = vmatpush1.msra.mxu0 0.0
  %2373 = vmatprep.subr.mxu0 0.0
  %2374 = vmatpush1.msra.mxu0 0.0
  %2375 = vmatprep.subr.mxu0 0.0
  %2376 = vmatpush1.msra.mxu0 0.0
  %2377 = vmatprep.subr.mxu0 0.0
  %2378 = vmatpush1.msra.mxu0 0.0
  %2379 = vmatprep.mubr.f32.mxu0 0.0
  %2380 = vmatmul.mubr.f32.gmra.mrb[0].mxu0 %v2310
  %v2381 = vpop.f32.mrb[0].mxu0
  %v2382 = vadd.f32 %v2307, %v2381
  %v2383 = vpop.f32.mrb[0].mxu0
  %2384 = vmatprep.mubr.f32.mxu0 0.0
  %2385 = vmatmul.mubr.f32.gmra.mrb[0].mxu0 %v2313
  %v2386 = vpop.f32.mrb[0].mxu0
  %v2387 = vadd.f32 %v2307, %v2386
  %v2388 = vpop.f32.mrb[0].mxu0
  %2389 = vdwg.mxu0
  %v2390 = vmul.f32 %v2382, 0.5
  %v2391 = vmul.f32 %v2387, 0.5
  %v2392 = vmul.f32 %v2382, 0.70710677
  %v2393 = vmul.f32 %v2387, 0.70710677
  %v2394 = verf.f32.pop %v2392
  %v2395 = verf.f32.pop %v2393
  %v2396 = vadd.f32 %v2394, 1.0
  %v2397 = vadd.f32 %v2395, 1.0
  %v2398 = vmul.f32 %v2390, %v2396
  %v2399 = vmul.f32 %v2391, %v2397
  %v2400 = vld [vmem:[%s14] sm:$0xff]
  %v2401 = vld [vmem:[%s14 + $0x8] sm:$0xff]
  %v2402 = vld [vmem:[%s14 + $0x10] sm:$0xff]
  %v2403 = vld [vmem:[%s14 + $0x18] sm:$0xff]
  %v2404 = vld [vmem:[%s14 + $0x20] sm:$0xff]
  %v2405 = vld [vmem:[%s14 + $0x28] sm:$0xff]
  %v2406 = vld [vmem:[%s14 + $0x30] sm:$0xff]
  %v2407 = vld [vmem:[%s14 + $0x38] sm:$0xff]
  %v2408 = vld [vmem:[%s15] sm:$0x1]
  %v2410 = vlaneseq
  %v2411 = vshrl.u32 %v2410, 7
  %v2412 = vsub.s32 0, %v2411
  %v2413 = vrot.slane %v2408, %v2412
  %v2416 = vsel %vm90, %v2398, 0
  %v2419 = vsel %vm90, %v2399, 0
  %2421 = vmatprep.subr.mxu0 0.0
  %2422 = vmatpush1.msra.mxu0 %v2400
  %2423 = vmatprep.subr.mxu0 0.0
  %2424 = vmatpush1.msra.mxu0 %v2401
  %2425 = vmatprep.subr.mxu0 0.0
  %2426 = vmatpush1.msra.mxu0 %v2402
  %2427 = vmatprep.subr.mxu0 0.0
  %2428 = vmatpush1.msra.mxu0 %v2403
  %2429 = vmatprep.subr.mxu0 0.0
  %2430 = vmatpush1.msra.mxu0 %v2404
  %2431 = vmatprep.subr.mxu0 0.0
  %2432 = vmatpush1.msra.mxu0 %v2405
  %2433 = vmatprep.subr.mxu0 0.0
  %2434 = vmatpush1.msra.mxu0 %v2406
  %2435 = vmatprep.subr.mxu0 0.0
  %2436 = vmatpush1.msra.mxu0 %v2407
  %2437 = vmatprep.subr.mxu0 0.0
  %2438 = vmatpush1.msra.mxu0 0.0
  %2439 = vmatprep.subr.mxu0 0.0
  %2440 = vmatpush1.msra.mxu0 0.0
  %2441 = vmatprep.subr.mxu0 0.0
  %2442 = vmatpush1.msra.mxu0 0.0
  %2443 = vmatprep.subr.mxu0 0.0
  %2444 = vmatpush1.msra.mxu0 0.0
  %2445 = vmatprep.subr.mxu0 0.0
  %2446 = vmatpush1.msra.mxu0 0.0
  %2447 = vmatprep.subr.mxu0 0.0
  %2448 = vmatpush1.msra.mxu0 0.0
  %2449 = vmatprep.subr.mxu0 0.0
  %2450 = vmatpush1.msra.mxu0 0.0
  %2451 = vmatprep.subr.mxu0 0.0
  %2452 = vmatpush1.msra.mxu0 0.0
  %2453 = vmatprep.subr.mxu0 0.0
  %2454 = vmatpush1.msra.mxu0 0.0
  %2455 = vmatprep.subr.mxu0 0.0
  %2456 = vmatpush1.msra.mxu0 0.0
  %2457 = vmatprep.subr.mxu0 0.0
  %2458 = vmatpush1.msra.mxu0 0.0
  %2459 = vmatprep.subr.mxu0 0.0
  %2460 = vmatpush1.msra.mxu0 0.0
  %2461 = vmatprep.subr.mxu0 0.0
  %2462 = vmatpush1.msra.mxu0 0.0
  %2463 = vmatprep.subr.mxu0 0.0
  %2464 = vmatpush1.msra.mxu0 0.0
  %2465 = vmatprep.subr.mxu0 0.0
  %2466 = vmatpush1.msra.mxu0 0.0
  %2467 = vmatprep.subr.mxu0 0.0
  %2468 = vmatpush1.msra.mxu0 0.0
  %2469 = vmatprep.subr.mxu0 0.0
  %2470 = vmatpush1.msra.mxu0 0.0
  %2471 = vmatprep.subr.mxu0 0.0
  %2472 = vmatpush1.msra.mxu0 0.0
  %2473 = vmatprep.subr.mxu0 0.0
  %2474 = vmatpush1.msra.mxu0 0.0
  %2475 = vmatprep.subr.mxu0 0.0
  %2476 = vmatpush1.msra.mxu0 0.0
  %2477 = vmatprep.subr.mxu0 0.0
  %2478 = vmatpush1.msra.mxu0 0.0
  %2479 = vmatprep.subr.mxu0 0.0
  %2480 = vmatpush1.msra.mxu0 0.0
  %2481 = vmatprep.subr.mxu0 0.0
  %2482 = vmatpush1.msra.mxu0 0.0
  %2483 = vmatprep.subr.mxu0 0.0
  %2484 = vmatpush1.msra.mxu0 0.0
  %2485 = vmatprep.mubr.f32.mxu0 0.0
  %2486 = vmatmul.mubr.f32.gmra.mrb[0].mxu0 %v2416
  %v2487 = vpop.f32.mrb[0].mxu0
  %v2488 = vadd.f32 %v2413, %v2487
  %v2489 = vpop.f32.mrb[0].mxu0
  %2490 = vmatprep.mubr.f32.mxu0 0.0
  %2491 = vmatmul.mubr.f32.gmra.mrb[0].mxu0 %v2419
  %v2492 = vpop.f32.mrb[0].mxu0
  %v2493 = vadd.f32 %v2413, %v2492
  %v2494 = vpop.f32.mrb[0].mxu0
  %2495 = vdwg.mxu0
  %v2496 = vadd.f32 %v2488, %v2252
  %v2497 = vadd.f32 %v2493, %v2253
  %s2498 = scalar_lea.vmem %s4, 1
  %v2499 = vld [vmem:[%s2498] sm:$0x1]
  %s2500 = scalar_lea.vmem %s5, 1
  %v2501 = vld [vmem:[%s2500] sm:$0x1]
  %v2502 = vsel %vm174, %v2496, 0.0
  %2503 = vadd.xlane.f32.xlu0 %v2502
  %v2504 = vpop.xlane.xlu0 %2503
  %v2505 = vsel %vm174, %v2497, 0.0
  %2506 = vadd.xlane.f32.xlu0 %v2505
  %v2507 = vpop.xlane.xlu0 %2506
  %v2508 = vmul.f32 %v2504, %v181
  %v2509 = vmul.f32 %v2507, %v181
  %v2510 = vsub.f32 %v2496, %v2508
  %v2511 = vsub.f32 %v2497, %v2509
  %v2512 = vmul.f32 %v2510, %v2510
  %v2513 = vmul.f32 %v2511, %v2511
  %v2514 = vsel %vm174, %v2512, 0.0
  %2515 = vadd.xlane.f32.xlu0 %v2514
  %v2516 = vpop.xlane.xlu0 %2515
  %v2517 = vsel %vm174, %v2513, 0.0
  %2518 = vadd.xlane.f32.xlu0 %v2517
  %v2519 = vpop.xlane.xlu0 %2518
  %v2520 = vmul.f32 %v2516, %v181
  %v2521 = vmul.f32 %v2519, %v181
  %v2522 = vadd.f32 %v2520, 1e-12
  %v2523 = vadd.f32 %v2521, 1e-12
  %v2524 = vrsqrt.pop %v2522
  %v2525 = vrsqrt.pop %v2523
  %v2526 = vmul.f32 %v2510, %v2524
  %v2527 = vmul.f32 %v2511, %v2525
  %v2529 = vlaneseq
  %v2530 = vshrl.u32 %v2529, 7
  %v2531 = vsub.s32 0, %v2530
  %v2532 = vrot.slane %v2499, %v2531
  %v2534 = vmul.f32 %v2526, %v2532
  %v2535 = vmul.f32 %v2527, %v2532
  %v2537 = vlaneseq
  %v2538 = vshrl.u32 %v2537, 7
  %v2539 = vsub.s32 0, %v2538
  %v2540 = vrot.slane %v2501, %v2539
  %v2542 = vadd.f32 %v2534, %v2540
  %v2543 = vadd.f32 %v2535, %v2540
  %s2544 = scalar_lea.vmem %s6, 32
  %v2545 = vld [vmem:[%s2544] sm:$0xff]
  %v2546 = vld [vmem:[%s2544 + $0x8] sm:$0xff]
  %v2547 = vld [vmem:[%s2544 + $0x10] sm:$0xff]
  %v2548 = vld [vmem:[%s2544 + $0x18] sm:$0xff]
  %s2549 = scalar_lea.vmem %s7, 1
  %v2550 = vld [vmem:[%s2549] sm:$0x1]
  %v2552 = vlaneseq
  %v2553 = vshrl.u32 %v2552, 7
  %v2554 = vsub.s32 0, %v2553
  %v2555 = vrot.slane %v2550, %v2554
  %v2558 = vsel %vm174, %v2542, 0
  %v2561 = vsel %vm174, %v2543, 0
  %2563 = vmatprep.subr.mxu0 0.0
  %2564 = vmatpush1.msra.mxu0 %v2545
  %2565 = vmatprep.subr.mxu0 0.0
  %2566 = vmatpush1.msra.mxu0 %v2546
  %2567 = vmatprep.subr.mxu0 0.0
  %2568 = vmatpush1.msra.mxu0 %v2547
  %2569 = vmatprep.subr.mxu0 0.0
  %2570 = vmatpush1.msra.mxu0 %v2548
  %2571 = vmatprep.subr.mxu0 0.0
  %2572 = vmatpush1.msra.mxu0 0.0
  %2573 = vmatprep.subr.mxu0 0.0
  %2574 = vmatpush1.msra.mxu0 0.0
  %2575 = vmatprep.subr.mxu0 0.0
  %2576 = vmatpush1.msra.mxu0 0.0
  %2577 = vmatprep.subr.mxu0 0.0
  %2578 = vmatpush1.msra.mxu0 0.0
  %2579 = vmatprep.subr.mxu0 0.0
  %2580 = vmatpush1.msra.mxu0 0.0
  %2581 = vmatprep.subr.mxu0 0.0
  %2582 = vmatpush1.msra.mxu0 0.0
  %2583 = vmatprep.subr.mxu0 0.0
  %2584 = vmatpush1.msra.mxu0 0.0
  %2585 = vmatprep.subr.mxu0 0.0
  %2586 = vmatpush1.msra.mxu0 0.0
  %2587 = vmatprep.subr.mxu0 0.0
  %2588 = vmatpush1.msra.mxu0 0.0
  %2589 = vmatprep.subr.mxu0 0.0
  %2590 = vmatpush1.msra.mxu0 0.0
  %2591 = vmatprep.subr.mxu0 0.0
  %2592 = vmatpush1.msra.mxu0 0.0
  %2593 = vmatprep.subr.mxu0 0.0
  %2594 = vmatpush1.msra.mxu0 0.0
  %2595 = vmatprep.subr.mxu0 0.0
  %2596 = vmatpush1.msra.mxu0 0.0
  %2597 = vmatprep.subr.mxu0 0.0
  %2598 = vmatpush1.msra.mxu0 0.0
  %2599 = vmatprep.subr.mxu0 0.0
  %2600 = vmatpush1.msra.mxu0 0.0
  %2601 = vmatprep.subr.mxu0 0.0
  %2602 = vmatpush1.msra.mxu0 0.0
  %2603 = vmatprep.subr.mxu0 0.0
  %2604 = vmatpush1.msra.mxu0 0.0
  %2605 = vmatprep.subr.mxu0 0.0
  %2606 = vmatpush1.msra.mxu0 0.0
  %2607 = vmatprep.subr.mxu0 0.0
  %2608 = vmatpush1.msra.mxu0 0.0
  %2609 = vmatprep.subr.mxu0 0.0
  %2610 = vmatpush1.msra.mxu0 0.0
  %2611 = vmatprep.subr.mxu0 0.0
  %2612 = vmatpush1.msra.mxu0 0.0
  %2613 = vmatprep.subr.mxu0 0.0
  %2614 = vmatpush1.msra.mxu0 0.0
  %2615 = vmatprep.subr.mxu0 0.0
  %2616 = vmatpush1.msra.mxu0 0.0
  %2617 = vmatprep.subr.mxu0 0.0
  %2618 = vmatpush1.msra.mxu0 0.0
  %2619 = vmatprep.subr.mxu0 0.0
  %2620 = vmatpush1.msra.mxu0 0.0
  %2621 = vmatprep.subr.mxu0 0.0
  %2622 = vmatpush1.msra.mxu0 0.0
  %2623 = vmatprep.subr.mxu0 0.0
  %2624 = vmatpush1.msra.mxu0 0.0
  %2625 = vmatprep.subr.mxu0 0.0
  %2626 = vmatpush1.msra.mxu0 0.0
  %2627 = vmatprep.mubr.f32.mxu0 0.0
  %2628 = vmatmul.mubr.f32.gmra.mrb[0].mxu0 %v2558
  %v2629 = vpop.f32.mrb[0].mxu0
  %v2630 = vadd.f32 %v2555, %v2629
  %v2631 = vpop.f32.mrb[0].mxu0
  %2632 = vmatprep.mubr.f32.mxu0 0.0
  %2633 = vmatmul.mubr.f32.gmra.mrb[0].mxu0 %v2561
  %v2634 = vpop.f32.mrb[0].mxu0
  %v2635 = vadd.f32 %v2555, %v2634
  %v2636 = vpop.f32.mrb[0].mxu0
  %2637 = vdwg.mxu0
  %s2638 = scalar_lea.vmem %s8, 32
  %v2639 = vld [vmem:[%s2638] sm:$0xff]
  %v2640 = vld [vmem:[%s2638 + $0x8] sm:$0xff]
  %v2641 = vld [vmem:[%s2638 + $0x10] sm:$0xff]
  %v2642 = vld [vmem:[%s2638 + $0x18] sm:$0xff]
  %2644 = vrot.lane.b32.xlu0 %v2630, 96
  %v2645 = vpop.permute.xlu0 %2644
  %v2646 = vsel %vm317, %v2630, 0
  %v2648 = vsel %vm317, %v2645, 0
  %2650 = vmatprep.subr.mxu0 0.0
  %2651 = vmatpush1.xpose.msra.mxu0 %v2648
  %2652 = vmatprep.subr.mxu0 0.0
  %2653 = vmatpush1.xpose.msra.mxu0 0.0
  %2654 = vmatprep.subr.mxu0 0.0
  %2655 = vmatpush1.xpose.msra.mxu0 0.0
  %2656 = vmatprep.subr.mxu0 0.0
  %2657 = vmatpush1.xpose.msra.mxu0 0.0
  %2658 = vmatprep.subr.mxu0 0.0
  %2659 = vmatpush1.xpose.msra.mxu0 0.0
  %2660 = vmatprep.subr.mxu0 0.0
  %2661 = vmatpush1.xpose.msra.mxu0 0.0
  %2662 = vmatprep.subr.mxu0 0.0
  %2663 = vmatpush1.xpose.msra.mxu0 0.0
  %2664 = vmatprep.subr.mxu0 0.0
  %2665 = vmatpush1.xpose.msra.mxu0 0.0
  %2666 = vmatprep.subr.mxu0 0.0
  %2667 = vmatpush1.xpose.msra.mxu0 0.0
  %2668 = vmatprep.subr.mxu0 0.0
  %2669 = vmatpush1.xpose.msra.mxu0 0.0
  %2670 = vmatprep.subr.mxu0 0.0
  %2671 = vmatpush1.xpose.msra.mxu0 0.0
  %2672 = vmatprep.subr.mxu0 0.0
  %2673 = vmatpush1.xpose.msra.mxu0 0.0
  %2674 = vmatprep.subr.mxu0 0.0
  %2675 = vmatpush1.xpose.msra.mxu0 0.0
  %2676 = vmatprep.subr.mxu0 0.0
  %2677 = vmatpush1.xpose.msra.mxu0 0.0
  %2678 = vmatprep.subr.mxu0 0.0
  %2679 = vmatpush1.xpose.msra.mxu0 0.0
  %2680 = vmatprep.subr.mxu0 0.0
  %2681 = vmatpush1.xpose.msra.mxu0 0.0
  %2682 = vmatprep.subr.mxu0 0.0
  %2683 = vmatpush1.xpose.msra.mxu0 0.0
  %2684 = vmatprep.subr.mxu0 0.0
  %2685 = vmatpush1.xpose.msra.mxu0 0.0
  %2686 = vmatprep.subr.mxu0 0.0
  %2687 = vmatpush1.xpose.msra.mxu0 0.0
  %2688 = vmatprep.subr.mxu0 0.0
  %2689 = vmatpush1.xpose.msra.mxu0 0.0
  %2690 = vmatprep.subr.mxu0 0.0
  %2691 = vmatpush1.xpose.msra.mxu0 0.0
  %2692 = vmatprep.subr.mxu0 0.0
  %2693 = vmatpush1.xpose.msra.mxu0 0.0
  %2694 = vmatprep.subr.mxu0 0.0
  %2695 = vmatpush1.xpose.msra.mxu0 0.0
  %2696 = vmatprep.subr.mxu0 0.0
  %2697 = vmatpush1.xpose.msra.mxu0 0.0
  %2698 = vmatprep.subr.mxu0 0.0
  %2699 = vmatpush1.xpose.msra.mxu0 0.0
  %2700 = vmatprep.subr.mxu0 0.0
  %2701 = vmatpush1.xpose.msra.mxu0 0.0
  %2702 = vmatprep.subr.mxu0 0.0
  %2703 = vmatpush1.xpose.msra.mxu0 0.0
  %2704 = vmatprep.subr.mxu0 0.0
  %2705 = vmatpush1.xpose.msra.mxu0 0.0
  %2706 = vmatprep.subr.mxu0 0.0
  %2707 = vmatpush1.xpose.msra.mxu0 0.0
  %2708 = vmatprep.subr.mxu0 0.0
  %2709 = vmatpush1.xpose.msra.mxu0 0.0
  %2710 = vmatprep.subr.mxu0 0.0
  %2711 = vmatpush1.xpose.msra.mxu0 0.0
  %2712 = vmatprep.subr.mxu0 0.0
  %2713 = vmatpush1.xpose.msra.mxu0 0.0
  %2714 = vmatprep.mubr.f32.mxu0 0.0
  %2715 = vmatmul.mubr.f32.gmra.mrb[0].mxu0 %v2646
  %v2716 = vpop.f32.mrb[0].mxu0
  %v2717 = vadd.f32 0.0, %v2716
  %v2718 = vpop.f32.mrb[0].mxu0
  %2719 = vdwg.mxu0
  %v2720 = vmul.f32 %v2717, 0.35355338
  %v2721 = vadd.f32 %v2720, %v397
  %v2722 = vsel %vm317, %v2721, -inf
  %2723 = vmax.xlane.f32.xlu0 %v2722
  %v2724 = vpop.xlane.xlu0 %2723
  %v2725 = vsub.f32 %v2721, %v2724
  %v2726 = vmul.f32 %v2725, 1.442695
  %v2727 = vpow.pop %v2726
  %v2728 = vsel %vm317, %v2727, 0.0
  %2729 = vadd.xlane.f32.xlu0 %v2728
  %v2730 = vpop.xlane.xlu0 %2729
  %v2731 = vrcp.pop %v2730
  %v2732 = vmul.f32 %v2727, %v2731
  %2733 = vrot.lane.b32.xlu0 %v2630, 64
  %v2734 = vpop.permute.xlu0 %2733
  %v2737 = vsel %vm317, %v2732, 0
  %2739 = vmatprep.subr.mxu0 0.0
  %2740 = vmatpush1.msra.mxu0 %v2734
  %2741 = vmatprep.subr.mxu0 0.0
  %2742 = vmatpush1.msra.mxu0 0.0
  %2743 = vmatprep.subr.mxu0 0.0
  %2744 = vmatpush1.msra.mxu0 0.0
  %2745 = vmatprep.subr.mxu0 0.0
  %2746 = vmatpush1.msra.mxu0 0.0
  %2747 = vmatprep.subr.mxu0 0.0
  %2748 = vmatpush1.msra.mxu0 0.0
  %2749 = vmatprep.subr.mxu0 0.0
  %2750 = vmatpush1.msra.mxu0 0.0
  %2751 = vmatprep.subr.mxu0 0.0
  %2752 = vmatpush1.msra.mxu0 0.0
  %2753 = vmatprep.subr.mxu0 0.0
  %2754 = vmatpush1.msra.mxu0 0.0
  %2755 = vmatprep.subr.mxu0 0.0
  %2756 = vmatpush1.msra.mxu0 0.0
  %2757 = vmatprep.subr.mxu0 0.0
  %2758 = vmatpush1.msra.mxu0 0.0
  %2759 = vmatprep.subr.mxu0 0.0
  %2760 = vmatpush1.msra.mxu0 0.0
  %2761 = vmatprep.subr.mxu0 0.0
  %2762 = vmatpush1.msra.mxu0 0.0
  %2763 = vmatprep.subr.mxu0 0.0
  %2764 = vmatpush1.msra.mxu0 0.0
  %2765 = vmatprep.subr.mxu0 0.0
  %2766 = vmatpush1.msra.mxu0 0.0
  %2767 = vmatprep.subr.mxu0 0.0
  %2768 = vmatpush1.msra.mxu0 0.0
  %2769 = vmatprep.subr.mxu0 0.0
  %2770 = vmatpush1.msra.mxu0 0.0
  %2771 = vmatprep.subr.mxu0 0.0
  %2772 = vmatpush1.msra.mxu0 0.0
  %2773 = vmatprep.subr.mxu0 0.0
  %2774 = vmatpush1.msra.mxu0 0.0
  %2775 = vmatprep.subr.mxu0 0.0
  %2776 = vmatpush1.msra.mxu0 0.0
  %2777 = vmatprep.subr.mxu0 0.0
  %2778 = vmatpush1.msra.mxu0 0.0
  %2779 = vmatprep.subr.mxu0 0.0
  %2780 = vmatpush1.msra.mxu0 0.0
  %2781 = vmatprep.subr.mxu0 0.0
  %2782 = vmatpush1.msra.mxu0 0.0
  %2783 = vmatprep.subr.mxu0 0.0
  %2784 = vmatpush1.msra.mxu0 0.0
  %2785 = vmatprep.subr.mxu0 0.0
  %2786 = vmatpush1.msra.mxu0 0.0
  %2787 = vmatprep.subr.mxu0 0.0
  %2788 = vmatpush1.msra.mxu0 0.0
  %2789 = vmatprep.subr.mxu0 0.0
  %2790 = vmatpush1.msra.mxu0 0.0
  %2791 = vmatprep.subr.mxu0 0.0
  %2792 = vmatpush1.msra.mxu0 0.0
  %2793 = vmatprep.subr.mxu0 0.0
  %2794 = vmatpush1.msra.mxu0 0.0
  %2795 = vmatprep.subr.mxu0 0.0
  %2796 = vmatpush1.msra.mxu0 0.0
  %2797 = vmatprep.subr.mxu0 0.0
  %2798 = vmatpush1.msra.mxu0 0.0
  %2799 = vmatprep.subr.mxu0 0.0
  %2800 = vmatpush1.msra.mxu0 0.0
  %2801 = vmatprep.subr.mxu0 0.0
  %2802 = vmatpush1.msra.mxu0 0.0
  %2803 = vmatprep.mubr.f32.mxu0 0.0
  %2804 = vmatmul.mubr.f32.gmra.mrb[0].mxu0 %v2737
  %v2805 = vpop.f32.mrb[0].mxu0
  %v2806 = vadd.f32 0.0, %v2805
  %v2807 = vpop.f32.mrb[0].mxu0
  %2808 = vdwg.mxu0
  %2809 = vrot.lane.b32.xlu0 %v2630, 120
  %v2810 = vpop.permute.xlu0 %2809
  %2811 = vrot.lane.b32.xlu0 %v2630, 88
  %v2812 = vpop.permute.xlu0 %2811
  %v2813 = vsel %vm317, %v2810, 0
  %v2815 = vsel %vm317, %v2812, 0
  %2817 = vmatprep.subr.mxu0 0.0
  %2818 = vmatpush1.xpose.msra.mxu0 %v2815
  %2819 = vmatprep.subr.mxu0 0.0
  %2820 = vmatpush1.xpose.msra.mxu0 0.0
  %2821 = vmatprep.subr.mxu0 0.0
  %2822 = vmatpush1.xpose.msra.mxu0 0.0
  %2823 = vmatprep.subr.mxu0 0.0
  %2824 = vmatpush1.xpose.msra.mxu0 0.0
  %2825 = vmatprep.subr.mxu0 0.0
  %2826 = vmatpush1.xpose.msra.mxu0 0.0
  %2827 = vmatprep.subr.mxu0 0.0
  %2828 = vmatpush1.xpose.msra.mxu0 0.0
  %2829 = vmatprep.subr.mxu0 0.0
  %2830 = vmatpush1.xpose.msra.mxu0 0.0
  %2831 = vmatprep.subr.mxu0 0.0
  %2832 = vmatpush1.xpose.msra.mxu0 0.0
  %2833 = vmatprep.subr.mxu0 0.0
  %2834 = vmatpush1.xpose.msra.mxu0 0.0
  %2835 = vmatprep.subr.mxu0 0.0
  %2836 = vmatpush1.xpose.msra.mxu0 0.0
  %2837 = vmatprep.subr.mxu0 0.0
  %2838 = vmatpush1.xpose.msra.mxu0 0.0
  %2839 = vmatprep.subr.mxu0 0.0
  %2840 = vmatpush1.xpose.msra.mxu0 0.0
  %2841 = vmatprep.subr.mxu0 0.0
  %2842 = vmatpush1.xpose.msra.mxu0 0.0
  %2843 = vmatprep.subr.mxu0 0.0
  %2844 = vmatpush1.xpose.msra.mxu0 0.0
  %2845 = vmatprep.subr.mxu0 0.0
  %2846 = vmatpush1.xpose.msra.mxu0 0.0
  %2847 = vmatprep.subr.mxu0 0.0
  %2848 = vmatpush1.xpose.msra.mxu0 0.0
  %2849 = vmatprep.subr.mxu0 0.0
  %2850 = vmatpush1.xpose.msra.mxu0 0.0
  %2851 = vmatprep.subr.mxu0 0.0
  %2852 = vmatpush1.xpose.msra.mxu0 0.0
  %2853 = vmatprep.subr.mxu0 0.0
  %2854 = vmatpush1.xpose.msra.mxu0 0.0
  %2855 = vmatprep.subr.mxu0 0.0
  %2856 = vmatpush1.xpose.msra.mxu0 0.0
  %2857 = vmatprep.subr.mxu0 0.0
  %2858 = vmatpush1.xpose.msra.mxu0 0.0
  %2859 = vmatprep.subr.mxu0 0.0
  %2860 = vmatpush1.xpose.msra.mxu0 0.0
  %2861 = vmatprep.subr.mxu0 0.0
  %2862 = vmatpush1.xpose.msra.mxu0 0.0
  %2863 = vmatprep.subr.mxu0 0.0
  %2864 = vmatpush1.xpose.msra.mxu0 0.0
  %2865 = vmatprep.subr.mxu0 0.0
  %2866 = vmatpush1.xpose.msra.mxu0 0.0
  %2867 = vmatprep.subr.mxu0 0.0
  %2868 = vmatpush1.xpose.msra.mxu0 0.0
  %2869 = vmatprep.subr.mxu0 0.0
  %2870 = vmatpush1.xpose.msra.mxu0 0.0
  %2871 = vmatprep.subr.mxu0 0.0
  %2872 = vmatpush1.xpose.msra.mxu0 0.0
  %2873 = vmatprep.subr.mxu0 0.0
  %2874 = vmatpush1.xpose.msra.mxu0 0.0
  %2875 = vmatprep.subr.mxu0 0.0
  %2876 = vmatpush1.xpose.msra.mxu0 0.0
  %2877 = vmatprep.subr.mxu0 0.0
  %2878 = vmatpush1.xpose.msra.mxu0 0.0
  %2879 = vmatprep.subr.mxu0 0.0
  %2880 = vmatpush1.xpose.msra.mxu0 0.0
  %2881 = vmatprep.mubr.f32.mxu0 0.0
  %2882 = vmatmul.mubr.f32.gmra.mrb[0].mxu0 %v2813
  %v2883 = vpop.f32.mrb[0].mxu0
  %v2884 = vadd.f32 0.0, %v2883
  %v2885 = vpop.f32.mrb[0].mxu0
  %2886 = vdwg.mxu0
  %v2887 = vmul.f32 %v2884, 0.35355338
  %v2888 = vadd.f32 %v2887, %v397
  %v2889 = vsel %vm317, %v2888, -inf
  %2890 = vmax.xlane.f32.xlu0 %v2889
  %v2891 = vpop.xlane.xlu0 %2890
  %v2892 = vsub.f32 %v2888, %v2891
  %v2893 = vmul.f32 %v2892, 1.442695
  %v2894 = vpow.pop %v2893
  %v2895 = vsel %vm317, %v2894, 0.0
  %2896 = vadd.xlane.f32.xlu0 %v2895
  %v2897 = vpop.xlane.xlu0 %2896
  %v2898 = vrcp.pop %v2897
  %v2899 = vmul.f32 %v2894, %v2898
  %2900 = vrot.lane.b32.xlu0 %v2630, 56
  %v2901 = vpop.permute.xlu0 %2900
  %v2904 = vsel %vm317, %v2899, 0
  %2906 = vmatprep.subr.mxu0 0.0
  %2907 = vmatpush1.msra.mxu0 %v2901
  %2908 = vmatprep.subr.mxu0 0.0
  %2909 = vmatpush1.msra.mxu0 0.0
  %2910 = vmatprep.subr.mxu0 0.0
  %2911 = vmatpush1.msra.mxu0 0.0
  %2912 = vmatprep.subr.mxu0 0.0
  %2913 = vmatpush1.msra.mxu0 0.0
  %2914 = vmatprep.subr.mxu0 0.0
  %2915 = vmatpush1.msra.mxu0 0.0
  %2916 = vmatprep.subr.mxu0 0.0
  %2917 = vmatpush1.msra.mxu0 0.0
  %2918 = vmatprep.subr.mxu0 0.0
  %2919 = vmatpush1.msra.mxu0 0.0
  %2920 = vmatprep.subr.mxu0 0.0
  %2921 = vmatpush1.msra.mxu0 0.0
  %2922 = vmatprep.subr.mxu0 0.0
  %2923 = vmatpush1.msra.mxu0 0.0
  %2924 = vmatprep.subr.mxu0 0.0
  %2925 = vmatpush1.msra.mxu0 0.0
  %2926 = vmatprep.subr.mxu0 0.0
  %2927 = vmatpush1.msra.mxu0 0.0
  %2928 = vmatprep.subr.mxu0 0.0
  %2929 = vmatpush1.msra.mxu0 0.0
  %2930 = vmatprep.subr.mxu0 0.0
  %2931 = vmatpush1.msra.mxu0 0.0
  %2932 = vmatprep.subr.mxu0 0.0
  %2933 = vmatpush1.msra.mxu0 0.0
  %2934 = vmatprep.subr.mxu0 0.0
  %2935 = vmatpush1.msra.mxu0 0.0
  %2936 = vmatprep.subr.mxu0 0.0
  %2937 = vmatpush1.msra.mxu0 0.0
  %2938 = vmatprep.subr.mxu0 0.0
  %2939 = vmatpush1.msra.mxu0 0.0
  %2940 = vmatprep.subr.mxu0 0.0
  %2941 = vmatpush1.msra.mxu0 0.0
  %2942 = vmatprep.subr.mxu0 0.0
  %2943 = vmatpush1.msra.mxu0 0.0
  %2944 = vmatprep.subr.mxu0 0.0
  %2945 = vmatpush1.msra.mxu0 0.0
  %2946 = vmatprep.subr.mxu0 0.0
  %2947 = vmatpush1.msra.mxu0 0.0
  %2948 = vmatprep.subr.mxu0 0.0
  %2949 = vmatpush1.msra.mxu0 0.0
  %2950 = vmatprep.subr.mxu0 0.0
  %2951 = vmatpush1.msra.mxu0 0.0
  %2952 = vmatprep.subr.mxu0 0.0
  %2953 = vmatpush1.msra.mxu0 0.0
  %2954 = vmatprep.subr.mxu0 0.0
  %2955 = vmatpush1.msra.mxu0 0.0
  %2956 = vmatprep.subr.mxu0 0.0
  %2957 = vmatpush1.msra.mxu0 0.0
  %2958 = vmatprep.subr.mxu0 0.0
  %2959 = vmatpush1.msra.mxu0 0.0
  %2960 = vmatprep.subr.mxu0 0.0
  %2961 = vmatpush1.msra.mxu0 0.0
  %2962 = vmatprep.subr.mxu0 0.0
  %2963 = vmatpush1.msra.mxu0 0.0
  %2964 = vmatprep.subr.mxu0 0.0
  %2965 = vmatpush1.msra.mxu0 0.0
  %2966 = vmatprep.subr.mxu0 0.0
  %2967 = vmatpush1.msra.mxu0 0.0
  %2968 = vmatprep.subr.mxu0 0.0
  %2969 = vmatpush1.msra.mxu0 0.0
  %2970 = vmatprep.mubr.f32.mxu0 0.0
  %2971 = vmatmul.mubr.f32.gmra.mrb[0].mxu0 %v2904
  %v2972 = vpop.f32.mrb[0].mxu0
  %v2973 = vadd.f32 0.0, %v2972
  %v2974 = vpop.f32.mrb[0].mxu0
  %2975 = vdwg.mxu0
  %v2977 = vsel %vm317, %v2973, 0
  %2979 = vmatprep.subr.mxu0 0.0
  %2980 = vmatpush1.msra.mxu0 %v2640
  %2981 = vmatprep.subr.mxu0 0.0
  %2982 = vmatpush1.msra.mxu0 0.0
  %2983 = vmatprep.subr.mxu0 0.0
  %2984 = vmatpush1.msra.mxu0 0.0
  %2985 = vmatprep.subr.mxu0 0.0
  %2986 = vmatpush1.msra.mxu0 0.0
  %2987 = vmatprep.subr.mxu0 0.0
  %2988 = vmatpush1.msra.mxu0 0.0
  %2989 = vmatprep.subr.mxu0 0.0
  %2990 = vmatpush1.msra.mxu0 0.0
  %2991 = vmatprep.subr.mxu0 0.0
  %2992 = vmatpush1.msra.mxu0 0.0
  %2993 = vmatprep.subr.mxu0 0.0
  %2994 = vmatpush1.msra.mxu0 0.0
  %2995 = vmatprep.subr.mxu0 0.0
  %2996 = vmatpush1.msra.mxu0 0.0
  %2997 = vmatprep.subr.mxu0 0.0
  %2998 = vmatpush1.msra.mxu0 0.0
  %2999 = vmatprep.subr.mxu0 0.0
  %3000 = vmatpush1.msra.mxu0 0.0
  %3001 = vmatprep.subr.mxu0 0.0
  %3002 = vmatpush1.msra.mxu0 0.0
  %3003 = vmatprep.subr.mxu0 0.0
  %3004 = vmatpush1.msra.mxu0 0.0
  %3005 = vmatprep.subr.mxu0 0.0
  %3006 = vmatpush1.msra.mxu0 0.0
  %3007 = vmatprep.subr.mxu0 0.0
  %3008 = vmatpush1.msra.mxu0 0.0
  %3009 = vmatprep.subr.mxu0 0.0
  %3010 = vmatpush1.msra.mxu0 0.0
  %3011 = vmatprep.subr.mxu0 0.0
  %3012 = vmatpush1.msra.mxu0 0.0
  %3013 = vmatprep.subr.mxu0 0.0
  %3014 = vmatpush1.msra.mxu0 0.0
  %3015 = vmatprep.subr.mxu0 0.0
  %3016 = vmatpush1.msra.mxu0 0.0
  %3017 = vmatprep.subr.mxu0 0.0
  %3018 = vmatpush1.msra.mxu0 0.0
  %3019 = vmatprep.subr.mxu0 0.0
  %3020 = vmatpush1.msra.mxu0 0.0
  %3021 = vmatprep.subr.mxu0 0.0
  %3022 = vmatpush1.msra.mxu0 0.0
  %3023 = vmatprep.subr.mxu0 0.0
  %3024 = vmatpush1.msra.mxu0 0.0
  %3025 = vmatprep.subr.mxu0 0.0
  %3026 = vmatpush1.msra.mxu0 0.0
  %3027 = vmatprep.subr.mxu0 0.0
  %3028 = vmatpush1.msra.mxu0 0.0
  %3029 = vmatprep.subr.mxu0 0.0
  %3030 = vmatpush1.msra.mxu0 0.0
  %3031 = vmatprep.subr.mxu0 0.0
  %3032 = vmatpush1.msra.mxu0 0.0
  %3033 = vmatprep.subr.mxu0 0.0
  %3034 = vmatpush1.msra.mxu0 0.0
  %3035 = vmatprep.subr.mxu0 0.0
  %3036 = vmatpush1.msra.mxu0 0.0
  %3037 = vmatprep.subr.mxu0 0.0
  %3038 = vmatpush1.msra.mxu0 0.0
  %3039 = vmatprep.subr.mxu0 0.0
  %3040 = vmatpush1.msra.mxu0 0.0
  %3041 = vmatprep.subr.mxu0 0.0
  %3042 = vmatpush1.msra.mxu0 0.0
  %3043 = vmatprep.mubr.f32.mxu0 0.0
  %3044 = vmatmul.mubr.f32.gmra.mrb[0].mxu0 %v2977
  %v3045 = vpop.f32.mrb[0].mxu0
  %v3046 = vadd.f32 0.0, %v3045
  %v3047 = vpop.f32.mrb[0].mxu0
  %3048 = vdwg.mxu0
  %v3050 = vsel %vm317, %v2806, 0
  %3052 = vmatprep.subr.mxu0 0.0
  %3053 = vmatpush1.msra.mxu0 %v2639
  %3054 = vmatprep.subr.mxu0 0.0
  %3055 = vmatpush1.msra.mxu0 0.0
  %3056 = vmatprep.subr.mxu0 0.0
  %3057 = vmatpush1.msra.mxu0 0.0
  %3058 = vmatprep.subr.mxu0 0.0
  %3059 = vmatpush1.msra.mxu0 0.0
  %3060 = vmatprep.subr.mxu0 0.0
  %3061 = vmatpush1.msra.mxu0 0.0
  %3062 = vmatprep.subr.mxu0 0.0
  %3063 = vmatpush1.msra.mxu0 0.0
  %3064 = vmatprep.subr.mxu0 0.0
  %3065 = vmatpush1.msra.mxu0 0.0
  %3066 = vmatprep.subr.mxu0 0.0
  %3067 = vmatpush1.msra.mxu0 0.0
  %3068 = vmatprep.subr.mxu0 0.0
  %3069 = vmatpush1.msra.mxu0 0.0
  %3070 = vmatprep.subr.mxu0 0.0
  %3071 = vmatpush1.msra.mxu0 0.0
  %3072 = vmatprep.subr.mxu0 0.0
  %3073 = vmatpush1.msra.mxu0 0.0
  %3074 = vmatprep.subr.mxu0 0.0
  %3075 = vmatpush1.msra.mxu0 0.0
  %3076 = vmatprep.subr.mxu0 0.0
  %3077 = vmatpush1.msra.mxu0 0.0
  %3078 = vmatprep.subr.mxu0 0.0
  %3079 = vmatpush1.msra.mxu0 0.0
  %3080 = vmatprep.subr.mxu0 0.0
  %3081 = vmatpush1.msra.mxu0 0.0
  %3082 = vmatprep.subr.mxu0 0.0
  %3083 = vmatpush1.msra.mxu0 0.0
  %3084 = vmatprep.subr.mxu0 0.0
  %3085 = vmatpush1.msra.mxu0 0.0
  %3086 = vmatprep.subr.mxu0 0.0
  %3087 = vmatpush1.msra.mxu0 0.0
  %3088 = vmatprep.subr.mxu0 0.0
  %3089 = vmatpush1.msra.mxu0 0.0
  %3090 = vmatprep.subr.mxu0 0.0
  %3091 = vmatpush1.msra.mxu0 0.0
  %3092 = vmatprep.subr.mxu0 0.0
  %3093 = vmatpush1.msra.mxu0 0.0
  %3094 = vmatprep.subr.mxu0 0.0
  %3095 = vmatpush1.msra.mxu0 0.0
  %3096 = vmatprep.subr.mxu0 0.0
  %3097 = vmatpush1.msra.mxu0 0.0
  %3098 = vmatprep.subr.mxu0 0.0
  %3099 = vmatpush1.msra.mxu0 0.0
  %3100 = vmatprep.subr.mxu0 0.0
  %3101 = vmatpush1.msra.mxu0 0.0
  %3102 = vmatprep.subr.mxu0 0.0
  %3103 = vmatpush1.msra.mxu0 0.0
  %3104 = vmatprep.subr.mxu0 0.0
  %3105 = vmatpush1.msra.mxu0 0.0
  %3106 = vmatprep.subr.mxu0 0.0
  %3107 = vmatpush1.msra.mxu0 0.0
  %3108 = vmatprep.subr.mxu0 0.0
  %3109 = vmatpush1.msra.mxu0 0.0
  %3110 = vmatprep.subr.mxu0 0.0
  %3111 = vmatpush1.msra.mxu0 0.0
  %3112 = vmatprep.subr.mxu0 0.0
  %3113 = vmatpush1.msra.mxu0 0.0
  %3114 = vmatprep.subr.mxu0 0.0
  %3115 = vmatpush1.msra.mxu0 0.0
  %3116 = vmatprep.mubr.f32.mxu0 0.0
  %3117 = vmatmul.mubr.f32.gmra.mrb[0].mxu0 %v3050
  %v3118 = vpop.f32.mrb[0].mxu0
  %v3119 = vadd.f32 %v3046, %v3118
  %v3120 = vpop.f32.mrb[0].mxu0
  %3121 = vdwg.mxu0
  %3122 = vrot.lane.b32.xlu0 %v2630, 112
  %v3123 = vpop.permute.xlu0 %3122
  %3124 = vrot.lane.b32.xlu0 %v2630, 80
  %v3125 = vpop.permute.xlu0 %3124
  %v3126 = vsel %vm317, %v3123, 0
  %v3128 = vsel %vm317, %v3125, 0
  %3130 = vmatprep.subr.mxu0 0.0
  %3131 = vmatpush1.xpose.msra.mxu0 %v3128
  %3132 = vmatprep.subr.mxu0 0.0
  %3133 = vmatpush1.xpose.msra.mxu0 0.0
  %3134 = vmatprep.subr.mxu0 0.0
  %3135 = vmatpush1.xpose.msra.mxu0 0.0
  %3136 = vmatprep.subr.mxu0 0.0
  %3137 = vmatpush1.xpose.msra.mxu0 0.0
  %3138 = vmatprep.subr.mxu0 0.0
  %3139 = vmatpush1.xpose.msra.mxu0 0.0
  %3140 = vmatprep.subr.mxu0 0.0
  %3141 = vmatpush1.xpose.msra.mxu0 0.0
  %3142 = vmatprep.subr.mxu0 0.0
  %3143 = vmatpush1.xpose.msra.mxu0 0.0
  %3144 = vmatprep.subr.mxu0 0.0
  %3145 = vmatpush1.xpose.msra.mxu0 0.0
  %3146 = vmatprep.subr.mxu0 0.0
  %3147 = vmatpush1.xpose.msra.mxu0 0.0
  %3148 = vmatprep.subr.mxu0 0.0
  %3149 = vmatpush1.xpose.msra.mxu0 0.0
  %3150 = vmatprep.subr.mxu0 0.0
  %3151 = vmatpush1.xpose.msra.mxu0 0.0
  %3152 = vmatprep.subr.mxu0 0.0
  %3153 = vmatpush1.xpose.msra.mxu0 0.0
  %3154 = vmatprep.subr.mxu0 0.0
  %3155 = vmatpush1.xpose.msra.mxu0 0.0
  %3156 = vmatprep.subr.mxu0 0.0
  %3157 = vmatpush1.xpose.msra.mxu0 0.0
  %3158 = vmatprep.subr.mxu0 0.0
  %3159 = vmatpush1.xpose.msra.mxu0 0.0
  %3160 = vmatprep.subr.mxu0 0.0
  %3161 = vmatpush1.xpose.msra.mxu0 0.0
  %3162 = vmatprep.subr.mxu0 0.0
  %3163 = vmatpush1.xpose.msra.mxu0 0.0
  %3164 = vmatprep.subr.mxu0 0.0
  %3165 = vmatpush1.xpose.msra.mxu0 0.0
  %3166 = vmatprep.subr.mxu0 0.0
  %3167 = vmatpush1.xpose.msra.mxu0 0.0
  %3168 = vmatprep.subr.mxu0 0.0
  %3169 = vmatpush1.xpose.msra.mxu0 0.0
  %3170 = vmatprep.subr.mxu0 0.0
  %3171 = vmatpush1.xpose.msra.mxu0 0.0
  %3172 = vmatprep.subr.mxu0 0.0
  %3173 = vmatpush1.xpose.msra.mxu0 0.0
  %3174 = vmatprep.subr.mxu0 0.0
  %3175 = vmatpush1.xpose.msra.mxu0 0.0
  %3176 = vmatprep.subr.mxu0 0.0
  %3177 = vmatpush1.xpose.msra.mxu0 0.0
  %3178 = vmatprep.subr.mxu0 0.0
  %3179 = vmatpush1.xpose.msra.mxu0 0.0
  %3180 = vmatprep.subr.mxu0 0.0
  %3181 = vmatpush1.xpose.msra.mxu0 0.0
  %3182 = vmatprep.subr.mxu0 0.0
  %3183 = vmatpush1.xpose.msra.mxu0 0.0
  %3184 = vmatprep.subr.mxu0 0.0
  %3185 = vmatpush1.xpose.msra.mxu0 0.0
  %3186 = vmatprep.subr.mxu0 0.0
  %3187 = vmatpush1.xpose.msra.mxu0 0.0
  %3188 = vmatprep.subr.mxu0 0.0
  %3189 = vmatpush1.xpose.msra.mxu0 0.0
  %3190 = vmatprep.subr.mxu0 0.0
  %3191 = vmatpush1.xpose.msra.mxu0 0.0
  %3192 = vmatprep.subr.mxu0 0.0
  %3193 = vmatpush1.xpose.msra.mxu0 0.0
  %3194 = vmatprep.mubr.f32.mxu0 0.0
  %3195 = vmatmul.mubr.f32.gmra.mrb[0].mxu0 %v3126
  %v3196 = vpop.f32.mrb[0].mxu0
  %v3197 = vadd.f32 0.0, %v3196
  %v3198 = vpop.f32.mrb[0].mxu0
  %3199 = vdwg.mxu0
  %v3200 = vmul.f32 %v3197, 0.35355338
  %v3201 = vadd.f32 %v3200, %v397
  %v3202 = vsel %vm317, %v3201, -inf
  %3203 = vmax.xlane.f32.xlu0 %v3202
  %v3204 = vpop.xlane.xlu0 %3203
  %v3205 = vsub.f32 %v3201, %v3204
  %v3206 = vmul.f32 %v3205, 1.442695
  %v3207 = vpow.pop %v3206
  %v3208 = vsel %vm317, %v3207, 0.0
  %3209 = vadd.xlane.f32.xlu0 %v3208
  %v3210 = vpop.xlane.xlu0 %3209
  %v3211 = vrcp.pop %v3210
  %v3212 = vmul.f32 %v3207, %v3211
  %3213 = vrot.lane.b32.xlu0 %v2630, 48
  %v3214 = vpop.permute.xlu0 %3213
  %v3217 = vsel %vm317, %v3212, 0
  %3219 = vmatprep.subr.mxu0 0.0
  %3220 = vmatpush1.msra.mxu0 %v3214
  %3221 = vmatprep.subr.mxu0 0.0
  %3222 = vmatpush1.msra.mxu0 0.0
  %3223 = vmatprep.subr.mxu0 0.0
  %3224 = vmatpush1.msra.mxu0 0.0
  %3225 = vmatprep.subr.mxu0 0.0
  %3226 = vmatpush1.msra.mxu0 0.0
  %3227 = vmatprep.subr.mxu0 0.0
  %3228 = vmatpush1.msra.mxu0 0.0
  %3229 = vmatprep.subr.mxu0 0.0
  %3230 = vmatpush1.msra.mxu0 0.0
  %3231 = vmatprep.subr.mxu0 0.0
  %3232 = vmatpush1.msra.mxu0 0.0
  %3233 = vmatprep.subr.mxu0 0.0
  %3234 = vmatpush1.msra.mxu0 0.0
  %3235 = vmatprep.subr.mxu0 0.0
  %3236 = vmatpush1.msra.mxu0 0.0
  %3237 = vmatprep.subr.mxu0 0.0
  %3238 = vmatpush1.msra.mxu0 0.0
  %3239 = vmatprep.subr.mxu0 0.0
  %3240 = vmatpush1.msra.mxu0 0.0
  %3241 = vmatprep.subr.mxu0 0.0
  %3242 = vmatpush1.msra.mxu0 0.0
  %3243 = vmatprep.subr.mxu0 0.0
  %3244 = vmatpush1.msra.mxu0 0.0
  %3245 = vmatprep.subr.mxu0 0.0
  %3246 = vmatpush1.msra.mxu0 0.0
  %3247 = vmatprep.subr.mxu0 0.0
  %3248 = vmatpush1.msra.mxu0 0.0
  %3249 = vmatprep.subr.mxu0 0.0
  %3250 = vmatpush1.msra.mxu0 0.0
  %3251 = vmatprep.subr.mxu0 0.0
  %3252 = vmatpush1.msra.mxu0 0.0
  %3253 = vmatprep.subr.mxu0 0.0
  %3254 = vmatpush1.msra.mxu0 0.0
  %3255 = vmatprep.subr.mxu0 0.0
  %3256 = vmatpush1.msra.mxu0 0.0
  %3257 = vmatprep.subr.mxu0 0.0
  %3258 = vmatpush1.msra.mxu0 0.0
  %3259 = vmatprep.subr.mxu0 0.0
  %3260 = vmatpush1.msra.mxu0 0.0
  %3261 = vmatprep.subr.mxu0 0.0
  %3262 = vmatpush1.msra.mxu0 0.0
  %3263 = vmatprep.subr.mxu0 0.0
  %3264 = vmatpush1.msra.mxu0 0.0
  %3265 = vmatprep.subr.mxu0 0.0
  %3266 = vmatpush1.msra.mxu0 0.0
  %3267 = vmatprep.subr.mxu0 0.0
  %3268 = vmatpush1.msra.mxu0 0.0
  %3269 = vmatprep.subr.mxu0 0.0
  %3270 = vmatpush1.msra.mxu0 0.0
  %3271 = vmatprep.subr.mxu0 0.0
  %3272 = vmatpush1.msra.mxu0 0.0
  %3273 = vmatprep.subr.mxu0 0.0
  %3274 = vmatpush1.msra.mxu0 0.0
  %3275 = vmatprep.subr.mxu0 0.0
  %3276 = vmatpush1.msra.mxu0 0.0
  %3277 = vmatprep.subr.mxu0 0.0
  %3278 = vmatpush1.msra.mxu0 0.0
  %3279 = vmatprep.subr.mxu0 0.0
  %3280 = vmatpush1.msra.mxu0 0.0
  %3281 = vmatprep.subr.mxu0 0.0
  %3282 = vmatpush1.msra.mxu0 0.0
  %3283 = vmatprep.mubr.f32.mxu0 0.0
  %3284 = vmatmul.mubr.f32.gmra.mrb[0].mxu0 %v3217
  %v3285 = vpop.f32.mrb[0].mxu0
  %v3286 = vadd.f32 0.0, %v3285
  %v3287 = vpop.f32.mrb[0].mxu0
  %3288 = vdwg.mxu0
  %v3290 = vsel %vm317, %v3286, 0
  %3292 = vmatprep.subr.mxu0 0.0
  %3293 = vmatpush1.msra.mxu0 %v2641
  %3294 = vmatprep.subr.mxu0 0.0
  %3295 = vmatpush1.msra.mxu0 0.0
  %3296 = vmatprep.subr.mxu0 0.0
  %3297 = vmatpush1.msra.mxu0 0.0
  %3298 = vmatprep.subr.mxu0 0.0
  %3299 = vmatpush1.msra.mxu0 0.0
  %3300 = vmatprep.subr.mxu0 0.0
  %3301 = vmatpush1.msra.mxu0 0.0
  %3302 = vmatprep.subr.mxu0 0.0
  %3303 = vmatpush1.msra.mxu0 0.0
  %3304 = vmatprep.subr.mxu0 0.0
  %3305 = vmatpush1.msra.mxu0 0.0
  %3306 = vmatprep.subr.mxu0 0.0
  %3307 = vmatpush1.msra.mxu0 0.0
  %3308 = vmatprep.subr.mxu0 0.0
  %3309 = vmatpush1.msra.mxu0 0.0
  %3310 = vmatprep.subr.mxu0 0.0
  %3311 = vmatpush1.msra.mxu0 0.0
  %3312 = vmatprep.subr.mxu0 0.0
  %3313 = vmatpush1.msra.mxu0 0.0
  %3314 = vmatprep.subr.mxu0 0.0
  %3315 = vmatpush1.msra.mxu0 0.0
  %3316 = vmatprep.subr.mxu0 0.0
  %3317 = vmatpush1.msra.mxu0 0.0
  %3318 = vmatprep.subr.mxu0 0.0
  %3319 = vmatpush1.msra.mxu0 0.0
  %3320 = vmatprep.subr.mxu0 0.0
  %3321 = vmatpush1.msra.mxu0 0.0
  %3322 = vmatprep.subr.mxu0 0.0
  %3323 = vmatpush1.msra.mxu0 0.0
  %3324 = vmatprep.subr.mxu0 0.0
  %3325 = vmatpush1.msra.mxu0 0.0
  %3326 = vmatprep.subr.mxu0 0.0
  %3327 = vmatpush1.msra.mxu0 0.0
  %3328 = vmatprep.subr.mxu0 0.0
  %3329 = vmatpush1.msra.mxu0 0.0
  %3330 = vmatprep.subr.mxu0 0.0
  %3331 = vmatpush1.msra.mxu0 0.0
  %3332 = vmatprep.subr.mxu0 0.0
  %3333 = vmatpush1.msra.mxu0 0.0
  %3334 = vmatprep.subr.mxu0 0.0
  %3335 = vmatpush1.msra.mxu0 0.0
  %3336 = vmatprep.subr.mxu0 0.0
  %3337 = vmatpush1.msra.mxu0 0.0
  %3338 = vmatprep.subr.mxu0 0.0
  %3339 = vmatpush1.msra.mxu0 0.0
  %3340 = vmatprep.subr.mxu0 0.0
  %3341 = vmatpush1.msra.mxu0 0.0
  %3342 = vmatprep.subr.mxu0 0.0
  %3343 = vmatpush1.msra.mxu0 0.0
  %3344 = vmatprep.subr.mxu0 0.0
  %3345 = vmatpush1.msra.mxu0 0.0
  %3346 = vmatprep.subr.mxu0 0.0
  %3347 = vmatpush1.msra.mxu0 0.0
  %3348 = vmatprep.subr.mxu0 0.0
  %3349 = vmatpush1.msra.mxu0 0.0
  %3350 = vmatprep.subr.mxu0 0.0
  %3351 = vmatpush1.msra.mxu0 0.0
  %3352 = vmatprep.subr.mxu0 0.0
  %3353 = vmatpush1.msra.mxu0 0.0
  %3354 = vmatprep.subr.mxu0 0.0
  %3355 = vmatpush1.msra.mxu0 0.0
  %3356 = vmatprep.mubr.f32.mxu0 0.0
  %3357 = vmatmul.mubr.f32.gmra.mrb[0].mxu0 %v3290
  %v3358 = vpop.f32.mrb[0].mxu0
  %v3359 = vadd.f32 0.0, %v3358
  %v3360 = vpop.f32.mrb[0].mxu0
  %3361 = vdwg.mxu0
  %v3362 = vadd.f32 %v3119, %v3359
  %3363 = vrot.lane.b32.xlu0 %v2630, 104
  %v3364 = vpop.permute.xlu0 %3363
  %3365 = vrot.lane.b32.xlu0 %v2630, 72
  %v3366 = vpop.permute.xlu0 %3365
  %v3367 = vsel %vm317, %v3364, 0
  %v3369 = vsel %vm317, %v3366, 0
  %3371 = vmatprep.subr.mxu0 0.0
  %3372 = vmatpush1.xpose.msra.mxu0 %v3369
  %3373 = vmatprep.subr.mxu0 0.0
  %3374 = vmatpush1.xpose.msra.mxu0 0.0
  %3375 = vmatprep.subr.mxu0 0.0
  %3376 = vmatpush1.xpose.msra.mxu0 0.0
  %3377 = vmatprep.subr.mxu0 0.0
  %3378 = vmatpush1.xpose.msra.mxu0 0.0
  %3379 = vmatprep.subr.mxu0 0.0
  %3380 = vmatpush1.xpose.msra.mxu0 0.0
  %3381 = vmatprep.subr.mxu0 0.0
  %3382 = vmatpush1.xpose.msra.mxu0 0.0
  %3383 = vmatprep.subr.mxu0 0.0
  %3384 = vmatpush1.xpose.msra.mxu0 0.0
  %3385 = vmatprep.subr.mxu0 0.0
  %3386 = vmatpush1.xpose.msra.mxu0 0.0
  %3387 = vmatprep.subr.mxu0 0.0
  %3388 = vmatpush1.xpose.msra.mxu0 0.0
  %3389 = vmatprep.subr.mxu0 0.0
  %3390 = vmatpush1.xpose.msra.mxu0 0.0
  %3391 = vmatprep.subr.mxu0 0.0
  %3392 = vmatpush1.xpose.msra.mxu0 0.0
  %3393 = vmatprep.subr.mxu0 0.0
  %3394 = vmatpush1.xpose.msra.mxu0 0.0
  %3395 = vmatprep.subr.mxu0 0.0
  %3396 = vmatpush1.xpose.msra.mxu0 0.0
  %3397 = vmatprep.subr.mxu0 0.0
  %3398 = vmatpush1.xpose.msra.mxu0 0.0
  %3399 = vmatprep.subr.mxu0 0.0
  %3400 = vmatpush1.xpose.msra.mxu0 0.0
  %3401 = vmatprep.subr.mxu0 0.0
  %3402 = vmatpush1.xpose.msra.mxu0 0.0
  %3403 = vmatprep.subr.mxu0 0.0
  %3404 = vmatpush1.xpose.msra.mxu0 0.0
  %3405 = vmatprep.subr.mxu0 0.0
  %3406 = vmatpush1.xpose.msra.mxu0 0.0
  %3407 = vmatprep.subr.mxu0 0.0
  %3408 = vmatpush1.xpose.msra.mxu0 0.0
  %3409 = vmatprep.subr.mxu0 0.0
  %3410 = vmatpush1.xpose.msra.mxu0 0.0
  %3411 = vmatprep.subr.mxu0 0.0
  %3412 = vmatpush1.xpose.msra.mxu0 0.0
  %3413 = vmatprep.subr.mxu0 0.0
  %3414 = vmatpush1.xpose.msra.mxu0 0.0
  %3415 = vmatprep.subr.mxu0 0.0
  %3416 = vmatpush1.xpose.msra.mxu0 0.0
  %3417 = vmatprep.subr.mxu0 0.0
  %3418 = vmatpush1.xpose.msra.mxu0 0.0
  %3419 = vmatprep.subr.mxu0 0.0
  %3420 = vmatpush1.xpose.msra.mxu0 0.0
  %3421 = vmatprep.subr.mxu0 0.0
  %3422 = vmatpush1.xpose.msra.mxu0 0.0
  %3423 = vmatprep.subr.mxu0 0.0
  %3424 = vmatpush1.xpose.msra.mxu0 0.0
  %3425 = vmatprep.subr.mxu0 0.0
  %3426 = vmatpush1.xpose.msra.mxu0 0.0
  %3427 = vmatprep.subr.mxu0 0.0
  %3428 = vmatpush1.xpose.msra.mxu0 0.0
  %3429 = vmatprep.subr.mxu0 0.0
  %3430 = vmatpush1.xpose.msra.mxu0 0.0
  %3431 = vmatprep.subr.mxu0 0.0
  %3432 = vmatpush1.xpose.msra.mxu0 0.0
  %3433 = vmatprep.subr.mxu0 0.0
  %3434 = vmatpush1.xpose.msra.mxu0 0.0
  %3435 = vmatprep.mubr.f32.mxu0 0.0
  %3436 = vmatmul.mubr.f32.gmra.mrb[0].mxu0 %v3367
  %v3437 = vpop.f32.mrb[0].mxu0
  %v3438 = vadd.f32 0.0, %v3437
  %v3439 = vpop.f32.mrb[0].mxu0
  %3440 = vdwg.mxu0
  %v3441 = vmul.f32 %v3438, 0.35355338
  %v3442 = vadd.f32 %v3441, %v397
  %v3443 = vsel %vm317, %v3442, -inf
  %3444 = vmax.xlane.f32.xlu0 %v3443
  %v3445 = vpop.xlane.xlu0 %3444
  %v3446 = vsub.f32 %v3442, %v3445
  %v3447 = vmul.f32 %v3446, 1.442695
  %v3448 = vpow.pop %v3447
  %v3449 = vsel %vm317, %v3448, 0.0
  %3450 = vadd.xlane.f32.xlu0 %v3449
  %v3451 = vpop.xlane.xlu0 %3450
  %v3452 = vrcp.pop %v3451
  %v3453 = vmul.f32 %v3448, %v3452
  %3454 = vrot.lane.b32.xlu0 %v2630, 40
  %v3455 = vpop.permute.xlu0 %3454
  %v3458 = vsel %vm317, %v3453, 0
  %3460 = vmatprep.subr.mxu0 0.0
  %3461 = vmatpush1.msra.mxu0 %v3455
  %3462 = vmatprep.subr.mxu0 0.0
  %3463 = vmatpush1.msra.mxu0 0.0
  %3464 = vmatprep.subr.mxu0 0.0
  %3465 = vmatpush1.msra.mxu0 0.0
  %3466 = vmatprep.subr.mxu0 0.0
  %3467 = vmatpush1.msra.mxu0 0.0
  %3468 = vmatprep.subr.mxu0 0.0
  %3469 = vmatpush1.msra.mxu0 0.0
  %3470 = vmatprep.subr.mxu0 0.0
  %3471 = vmatpush1.msra.mxu0 0.0
  %3472 = vmatprep.subr.mxu0 0.0
  %3473 = vmatpush1.msra.mxu0 0.0
  %3474 = vmatprep.subr.mxu0 0.0
  %3475 = vmatpush1.msra.mxu0 0.0
  %3476 = vmatprep.subr.mxu0 0.0
  %3477 = vmatpush1.msra.mxu0 0.0
  %3478 = vmatprep.subr.mxu0 0.0
  %3479 = vmatpush1.msra.mxu0 0.0
  %3480 = vmatprep.subr.mxu0 0.0
  %3481 = vmatpush1.msra.mxu0 0.0
  %3482 = vmatprep.subr.mxu0 0.0
  %3483 = vmatpush1.msra.mxu0 0.0
  %3484 = vmatprep.subr.mxu0 0.0
  %3485 = vmatpush1.msra.mxu0 0.0
  %3486 = vmatprep.subr.mxu0 0.0
  %3487 = vmatpush1.msra.mxu0 0.0
  %3488 = vmatprep.subr.mxu0 0.0
  %3489 = vmatpush1.msra.mxu0 0.0
  %3490 = vmatprep.subr.mxu0 0.0
  %3491 = vmatpush1.msra.mxu0 0.0
  %3492 = vmatprep.subr.mxu0 0.0
  %3493 = vmatpush1.msra.mxu0 0.0
  %3494 = vmatprep.subr.mxu0 0.0
  %3495 = vmatpush1.msra.mxu0 0.0
  %3496 = vmatprep.subr.mxu0 0.0
  %3497 = vmatpush1.msra.mxu0 0.0
  %3498 = vmatprep.subr.mxu0 0.0
  %3499 = vmatpush1.msra.mxu0 0.0
  %3500 = vmatprep.subr.mxu0 0.0
  %3501 = vmatpush1.msra.mxu0 0.0
  %3502 = vmatprep.subr.mxu0 0.0
  %3503 = vmatpush1.msra.mxu0 0.0
  %3504 = vmatprep.subr.mxu0 0.0
  %3505 = vmatpush1.msra.mxu0 0.0
  %3506 = vmatprep.subr.mxu0 0.0
  %3507 = vmatpush1.msra.mxu0 0.0
  %3508 = vmatprep.subr.mxu0 0.0
  %3509 = vmatpush1.msra.mxu0 0.0
  %3510 = vmatprep.subr.mxu0 0.0
  %3511 = vmatpush1.msra.mxu0 0.0
  %3512 = vmatprep.subr.mxu0 0.0
  %3513 = vmatpush1.msra.mxu0 0.0
  %3514 = vmatprep.subr.mxu0 0.0
  %3515 = vmatpush1.msra.mxu0 0.0
  %3516 = vmatprep.subr.mxu0 0.0
  %3517 = vmatpush1.msra.mxu0 0.0
  %3518 = vmatprep.subr.mxu0 0.0
  %3519 = vmatpush1.msra.mxu0 0.0
  %3520 = vmatprep.subr.mxu0 0.0
  %3521 = vmatpush1.msra.mxu0 0.0
  %3522 = vmatprep.subr.mxu0 0.0
  %3523 = vmatpush1.msra.mxu0 0.0
  %3524 = vmatprep.mubr.f32.mxu0 0.0
  %3525 = vmatmul.mubr.f32.gmra.mrb[0].mxu0 %v3458
  %v3526 = vpop.f32.mrb[0].mxu0
  %v3527 = vadd.f32 0.0, %v3526
  %v3528 = vpop.f32.mrb[0].mxu0
  %3529 = vdwg.mxu0
  %v3531 = vsel %vm317, %v3527, 0
  %3533 = vmatprep.subr.mxu0 0.0
  %3534 = vmatpush1.msra.mxu0 %v2642
  %3535 = vmatprep.subr.mxu0 0.0
  %3536 = vmatpush1.msra.mxu0 0.0
  %3537 = vmatprep.subr.mxu0 0.0
  %3538 = vmatpush1.msra.mxu0 0.0
  %3539 = vmatprep.subr.mxu0 0.0
  %3540 = vmatpush1.msra.mxu0 0.0
  %3541 = vmatprep.subr.mxu0 0.0
  %3542 = vmatpush1.msra.mxu0 0.0
  %3543 = vmatprep.subr.mxu0 0.0
  %3544 = vmatpush1.msra.mxu0 0.0
  %3545 = vmatprep.subr.mxu0 0.0
  %3546 = vmatpush1.msra.mxu0 0.0
  %3547 = vmatprep.subr.mxu0 0.0
  %3548 = vmatpush1.msra.mxu0 0.0
  %3549 = vmatprep.subr.mxu0 0.0
  %3550 = vmatpush1.msra.mxu0 0.0
  %3551 = vmatprep.subr.mxu0 0.0
  %3552 = vmatpush1.msra.mxu0 0.0
  %3553 = vmatprep.subr.mxu0 0.0
  %3554 = vmatpush1.msra.mxu0 0.0
  %3555 = vmatprep.subr.mxu0 0.0
  %3556 = vmatpush1.msra.mxu0 0.0
  %3557 = vmatprep.subr.mxu0 0.0
  %3558 = vmatpush1.msra.mxu0 0.0
  %3559 = vmatprep.subr.mxu0 0.0
  %3560 = vmatpush1.msra.mxu0 0.0
  %3561 = vmatprep.subr.mxu0 0.0
  %3562 = vmatpush1.msra.mxu0 0.0
  %3563 = vmatprep.subr.mxu0 0.0
  %3564 = vmatpush1.msra.mxu0 0.0
  %3565 = vmatprep.subr.mxu0 0.0
  %3566 = vmatpush1.msra.mxu0 0.0
  %3567 = vmatprep.subr.mxu0 0.0
  %3568 = vmatpush1.msra.mxu0 0.0
  %3569 = vmatprep.subr.mxu0 0.0
  %3570 = vmatpush1.msra.mxu0 0.0
  %3571 = vmatprep.subr.mxu0 0.0
  %3572 = vmatpush1.msra.mxu0 0.0
  %3573 = vmatprep.subr.mxu0 0.0
  %3574 = vmatpush1.msra.mxu0 0.0
  %3575 = vmatprep.subr.mxu0 0.0
  %3576 = vmatpush1.msra.mxu0 0.0
  %3577 = vmatprep.subr.mxu0 0.0
  %3578 = vmatpush1.msra.mxu0 0.0
  %3579 = vmatprep.subr.mxu0 0.0
  %3580 = vmatpush1.msra.mxu0 0.0
  %3581 = vmatprep.subr.mxu0 0.0
  %3582 = vmatpush1.msra.mxu0 0.0
  %3583 = vmatprep.subr.mxu0 0.0
  %3584 = vmatpush1.msra.mxu0 0.0
  %3585 = vmatprep.subr.mxu0 0.0
  %3586 = vmatpush1.msra.mxu0 0.0
  %3587 = vmatprep.subr.mxu0 0.0
  %3588 = vmatpush1.msra.mxu0 0.0
  %3589 = vmatprep.subr.mxu0 0.0
  %3590 = vmatpush1.msra.mxu0 0.0
  %3591 = vmatprep.subr.mxu0 0.0
  %3592 = vmatpush1.msra.mxu0 0.0
  %3593 = vmatprep.subr.mxu0 0.0
  %3594 = vmatpush1.msra.mxu0 0.0
  %3595 = vmatprep.subr.mxu0 0.0
  %3596 = vmatpush1.msra.mxu0 0.0
  %3597 = vmatprep.mubr.f32.mxu0 0.0
  %3598 = vmatmul.mubr.f32.gmra.mrb[0].mxu0 %v3531
  %v3599 = vpop.f32.mrb[0].mxu0
  %v3600 = vadd.f32 0.0, %v3599
  %v3601 = vpop.f32.mrb[0].mxu0
  %3602 = vdwg.mxu0
  %v3603 = vadd.f32 %v3362, %v3600
  %3605 = vrot.lane.b32.xlu0 %v2635, 96
  %v3606 = vpop.permute.xlu0 %3605
  %v3607 = vsel %vm317, %v2635, 0
  %v3609 = vsel %vm317, %v3606, 0
  %3611 = vmatprep.subr.mxu0 0.0
  %3612 = vmatpush1.xpose.msra.mxu0 %v3609
  %3613 = vmatprep.subr.mxu0 0.0
  %3614 = vmatpush1.xpose.msra.mxu0 0.0
  %3615 = vmatprep.subr.mxu0 0.0
  %3616 = vmatpush1.xpose.msra.mxu0 0.0
  %3617 = vmatprep.subr.mxu0 0.0
  %3618 = vmatpush1.xpose.msra.mxu0 0.0
  %3619 = vmatprep.subr.mxu0 0.0
  %3620 = vmatpush1.xpose.msra.mxu0 0.0
  %3621 = vmatprep.subr.mxu0 0.0
  %3622 = vmatpush1.xpose.msra.mxu0 0.0
  %3623 = vmatprep.subr.mxu0 0.0
  %3624 = vmatpush1.xpose.msra.mxu0 0.0
  %3625 = vmatprep.subr.mxu0 0.0
  %3626 = vmatpush1.xpose.msra.mxu0 0.0
  %3627 = vmatprep.subr.mxu0 0.0
  %3628 = vmatpush1.xpose.msra.mxu0 0.0
  %3629 = vmatprep.subr.mxu0 0.0
  %3630 = vmatpush1.xpose.msra.mxu0 0.0
  %3631 = vmatprep.subr.mxu0 0.0
  %3632 = vmatpush1.xpose.msra.mxu0 0.0
  %3633 = vmatprep.subr.mxu0 0.0
  %3634 = vmatpush1.xpose.msra.mxu0 0.0
  %3635 = vmatprep.subr.mxu0 0.0
  %3636 = vmatpush1.xpose.msra.mxu0 0.0
  %3637 = vmatprep.subr.mxu0 0.0
  %3638 = vmatpush1.xpose.msra.mxu0 0.0
  %3639 = vmatprep.subr.mxu0 0.0
  %3640 = vmatpush1.xpose.msra.mxu0 0.0
  %3641 = vmatprep.subr.mxu0 0.0
  %3642 = vmatpush1.xpose.msra.mxu0 0.0
  %3643 = vmatprep.subr.mxu0 0.0
  %3644 = vmatpush1.xpose.msra.mxu0 0.0
  %3645 = vmatprep.subr.mxu0 0.0
  %3646 = vmatpush1.xpose.msra.mxu0 0.0
  %3647 = vmatprep.subr.mxu0 0.0
  %3648 = vmatpush1.xpose.msra.mxu0 0.0
  %3649 = vmatprep.subr.mxu0 0.0
  %3650 = vmatpush1.xpose.msra.mxu0 0.0
  %3651 = vmatprep.subr.mxu0 0.0
  %3652 = vmatpush1.xpose.msra.mxu0 0.0
  %3653 = vmatprep.subr.mxu0 0.0
  %3654 = vmatpush1.xpose.msra.mxu0 0.0
  %3655 = vmatprep.subr.mxu0 0.0
  %3656 = vmatpush1.xpose.msra.mxu0 0.0
  %3657 = vmatprep.subr.mxu0 0.0
  %3658 = vmatpush1.xpose.msra.mxu0 0.0
  %3659 = vmatprep.subr.mxu0 0.0
  %3660 = vmatpush1.xpose.msra.mxu0 0.0
  %3661 = vmatprep.subr.mxu0 0.0
  %3662 = vmatpush1.xpose.msra.mxu0 0.0
  %3663 = vmatprep.subr.mxu0 0.0
  %3664 = vmatpush1.xpose.msra.mxu0 0.0
  %3665 = vmatprep.subr.mxu0 0.0
  %3666 = vmatpush1.xpose.msra.mxu0 0.0
  %3667 = vmatprep.subr.mxu0 0.0
  %3668 = vmatpush1.xpose.msra.mxu0 0.0
  %3669 = vmatprep.subr.mxu0 0.0
  %3670 = vmatpush1.xpose.msra.mxu0 0.0
  %3671 = vmatprep.subr.mxu0 0.0
  %3672 = vmatpush1.xpose.msra.mxu0 0.0
  %3673 = vmatprep.subr.mxu0 0.0
  %3674 = vmatpush1.xpose.msra.mxu0 0.0
  %3675 = vmatprep.mubr.f32.mxu0 0.0
  %3676 = vmatmul.mubr.f32.gmra.mrb[0].mxu0 %v3607
  %v3677 = vpop.f32.mrb[0].mxu0
  %v3678 = vadd.f32 0.0, %v3677
  %v3679 = vpop.f32.mrb[0].mxu0
  %3680 = vdwg.mxu0
  %v3681 = vmul.f32 %v3678, 0.35355338
  %v3682 = vadd.f32 %v3681, %v397
  %v3683 = vsel %vm317, %v3682, -inf
  %3684 = vmax.xlane.f32.xlu0 %v3683
  %v3685 = vpop.xlane.xlu0 %3684
  %v3686 = vsub.f32 %v3682, %v3685
  %v3687 = vmul.f32 %v3686, 1.442695
  %v3688 = vpow.pop %v3687
  %v3689 = vsel %vm317, %v3688, 0.0
  %3690 = vadd.xlane.f32.xlu0 %v3689
  %v3691 = vpop.xlane.xlu0 %3690
  %v3692 = vrcp.pop %v3691
  %v3693 = vmul.f32 %v3688, %v3692
  %3694 = vrot.lane.b32.xlu0 %v2635, 64
  %v3695 = vpop.permute.xlu0 %3694
  %v3698 = vsel %vm317, %v3693, 0
  %3700 = vmatprep.subr.mxu0 0.0
  %3701 = vmatpush1.msra.mxu0 %v3695
  %3702 = vmatprep.subr.mxu0 0.0
  %3703 = vmatpush1.msra.mxu0 0.0
  %3704 = vmatprep.subr.mxu0 0.0
  %3705 = vmatpush1.msra.mxu0 0.0
  %3706 = vmatprep.subr.mxu0 0.0
  %3707 = vmatpush1.msra.mxu0 0.0
  %3708 = vmatprep.subr.mxu0 0.0
  %3709 = vmatpush1.msra.mxu0 0.0
  %3710 = vmatprep.subr.mxu0 0.0
  %3711 = vmatpush1.msra.mxu0 0.0
  %3712 = vmatprep.subr.mxu0 0.0
  %3713 = vmatpush1.msra.mxu0 0.0
  %3714 = vmatprep.subr.mxu0 0.0
  %3715 = vmatpush1.msra.mxu0 0.0
  %3716 = vmatprep.subr.mxu0 0.0
  %3717 = vmatpush1.msra.mxu0 0.0
  %3718 = vmatprep.subr.mxu0 0.0
  %3719 = vmatpush1.msra.mxu0 0.0
  %3720 = vmatprep.subr.mxu0 0.0
  %3721 = vmatpush1.msra.mxu0 0.0
  %3722 = vmatprep.subr.mxu0 0.0
  %3723 = vmatpush1.msra.mxu0 0.0
  %3724 = vmatprep.subr.mxu0 0.0
  %3725 = vmatpush1.msra.mxu0 0.0
  %3726 = vmatprep.subr.mxu0 0.0
  %3727 = vmatpush1.msra.mxu0 0.0
  %3728 = vmatprep.subr.mxu0 0.0
  %3729 = vmatpush1.msra.mxu0 0.0
  %3730 = vmatprep.subr.mxu0 0.0
  %3731 = vmatpush1.msra.mxu0 0.0
  %3732 = vmatprep.subr.mxu0 0.0
  %3733 = vmatpush1.msra.mxu0 0.0
  %3734 = vmatprep.subr.mxu0 0.0
  %3735 = vmatpush1.msra.mxu0 0.0
  %3736 = vmatprep.subr.mxu0 0.0
  %3737 = vmatpush1.msra.mxu0 0.0
  %3738 = vmatprep.subr.mxu0 0.0
  %3739 = vmatpush1.msra.mxu0 0.0
  %3740 = vmatprep.subr.mxu0 0.0
  %3741 = vmatpush1.msra.mxu0 0.0
  %3742 = vmatprep.subr.mxu0 0.0
  %3743 = vmatpush1.msra.mxu0 0.0
  %3744 = vmatprep.subr.mxu0 0.0
  %3745 = vmatpush1.msra.mxu0 0.0
  %3746 = vmatprep.subr.mxu0 0.0
  %3747 = vmatpush1.msra.mxu0 0.0
  %3748 = vmatprep.subr.mxu0 0.0
  %3749 = vmatpush1.msra.mxu0 0.0
  %3750 = vmatprep.subr.mxu0 0.0
  %3751 = vmatpush1.msra.mxu0 0.0
  %3752 = vmatprep.subr.mxu0 0.0
  %3753 = vmatpush1.msra.mxu0 0.0
  %3754 = vmatprep.subr.mxu0 0.0
  %3755 = vmatpush1.msra.mxu0 0.0
  %3756 = vmatprep.subr.mxu0 0.0
  %3757 = vmatpush1.msra.mxu0 0.0
  %3758 = vmatprep.subr.mxu0 0.0
  %3759 = vmatpush1.msra.mxu0 0.0
  %3760 = vmatprep.subr.mxu0 0.0
  %3761 = vmatpush1.msra.mxu0 0.0
  %3762 = vmatprep.subr.mxu0 0.0
  %3763 = vmatpush1.msra.mxu0 0.0
  %3764 = vmatprep.mubr.f32.mxu0 0.0
  %3765 = vmatmul.mubr.f32.gmra.mrb[0].mxu0 %v3698
  %v3766 = vpop.f32.mrb[0].mxu0
  %v3767 = vadd.f32 0.0, %v3766
  %v3768 = vpop.f32.mrb[0].mxu0
  %3769 = vdwg.mxu0
  %3770 = vrot.lane.b32.xlu0 %v2635, 120
  %v3771 = vpop.permute.xlu0 %3770
  %3772 = vrot.lane.b32.xlu0 %v2635, 88
  %v3773 = vpop.permute.xlu0 %3772
  %v3774 = vsel %vm317, %v3771, 0
  %v3776 = vsel %vm317, %v3773, 0
  %3778 = vmatprep.subr.mxu0 0.0
  %3779 = vmatpush1.xpose.msra.mxu0 %v3776
  %3780 = vmatprep.subr.mxu0 0.0
  %3781 = vmatpush1.xpose.msra.mxu0 0.0
  %3782 = vmatprep.subr.mxu0 0.0
  %3783 = vmatpush1.xpose.msra.mxu0 0.0
  %3784 = vmatprep.subr.mxu0 0.0
  %3785 = vmatpush1.xpose.msra.mxu0 0.0
  %3786 = vmatprep.subr.mxu0 0.0
  %3787 = vmatpush1.xpose.msra.mxu0 0.0
  %3788 = vmatprep.subr.mxu0 0.0
  %3789 = vmatpush1.xpose.msra.mxu0 0.0
  %3790 = vmatprep.subr.mxu0 0.0
  %3791 = vmatpush1.xpose.msra.mxu0 0.0
  %3792 = vmatprep.subr.mxu0 0.0
  %3793 = vmatpush1.xpose.msra.mxu0 0.0
  %3794 = vmatprep.subr.mxu0 0.0
  %3795 = vmatpush1.xpose.msra.mxu0 0.0
  %3796 = vmatprep.subr.mxu0 0.0
  %3797 = vmatpush1.xpose.msra.mxu0 0.0
  %3798 = vmatprep.subr.mxu0 0.0
  %3799 = vmatpush1.xpose.msra.mxu0 0.0
  %3800 = vmatprep.subr.mxu0 0.0
  %3801 = vmatpush1.xpose.msra.mxu0 0.0
  %3802 = vmatprep.subr.mxu0 0.0
  %3803 = vmatpush1.xpose.msra.mxu0 0.0
  %3804 = vmatprep.subr.mxu0 0.0
  %3805 = vmatpush1.xpose.msra.mxu0 0.0
  %3806 = vmatprep.subr.mxu0 0.0
  %3807 = vmatpush1.xpose.msra.mxu0 0.0
  %3808 = vmatprep.subr.mxu0 0.0
  %3809 = vmatpush1.xpose.msra.mxu0 0.0
  %3810 = vmatprep.subr.mxu0 0.0
  %3811 = vmatpush1.xpose.msra.mxu0 0.0
  %3812 = vmatprep.subr.mxu0 0.0
  %3813 = vmatpush1.xpose.msra.mxu0 0.0
  %3814 = vmatprep.subr.mxu0 0.0
  %3815 = vmatpush1.xpose.msra.mxu0 0.0
  %3816 = vmatprep.subr.mxu0 0.0
  %3817 = vmatpush1.xpose.msra.mxu0 0.0
  %3818 = vmatprep.subr.mxu0 0.0
  %3819 = vmatpush1.xpose.msra.mxu0 0.0
  %3820 = vmatprep.subr.mxu0 0.0
  %3821 = vmatpush1.xpose.msra.mxu0 0.0
  %3822 = vmatprep.subr.mxu0 0.0
  %3823 = vmatpush1.xpose.msra.mxu0 0.0
  %3824 = vmatprep.subr.mxu0 0.0
  %3825 = vmatpush1.xpose.msra.mxu0 0.0
  %3826 = vmatprep.subr.mxu0 0.0
  %3827 = vmatpush1.xpose.msra.mxu0 0.0
  %3828 = vmatprep.subr.mxu0 0.0
  %3829 = vmatpush1.xpose.msra.mxu0 0.0
  %3830 = vmatprep.subr.mxu0 0.0
  %3831 = vmatpush1.xpose.msra.mxu0 0.0
  %3832 = vmatprep.subr.mxu0 0.0
  %3833 = vmatpush1.xpose.msra.mxu0 0.0
  %3834 = vmatprep.subr.mxu0 0.0
  %3835 = vmatpush1.xpose.msra.mxu0 0.0
  %3836 = vmatprep.subr.mxu0 0.0
  %3837 = vmatpush1.xpose.msra.mxu0 0.0
  %3838 = vmatprep.subr.mxu0 0.0
  %3839 = vmatpush1.xpose.msra.mxu0 0.0
  %3840 = vmatprep.subr.mxu0 0.0
  %3841 = vmatpush1.xpose.msra.mxu0 0.0
  %3842 = vmatprep.mubr.f32.mxu0 0.0
  %3843 = vmatmul.mubr.f32.gmra.mrb[0].mxu0 %v3774
  %v3844 = vpop.f32.mrb[0].mxu0
  %v3845 = vadd.f32 0.0, %v3844
  %v3846 = vpop.f32.mrb[0].mxu0
  %3847 = vdwg.mxu0
  %v3848 = vmul.f32 %v3845, 0.35355338
  %v3849 = vadd.f32 %v3848, %v397
  %v3850 = vsel %vm317, %v3849, -inf
  %3851 = vmax.xlane.f32.xlu0 %v3850
  %v3852 = vpop.xlane.xlu0 %3851
  %v3853 = vsub.f32 %v3849, %v3852
  %v3854 = vmul.f32 %v3853, 1.442695
  %v3855 = vpow.pop %v3854
  %v3856 = vsel %vm317, %v3855, 0.0
  %3857 = vadd.xlane.f32.xlu0 %v3856
  %v3858 = vpop.xlane.xlu0 %3857
  %v3859 = vrcp.pop %v3858
  %v3860 = vmul.f32 %v3855, %v3859
  %3861 = vrot.lane.b32.xlu0 %v2635, 56
  %v3862 = vpop.permute.xlu0 %3861
  %v3865 = vsel %vm317, %v3860, 0
  %3867 = vmatprep.subr.mxu0 0.0
  %3868 = vmatpush1.msra.mxu0 %v3862
  %3869 = vmatprep.subr.mxu0 0.0
  %3870 = vmatpush1.msra.mxu0 0.0
  %3871 = vmatprep.subr.mxu0 0.0
  %3872 = vmatpush1.msra.mxu0 0.0
  %3873 = vmatprep.subr.mxu0 0.0
  %3874 = vmatpush1.msra.mxu0 0.0
  %3875 = vmatprep.subr.mxu0 0.0
  %3876 = vmatpush1.msra.mxu0 0.0
  %3877 = vmatprep.subr.mxu0 0.0
  %3878 = vmatpush1.msra.mxu0 0.0
  %3879 = vmatprep.subr.mxu0 0.0
  %3880 = vmatpush1.msra.mxu0 0.0
  %3881 = vmatprep.subr.mxu0 0.0
  %3882 = vmatpush1.msra.mxu0 0.0
  %3883 = vmatprep.subr.mxu0 0.0
  %3884 = vmatpush1.msra.mxu0 0.0
  %3885 = vmatprep.subr.mxu0 0.0
  %3886 = vmatpush1.msra.mxu0 0.0
  %3887 = vmatprep.subr.mxu0 0.0
  %3888 = vmatpush1.msra.mxu0 0.0
  %3889 = vmatprep.subr.mxu0 0.0
  %3890 = vmatpush1.msra.mxu0 0.0
  %3891 = vmatprep.subr.mxu0 0.0
  %3892 = vmatpush1.msra.mxu0 0.0
  %3893 = vmatprep.subr.mxu0 0.0
  %3894 = vmatpush1.msra.mxu0 0.0
  %3895 = vmatprep.subr.mxu0 0.0
  %3896 = vmatpush1.msra.mxu0 0.0
  %3897 = vmatprep.subr.mxu0 0.0
  %3898 = vmatpush1.msra.mxu0 0.0
  %3899 = vmatprep.subr.mxu0 0.0
  %3900 = vmatpush1.msra.mxu0 0.0
  %3901 = vmatprep.subr.mxu0 0.0
  %3902 = vmatpush1.msra.mxu0 0.0
  %3903 = vmatprep.subr.mxu0 0.0
  %3904 = vmatpush1.msra.mxu0 0.0
  %3905 = vmatprep.subr.mxu0 0.0
  %3906 = vmatpush1.msra.mxu0 0.0
  %3907 = vmatprep.subr.mxu0 0.0
  %3908 = vmatpush1.msra.mxu0 0.0
  %3909 = vmatprep.subr.mxu0 0.0
  %3910 = vmatpush1.msra.mxu0 0.0
  %3911 = vmatprep.subr.mxu0 0.0
  %3912 = vmatpush1.msra.mxu0 0.0
  %3913 = vmatprep.subr.mxu0 0.0
  %3914 = vmatpush1.msra.mxu0 0.0
  %3915 = vmatprep.subr.mxu0 0.0
  %3916 = vmatpush1.msra.mxu0 0.0
  %3917 = vmatprep.subr.mxu0 0.0
  %3918 = vmatpush1.msra.mxu0 0.0
  %3919 = vmatprep.subr.mxu0 0.0
  %3920 = vmatpush1.msra.mxu0 0.0
  %3921 = vmatprep.subr.mxu0 0.0
  %3922 = vmatpush1.msra.mxu0 0.0
  %3923 = vmatprep.subr.mxu0 0.0
  %3924 = vmatpush1.msra.mxu0 0.0
  %3925 = vmatprep.subr.mxu0 0.0
  %3926 = vmatpush1.msra.mxu0 0.0
  %3927 = vmatprep.subr.mxu0 0.0
  %3928 = vmatpush1.msra.mxu0 0.0
  %3929 = vmatprep.subr.mxu0 0.0
  %3930 = vmatpush1.msra.mxu0 0.0
  %3931 = vmatprep.mubr.f32.mxu0 0.0
  %3932 = vmatmul.mubr.f32.gmra.mrb[0].mxu0 %v3865
  %v3933 = vpop.f32.mrb[0].mxu0
  %v3934 = vadd.f32 0.0, %v3933
  %v3935 = vpop.f32.mrb[0].mxu0
  %3936 = vdwg.mxu0
  %v3938 = vsel %vm317, %v3934, 0
  %3940 = vmatprep.subr.mxu0 0.0
  %3941 = vmatpush1.msra.mxu0 %v2640
  %3942 = vmatprep.subr.mxu0 0.0
  %3943 = vmatpush1.msra.mxu0 0.0
  %3944 = vmatprep.subr.mxu0 0.0
  %3945 = vmatpush1.msra.mxu0 0.0
  %3946 = vmatprep.subr.mxu0 0.0
  %3947 = vmatpush1.msra.mxu0 0.0
  %3948 = vmatprep.subr.mxu0 0.0
  %3949 = vmatpush1.msra.mxu0 0.0
  %3950 = vmatprep.subr.mxu0 0.0
  %3951 = vmatpush1.msra.mxu0 0.0
  %3952 = vmatprep.subr.mxu0 0.0
  %3953 = vmatpush1.msra.mxu0 0.0
  %3954 = vmatprep.subr.mxu0 0.0
  %3955 = vmatpush1.msra.mxu0 0.0
  %3956 = vmatprep.subr.mxu0 0.0
  %3957 = vmatpush1.msra.mxu0 0.0
  %3958 = vmatprep.subr.mxu0 0.0
  %3959 = vmatpush1.msra.mxu0 0.0
  %3960 = vmatprep.subr.mxu0 0.0
  %3961 = vmatpush1.msra.mxu0 0.0
  %3962 = vmatprep.subr.mxu0 0.0
  %3963 = vmatpush1.msra.mxu0 0.0
  %3964 = vmatprep.subr.mxu0 0.0
  %3965 = vmatpush1.msra.mxu0 0.0
  %3966 = vmatprep.subr.mxu0 0.0
  %3967 = vmatpush1.msra.mxu0 0.0
  %3968 = vmatprep.subr.mxu0 0.0
  %3969 = vmatpush1.msra.mxu0 0.0
  %3970 = vmatprep.subr.mxu0 0.0
  %3971 = vmatpush1.msra.mxu0 0.0
  %3972 = vmatprep.subr.mxu0 0.0
  %3973 = vmatpush1.msra.mxu0 0.0
  %3974 = vmatprep.subr.mxu0 0.0
  %3975 = vmatpush1.msra.mxu0 0.0
  %3976 = vmatprep.subr.mxu0 0.0
  %3977 = vmatpush1.msra.mxu0 0.0
  %3978 = vmatprep.subr.mxu0 0.0
  %3979 = vmatpush1.msra.mxu0 0.0
  %3980 = vmatprep.subr.mxu0 0.0
  %3981 = vmatpush1.msra.mxu0 0.0
  %3982 = vmatprep.subr.mxu0 0.0
  %3983 = vmatpush1.msra.mxu0 0.0
  %3984 = vmatprep.subr.mxu0 0.0
  %3985 = vmatpush1.msra.mxu0 0.0
  %3986 = vmatprep.subr.mxu0 0.0
  %3987 = vmatpush1.msra.mxu0 0.0
  %3988 = vmatprep.subr.mxu0 0.0
  %3989 = vmatpush1.msra.mxu0 0.0
  %3990 = vmatprep.subr.mxu0 0.0
  %3991 = vmatpush1.msra.mxu0 0.0
  %3992 = vmatprep.subr.mxu0 0.0
  %3993 = vmatpush1.msra.mxu0 0.0
  %3994 = vmatprep.subr.mxu0 0.0
  %3995 = vmatpush1.msra.mxu0 0.0
  %3996 = vmatprep.subr.mxu0 0.0
  %3997 = vmatpush1.msra.mxu0 0.0
  %3998 = vmatprep.subr.mxu0 0.0
  %3999 = vmatpush1.msra.mxu0 0.0
  %4000 = vmatprep.subr.mxu0 0.0
  %4001 = vmatpush1.msra.mxu0 0.0
  %4002 = vmatprep.subr.mxu0 0.0
  %4003 = vmatpush1.msra.mxu0 0.0
  %4004 = vmatprep.mubr.f32.mxu0 0.0
  %4005 = vmatmul.mubr.f32.gmra.mrb[0].mxu0 %v3938
  %v4006 = vpop.f32.mrb[0].mxu0
  %v4007 = vadd.f32 0.0, %v4006
  %v4008 = vpop.f32.mrb[0].mxu0
  %4009 = vdwg.mxu0
  %v4011 = vsel %vm317, %v3767, 0
  %4013 = vmatprep.subr.mxu0 0.0
  %4014 = vmatpush1.msra.mxu0 %v2639
  %4015 = vmatprep.subr.mxu0 0.0
  %4016 = vmatpush1.msra.mxu0 0.0
  %4017 = vmatprep.subr.mxu0 0.0
  %4018 = vmatpush1.msra.mxu0 0.0
  %4019 = vmatprep.subr.mxu0 0.0
  %4020 = vmatpush1.msra.mxu0 0.0
  %4021 = vmatprep.subr.mxu0 0.0
  %4022 = vmatpush1.msra.mxu0 0.0
  %4023 = vmatprep.subr.mxu0 0.0
  %4024 = vmatpush1.msra.mxu0 0.0
  %4025 = vmatprep.subr.mxu0 0.0
  %4026 = vmatpush1.msra.mxu0 0.0
  %4027 = vmatprep.subr.mxu0 0.0
  %4028 = vmatpush1.msra.mxu0 0.0
  %4029 = vmatprep.subr.mxu0 0.0
  %4030 = vmatpush1.msra.mxu0 0.0
  %4031 = vmatprep.subr.mxu0 0.0
  %4032 = vmatpush1.msra.mxu0 0.0
  %4033 = vmatprep.subr.mxu0 0.0
  %4034 = vmatpush1.msra.mxu0 0.0
  %4035 = vmatprep.subr.mxu0 0.0
  %4036 = vmatpush1.msra.mxu0 0.0
  %4037 = vmatprep.subr.mxu0 0.0
  %4038 = vmatpush1.msra.mxu0 0.0
  %4039 = vmatprep.subr.mxu0 0.0
  %4040 = vmatpush1.msra.mxu0 0.0
  %4041 = vmatprep.subr.mxu0 0.0
  %4042 = vmatpush1.msra.mxu0 0.0
  %4043 = vmatprep.subr.mxu0 0.0
  %4044 = vmatpush1.msra.mxu0 0.0
  %4045 = vmatprep.subr.mxu0 0.0
  %4046 = vmatpush1.msra.mxu0 0.0
  %4047 = vmatprep.subr.mxu0 0.0
  %4048 = vmatpush1.msra.mxu0 0.0
  %4049 = vmatprep.subr.mxu0 0.0
  %4050 = vmatpush1.msra.mxu0 0.0
  %4051 = vmatprep.subr.mxu0 0.0
  %4052 = vmatpush1.msra.mxu0 0.0
  %4053 = vmatprep.subr.mxu0 0.0
  %4054 = vmatpush1.msra.mxu0 0.0
  %4055 = vmatprep.subr.mxu0 0.0
  %4056 = vmatpush1.msra.mxu0 0.0
  %4057 = vmatprep.subr.mxu0 0.0
  %4058 = vmatpush1.msra.mxu0 0.0
  %4059 = vmatprep.subr.mxu0 0.0
  %4060 = vmatpush1.msra.mxu0 0.0
  %4061 = vmatprep.subr.mxu0 0.0
  %4062 = vmatpush1.msra.mxu0 0.0
  %4063 = vmatprep.subr.mxu0 0.0
  %4064 = vmatpush1.msra.mxu0 0.0
  %4065 = vmatprep.subr.mxu0 0.0
  %4066 = vmatpush1.msra.mxu0 0.0
  %4067 = vmatprep.subr.mxu0 0.0
  %4068 = vmatpush1.msra.mxu0 0.0
  %4069 = vmatprep.subr.mxu0 0.0
  %4070 = vmatpush1.msra.mxu0 0.0
  %4071 = vmatprep.subr.mxu0 0.0
  %4072 = vmatpush1.msra.mxu0 0.0
  %4073 = vmatprep.subr.mxu0 0.0
  %4074 = vmatpush1.msra.mxu0 0.0
  %4075 = vmatprep.subr.mxu0 0.0
  %4076 = vmatpush1.msra.mxu0 0.0
  %4077 = vmatprep.mubr.f32.mxu0 0.0
  %4078 = vmatmul.mubr.f32.gmra.mrb[0].mxu0 %v4011
  %v4079 = vpop.f32.mrb[0].mxu0
  %v4080 = vadd.f32 %v4007, %v4079
  %v4081 = vpop.f32.mrb[0].mxu0
  %4082 = vdwg.mxu0
  %4083 = vrot.lane.b32.xlu0 %v2635, 112
  %v4084 = vpop.permute.xlu0 %4083
  %4085 = vrot.lane.b32.xlu0 %v2635, 80
  %v4086 = vpop.permute.xlu0 %4085
  %v4087 = vsel %vm317, %v4084, 0
  %v4089 = vsel %vm317, %v4086, 0
  %4091 = vmatprep.subr.mxu0 0.0
  %4092 = vmatpush1.xpose.msra.mxu0 %v4089
  %4093 = vmatprep.subr.mxu0 0.0
  %4094 = vmatpush1.xpose.msra.mxu0 0.0
  %4095 = vmatprep.subr.mxu0 0.0
  %4096 = vmatpush1.xpose.msra.mxu0 0.0
  %4097 = vmatprep.subr.mxu0 0.0
  %4098 = vmatpush1.xpose.msra.mxu0 0.0
  %4099 = vmatprep.subr.mxu0 0.0
  %4100 = vmatpush1.xpose.msra.mxu0 0.0
  %4101 = vmatprep.subr.mxu0 0.0
  %4102 = vmatpush1.xpose.msra.mxu0 0.0
  %4103 = vmatprep.subr.mxu0 0.0
  %4104 = vmatpush1.xpose.msra.mxu0 0.0
  %4105 = vmatprep.subr.mxu0 0.0
  %4106 = vmatpush1.xpose.msra.mxu0 0.0
  %4107 = vmatprep.subr.mxu0 0.0
  %4108 = vmatpush1.xpose.msra.mxu0 0.0
  %4109 = vmatprep.subr.mxu0 0.0
  %4110 = vmatpush1.xpose.msra.mxu0 0.0
  %4111 = vmatprep.subr.mxu0 0.0
  %4112 = vmatpush1.xpose.msra.mxu0 0.0
  %4113 = vmatprep.subr.mxu0 0.0
  %4114 = vmatpush1.xpose.msra.mxu0 0.0
  %4115 = vmatprep.subr.mxu0 0.0
  %4116 = vmatpush1.xpose.msra.mxu0 0.0
  %4117 = vmatprep.subr.mxu0 0.0
  %4118 = vmatpush1.xpose.msra.mxu0 0.0
  %4119 = vmatprep.subr.mxu0 0.0
  %4120 = vmatpush1.xpose.msra.mxu0 0.0
  %4121 = vmatprep.subr.mxu0 0.0
  %4122 = vmatpush1.xpose.msra.mxu0 0.0
  %4123 = vmatprep.subr.mxu0 0.0
  %4124 = vmatpush1.xpose.msra.mxu0 0.0
  %4125 = vmatprep.subr.mxu0 0.0
  %4126 = vmatpush1.xpose.msra.mxu0 0.0
  %4127 = vmatprep.subr.mxu0 0.0
  %4128 = vmatpush1.xpose.msra.mxu0 0.0
  %4129 = vmatprep.subr.mxu0 0.0
  %4130 = vmatpush1.xpose.msra.mxu0 0.0
  %4131 = vmatprep.subr.mxu0 0.0
  %4132 = vmatpush1.xpose.msra.mxu0 0.0
  %4133 = vmatprep.subr.mxu0 0.0
  %4134 = vmatpush1.xpose.msra.mxu0 0.0
  %4135 = vmatprep.subr.mxu0 0.0
  %4136 = vmatpush1.xpose.msra.mxu0 0.0
  %4137 = vmatprep.subr.mxu0 0.0
  %4138 = vmatpush1.xpose.msra.mxu0 0.0
  %4139 = vmatprep.subr.mxu0 0.0
  %4140 = vmatpush1.xpose.msra.mxu0 0.0
  %4141 = vmatprep.subr.mxu0 0.0
  %4142 = vmatpush1.xpose.msra.mxu0 0.0
  %4143 = vmatprep.subr.mxu0 0.0
  %4144 = vmatpush1.xpose.msra.mxu0 0.0
  %4145 = vmatprep.subr.mxu0 0.0
  %4146 = vmatpush1.xpose.msra.mxu0 0.0
  %4147 = vmatprep.subr.mxu0 0.0
  %4148 = vmatpush1.xpose.msra.mxu0 0.0
  %4149 = vmatprep.subr.mxu0 0.0
  %4150 = vmatpush1.xpose.msra.mxu0 0.0
  %4151 = vmatprep.subr.mxu0 0.0
  %4152 = vmatpush1.xpose.msra.mxu0 0.0
  %4153 = vmatprep.subr.mxu0 0.0
  %4154 = vmatpush1.xpose.msra.mxu0 0.0
  %4155 = vmatprep.mubr.f32.mxu0 0.0
  %4156 = vmatmul.mubr.f32.gmra.mrb[0].mxu0 %v4087
  %v4157 = vpop.f32.mrb[0].mxu0
  %v4158 = vadd.f32 0.0, %v4157
  %v4159 = vpop.f32.mrb[0].mxu0
  %4160 = vdwg.mxu0
  %v4161 = vmul.f32 %v4158, 0.35355338
  %v4162 = vadd.f32 %v4161, %v397
  %v4163 = vsel %vm317, %v4162, -inf
  %4164 = vmax.xlane.f32.xlu0 %v4163
  %v4165 = vpop.xlane.xlu0 %4164
  %v4166 = vsub.f32 %v4162, %v4165
  %v4167 = vmul.f32 %v4166, 1.442695
  %v4168 = vpow.pop %v4167
  %v4169 = vsel %vm317, %v4168, 0.0
  %4170 = vadd.xlane.f32.xlu0 %v4169
  %v4171 = vpop.xlane.xlu0 %4170
  %v4172 = vrcp.pop %v4171
  %v4173 = vmul.f32 %v4168, %v4172
  %4174 = vrot.lane.b32.xlu0 %v2635, 48
  %v4175 = vpop.permute.xlu0 %4174
  %v4178 = vsel %vm317, %v4173, 0
  %4180 = vmatprep.subr.mxu0 0.0
  %4181 = vmatpush1.msra.mxu0 %v4175
  %4182 = vmatprep.subr.mxu0 0.0
  %4183 = vmatpush1.msra.mxu0 0.0
  %4184 = vmatprep.subr.mxu0 0.0
  %4185 = vmatpush1.msra.mxu0 0.0
  %4186 = vmatprep.subr.mxu0 0.0
  %4187 = vmatpush1.msra.mxu0 0.0
  %4188 = vmatprep.subr.mxu0 0.0
  %4189 = vmatpush1.msra.mxu0 0.0
  %4190 = vmatprep.subr.mxu0 0.0
  %4191 = vmatpush1.msra.mxu0 0.0
  %4192 = vmatprep.subr.mxu0 0.0
  %4193 = vmatpush1.msra.mxu0 0.0
  %4194 = vmatprep.subr.mxu0 0.0
  %4195 = vmatpush1.msra.mxu0 0.0
  %4196 = vmatprep.subr.mxu0 0.0
  %4197 = vmatpush1.msra.mxu0 0.0
  %4198 = vmatprep.subr.mxu0 0.0
  %4199 = vmatpush1.msra.mxu0 0.0
  %4200 = vmatprep.subr.mxu0 0.0
  %4201 = vmatpush1.msra.mxu0 0.0
  %4202 = vmatprep.subr.mxu0 0.0
  %4203 = vmatpush1.msra.mxu0 0.0
  %4204 = vmatprep.subr.mxu0 0.0
  %4205 = vmatpush1.msra.mxu0 0.0
  %4206 = vmatprep.subr.mxu0 0.0
  %4207 = vmatpush1.msra.mxu0 0.0
  %4208 = vmatprep.subr.mxu0 0.0
  %4209 = vmatpush1.msra.mxu0 0.0
  %4210 = vmatprep.subr.mxu0 0.0
  %4211 = vmatpush1.msra.mxu0 0.0
  %4212 = vmatprep.subr.mxu0 0.0
  %4213 = vmatpush1.msra.mxu0 0.0
  %4214 = vmatprep.subr.mxu0 0.0
  %4215 = vmatpush1.msra.mxu0 0.0
  %4216 = vmatprep.subr.mxu0 0.0
  %4217 = vmatpush1.msra.mxu0 0.0
  %4218 = vmatprep.subr.mxu0 0.0
  %4219 = vmatpush1.msra.mxu0 0.0
  %4220 = vmatprep.subr.mxu0 0.0
  %4221 = vmatpush1.msra.mxu0 0.0
  %4222 = vmatprep.subr.mxu0 0.0
  %4223 = vmatpush1.msra.mxu0 0.0
  %4224 = vmatprep.subr.mxu0 0.0
  %4225 = vmatpush1.msra.mxu0 0.0
  %4226 = vmatprep.subr.mxu0 0.0
  %4227 = vmatpush1.msra.mxu0 0.0
  %4228 = vmatprep.subr.mxu0 0.0
  %4229 = vmatpush1.msra.mxu0 0.0
  %4230 = vmatprep.subr.mxu0 0.0
  %4231 = vmatpush1.msra.mxu0 0.0
  %4232 = vmatprep.subr.mxu0 0.0
  %4233 = vmatpush1.msra.mxu0 0.0
  %4234 = vmatprep.subr.mxu0 0.0
  %4235 = vmatpush1.msra.mxu0 0.0
  %4236 = vmatprep.subr.mxu0 0.0
  %4237 = vmatpush1.msra.mxu0 0.0
  %4238 = vmatprep.subr.mxu0 0.0
  %4239 = vmatpush1.msra.mxu0 0.0
  %4240 = vmatprep.subr.mxu0 0.0
  %4241 = vmatpush1.msra.mxu0 0.0
  %4242 = vmatprep.subr.mxu0 0.0
  %4243 = vmatpush1.msra.mxu0 0.0
  %4244 = vmatprep.mubr.f32.mxu0 0.0
  %4245 = vmatmul.mubr.f32.gmra.mrb[0].mxu0 %v4178
  %v4246 = vpop.f32.mrb[0].mxu0
  %v4247 = vadd.f32 0.0, %v4246
  %v4248 = vpop.f32.mrb[0].mxu0
  %4249 = vdwg.mxu0
  %v4251 = vsel %vm317, %v4247, 0
  %4253 = vmatprep.subr.mxu0 0.0
  %4254 = vmatpush1.msra.mxu0 %v2641
  %4255 = vmatprep.subr.mxu0 0.0
  %4256 = vmatpush1.msra.mxu0 0.0
  %4257 = vmatprep.subr.mxu0 0.0
  %4258 = vmatpush1.msra.mxu0 0.0
  %4259 = vmatprep.subr.mxu0 0.0
  %4260 = vmatpush1.msra.mxu0 0.0
  %4261 = vmatprep.subr.mxu0 0.0
  %4262 = vmatpush1.msra.mxu0 0.0
  %4263 = vmatprep.subr.mxu0 0.0
  %4264 = vmatpush1.msra.mxu0 0.0
  %4265 = vmatprep.subr.mxu0 0.0
  %4266 = vmatpush1.msra.mxu0 0.0
  %4267 = vmatprep.subr.mxu0 0.0
  %4268 = vmatpush1.msra.mxu0 0.0
  %4269 = vmatprep.subr.mxu0 0.0
  %4270 = vmatpush1.msra.mxu0 0.0
  %4271 = vmatprep.subr.mxu0 0.0
  %4272 = vmatpush1.msra.mxu0 0.0
  %4273 = vmatprep.subr.mxu0 0.0
  %4274 = vmatpush1.msra.mxu0 0.0
  %4275 = vmatprep.subr.mxu0 0.0
  %4276 = vmatpush1.msra.mxu0 0.0
  %4277 = vmatprep.subr.mxu0 0.0
  %4278 = vmatpush1.msra.mxu0 0.0
  %4279 = vmatprep.subr.mxu0 0.0
  %4280 = vmatpush1.msra.mxu0 0.0
  %4281 = vmatprep.subr.mxu0 0.0
  %4282 = vmatpush1.msra.mxu0 0.0
  %4283 = vmatprep.subr.mxu0 0.0
  %4284 = vmatpush1.msra.mxu0 0.0
  %4285 = vmatprep.subr.mxu0 0.0
  %4286 = vmatpush1.msra.mxu0 0.0
  %4287 = vmatprep.subr.mxu0 0.0
  %4288 = vmatpush1.msra.mxu0 0.0
  %4289 = vmatprep.subr.mxu0 0.0
  %4290 = vmatpush1.msra.mxu0 0.0
  %4291 = vmatprep.subr.mxu0 0.0
  %4292 = vmatpush1.msra.mxu0 0.0
  %4293 = vmatprep.subr.mxu0 0.0
  %4294 = vmatpush1.msra.mxu0 0.0
  %4295 = vmatprep.subr.mxu0 0.0
  %4296 = vmatpush1.msra.mxu0 0.0
  %4297 = vmatprep.subr.mxu0 0.0
  %4298 = vmatpush1.msra.mxu0 0.0
  %4299 = vmatprep.subr.mxu0 0.0
  %4300 = vmatpush1.msra.mxu0 0.0
  %4301 = vmatprep.subr.mxu0 0.0
  %4302 = vmatpush1.msra.mxu0 0.0
  %4303 = vmatprep.subr.mxu0 0.0
  %4304 = vmatpush1.msra.mxu0 0.0
  %4305 = vmatprep.subr.mxu0 0.0
  %4306 = vmatpush1.msra.mxu0 0.0
  %4307 = vmatprep.subr.mxu0 0.0
  %4308 = vmatpush1.msra.mxu0 0.0
  %4309 = vmatprep.subr.mxu0 0.0
  %4310 = vmatpush1.msra.mxu0 0.0
  %4311 = vmatprep.subr.mxu0 0.0
  %4312 = vmatpush1.msra.mxu0 0.0
  %4313 = vmatprep.subr.mxu0 0.0
  %4314 = vmatpush1.msra.mxu0 0.0
  %4315 = vmatprep.subr.mxu0 0.0
  %4316 = vmatpush1.msra.mxu0 0.0
  %4317 = vmatprep.mubr.f32.mxu0 0.0
  %4318 = vmatmul.mubr.f32.gmra.mrb[0].mxu0 %v4251
  %v4319 = vpop.f32.mrb[0].mxu0
  %v4320 = vadd.f32 0.0, %v4319
  %v4321 = vpop.f32.mrb[0].mxu0
  %4322 = vdwg.mxu0
  %v4323 = vadd.f32 %v4080, %v4320
  %4324 = vrot.lane.b32.xlu0 %v2635, 104
  %v4325 = vpop.permute.xlu0 %4324
  %4326 = vrot.lane.b32.xlu0 %v2635, 72
  %v4327 = vpop.permute.xlu0 %4326
  %v4328 = vsel %vm317, %v4325, 0
  %v4330 = vsel %vm317, %v4327, 0
  %4332 = vmatprep.subr.mxu0 0.0
  %4333 = vmatpush1.xpose.msra.mxu0 %v4330
  %4334 = vmatprep.subr.mxu0 0.0
  %4335 = vmatpush1.xpose.msra.mxu0 0.0
  %4336 = vmatprep.subr.mxu0 0.0
  %4337 = vmatpush1.xpose.msra.mxu0 0.0
  %4338 = vmatprep.subr.mxu0 0.0
  %4339 = vmatpush1.xpose.msra.mxu0 0.0
  %4340 = vmatprep.subr.mxu0 0.0
  %4341 = vmatpush1.xpose.msra.mxu0 0.0
  %4342 = vmatprep.subr.mxu0 0.0
  %4343 = vmatpush1.xpose.msra.mxu0 0.0
  %4344 = vmatprep.subr.mxu0 0.0
  %4345 = vmatpush1.xpose.msra.mxu0 0.0
  %4346 = vmatprep.subr.mxu0 0.0
  %4347 = vmatpush1.xpose.msra.mxu0 0.0
  %4348 = vmatprep.subr.mxu0 0.0
  %4349 = vmatpush1.xpose.msra.mxu0 0.0
  %4350 = vmatprep.subr.mxu0 0.0
  %4351 = vmatpush1.xpose.msra.mxu0 0.0
  %4352 = vmatprep.subr.mxu0 0.0
  %4353 = vmatpush1.xpose.msra.mxu0 0.0
  %4354 = vmatprep.subr.mxu0 0.0
  %4355 = vmatpush1.xpose.msra.mxu0 0.0
  %4356 = vmatprep.subr.mxu0 0.0
  %4357 = vmatpush1.xpose.msra.mxu0 0.0
  %4358 = vmatprep.subr.mxu0 0.0
  %4359 = vmatpush1.xpose.msra.mxu0 0.0
  %4360 = vmatprep.subr.mxu0 0.0
  %4361 = vmatpush1.xpose.msra.mxu0 0.0
  %4362 = vmatprep.subr.mxu0 0.0
  %4363 = vmatpush1.xpose.msra.mxu0 0.0
  %4364 = vmatprep.subr.mxu0 0.0
  %4365 = vmatpush1.xpose.msra.mxu0 0.0
  %4366 = vmatprep.subr.mxu0 0.0
  %4367 = vmatpush1.xpose.msra.mxu0 0.0
  %4368 = vmatprep.subr.mxu0 0.0
  %4369 = vmatpush1.xpose.msra.mxu0 0.0
  %4370 = vmatprep.subr.mxu0 0.0
  %4371 = vmatpush1.xpose.msra.mxu0 0.0
  %4372 = vmatprep.subr.mxu0 0.0
  %4373 = vmatpush1.xpose.msra.mxu0 0.0
  %4374 = vmatprep.subr.mxu0 0.0
  %4375 = vmatpush1.xpose.msra.mxu0 0.0
  %4376 = vmatprep.subr.mxu0 0.0
  %4377 = vmatpush1.xpose.msra.mxu0 0.0
  %4378 = vmatprep.subr.mxu0 0.0
  %4379 = vmatpush1.xpose.msra.mxu0 0.0
  %4380 = vmatprep.subr.mxu0 0.0
  %4381 = vmatpush1.xpose.msra.mxu0 0.0
  %4382 = vmatprep.subr.mxu0 0.0
  %4383 = vmatpush1.xpose.msra.mxu0 0.0
  %4384 = vmatprep.subr.mxu0 0.0
  %4385 = vmatpush1.xpose.msra.mxu0 0.0
  %4386 = vmatprep.subr.mxu0 0.0
  %4387 = vmatpush1.xpose.msra.mxu0 0.0
  %4388 = vmatprep.subr.mxu0 0.0
  %4389 = vmatpush1.xpose.msra.mxu0 0.0
  %4390 = vmatprep.subr.mxu0 0.0
  %4391 = vmatpush1.xpose.msra.mxu0 0.0
  %4392 = vmatprep.subr.mxu0 0.0
  %4393 = vmatpush1.xpose.msra.mxu0 0.0
  %4394 = vmatprep.subr.mxu0 0.0
  %4395 = vmatpush1.xpose.msra.mxu0 0.0
  %4396 = vmatprep.mubr.f32.mxu0 0.0
  %4397 = vmatmul.mubr.f32.gmra.mrb[0].mxu0 %v4328
  %v4398 = vpop.f32.mrb[0].mxu0
  %v4399 = vadd.f32 0.0, %v4398
  %v4400 = vpop.f32.mrb[0].mxu0
  %4401 = vdwg.mxu0
  %v4402 = vmul.f32 %v4399, 0.35355338
  %v4403 = vadd.f32 %v4402, %v397
  %v4404 = vsel %vm317, %v4403, -inf
  %4405 = vmax.xlane.f32.xlu0 %v4404
  %v4406 = vpop.xlane.xlu0 %4405
  %v4407 = vsub.f32 %v4403, %v4406
  %v4408 = vmul.f32 %v4407, 1.442695
  %v4409 = vpow.pop %v4408
  %v4410 = vsel %vm317, %v4409, 0.0
  %4411 = vadd.xlane.f32.xlu0 %v4410
  %v4412 = vpop.xlane.xlu0 %4411
  %v4413 = vrcp.pop %v4412
  %v4414 = vmul.f32 %v4409, %v4413
  %4415 = vrot.lane.b32.xlu0 %v2635, 40
  %v4416 = vpop.permute.xlu0 %4415
  %v4419 = vsel %vm317, %v4414, 0
  %4421 = vmatprep.subr.mxu0 0.0
  %4422 = vmatpush1.msra.mxu0 %v4416
  %4423 = vmatprep.subr.mxu0 0.0
  %4424 = vmatpush1.msra.mxu0 0.0
  %4425 = vmatprep.subr.mxu0 0.0
  %4426 = vmatpush1.msra.mxu0 0.0
  %4427 = vmatprep.subr.mxu0 0.0
  %4428 = vmatpush1.msra.mxu0 0.0
  %4429 = vmatprep.subr.mxu0 0.0
  %4430 = vmatpush1.msra.mxu0 0.0
  %4431 = vmatprep.subr.mxu0 0.0
  %4432 = vmatpush1.msra.mxu0 0.0
  %4433 = vmatprep.subr.mxu0 0.0
  %4434 = vmatpush1.msra.mxu0 0.0
  %4435 = vmatprep.subr.mxu0 0.0
  %4436 = vmatpush1.msra.mxu0 0.0
  %4437 = vmatprep.subr.mxu0 0.0
  %4438 = vmatpush1.msra.mxu0 0.0
  %4439 = vmatprep.subr.mxu0 0.0
  %4440 = vmatpush1.msra.mxu0 0.0
  %4441 = vmatprep.subr.mxu0 0.0
  %4442 = vmatpush1.msra.mxu0 0.0
  %4443 = vmatprep.subr.mxu0 0.0
  %4444 = vmatpush1.msra.mxu0 0.0
  %4445 = vmatprep.subr.mxu0 0.0
  %4446 = vmatpush1.msra.mxu0 0.0
  %4447 = vmatprep.subr.mxu0 0.0
  %4448 = vmatpush1.msra.mxu0 0.0
  %4449 = vmatprep.subr.mxu0 0.0
  %4450 = vmatpush1.msra.mxu0 0.0
  %4451 = vmatprep.subr.mxu0 0.0
  %4452 = vmatpush1.msra.mxu0 0.0
  %4453 = vmatprep.subr.mxu0 0.0
  %4454 = vmatpush1.msra.mxu0 0.0
  %4455 = vmatprep.subr.mxu0 0.0
  %4456 = vmatpush1.msra.mxu0 0.0
  %4457 = vmatprep.subr.mxu0 0.0
  %4458 = vmatpush1.msra.mxu0 0.0
  %4459 = vmatprep.subr.mxu0 0.0
  %4460 = vmatpush1.msra.mxu0 0.0
  %4461 = vmatprep.subr.mxu0 0.0
  %4462 = vmatpush1.msra.mxu0 0.0
  %4463 = vmatprep.subr.mxu0 0.0
  %4464 = vmatpush1.msra.mxu0 0.0
  %4465 = vmatprep.subr.mxu0 0.0
  %4466 = vmatpush1.msra.mxu0 0.0
  %4467 = vmatprep.subr.mxu0 0.0
  %4468 = vmatpush1.msra.mxu0 0.0
  %4469 = vmatprep.subr.mxu0 0.0
  %4470 = vmatpush1.msra.mxu0 0.0
  %4471 = vmatprep.subr.mxu0 0.0
  %4472 = vmatpush1.msra.mxu0 0.0
  %4473 = vmatprep.subr.mxu0 0.0
  %4474 = vmatpush1.msra.mxu0 0.0
  %4475 = vmatprep.subr.mxu0 0.0
  %4476 = vmatpush1.msra.mxu0 0.0
  %4477 = vmatprep.subr.mxu0 0.0
  %4478 = vmatpush1.msra.mxu0 0.0
  %4479 = vmatprep.subr.mxu0 0.0
  %4480 = vmatpush1.msra.mxu0 0.0
  %4481 = vmatprep.subr.mxu0 0.0
  %4482 = vmatpush1.msra.mxu0 0.0
  %4483 = vmatprep.subr.mxu0 0.0
  %4484 = vmatpush1.msra.mxu0 0.0
  %4485 = vmatprep.mubr.f32.mxu0 0.0
  %4486 = vmatmul.mubr.f32.gmra.mrb[0].mxu0 %v4419
  %v4487 = vpop.f32.mrb[0].mxu0
  %v4488 = vadd.f32 0.0, %v4487
  %v4489 = vpop.f32.mrb[0].mxu0
  %4490 = vdwg.mxu0
  %v4492 = vsel %vm317, %v4488, 0
  %4494 = vmatprep.subr.mxu0 0.0
  %4495 = vmatpush1.msra.mxu0 %v2642
  %4496 = vmatprep.subr.mxu0 0.0
  %4497 = vmatpush1.msra.mxu0 0.0
  %4498 = vmatprep.subr.mxu0 0.0
  %4499 = vmatpush1.msra.mxu0 0.0
  %4500 = vmatprep.subr.mxu0 0.0
  %4501 = vmatpush1.msra.mxu0 0.0
  %4502 = vmatprep.subr.mxu0 0.0
  %4503 = vmatpush1.msra.mxu0 0.0
  %4504 = vmatprep.subr.mxu0 0.0
  %4505 = vmatpush1.msra.mxu0 0.0
  %4506 = vmatprep.subr.mxu0 0.0
  %4507 = vmatpush1.msra.mxu0 0.0
  %4508 = vmatprep.subr.mxu0 0.0
  %4509 = vmatpush1.msra.mxu0 0.0
  %4510 = vmatprep.subr.mxu0 0.0
  %4511 = vmatpush1.msra.mxu0 0.0
  %4512 = vmatprep.subr.mxu0 0.0
  %4513 = vmatpush1.msra.mxu0 0.0
  %4514 = vmatprep.subr.mxu0 0.0
  %4515 = vmatpush1.msra.mxu0 0.0
  %4516 = vmatprep.subr.mxu0 0.0
  %4517 = vmatpush1.msra.mxu0 0.0
  %4518 = vmatprep.subr.mxu0 0.0
  %4519 = vmatpush1.msra.mxu0 0.0
  %4520 = vmatprep.subr.mxu0 0.0
  %4521 = vmatpush1.msra.mxu0 0.0
  %4522 = vmatprep.subr.mxu0 0.0
  %4523 = vmatpush1.msra.mxu0 0.0
  %4524 = vmatprep.subr.mxu0 0.0
  %4525 = vmatpush1.msra.mxu0 0.0
  %4526 = vmatprep.subr.mxu0 0.0
  %4527 = vmatpush1.msra.mxu0 0.0
  %4528 = vmatprep.subr.mxu0 0.0
  %4529 = vmatpush1.msra.mxu0 0.0
  %4530 = vmatprep.subr.mxu0 0.0
  %4531 = vmatpush1.msra.mxu0 0.0
  %4532 = vmatprep.subr.mxu0 0.0
  %4533 = vmatpush1.msra.mxu0 0.0
  %4534 = vmatprep.subr.mxu0 0.0
  %4535 = vmatpush1.msra.mxu0 0.0
  %4536 = vmatprep.subr.mxu0 0.0
  %4537 = vmatpush1.msra.mxu0 0.0
  %4538 = vmatprep.subr.mxu0 0.0
  %4539 = vmatpush1.msra.mxu0 0.0
  %4540 = vmatprep.subr.mxu0 0.0
  %4541 = vmatpush1.msra.mxu0 0.0
  %4542 = vmatprep.subr.mxu0 0.0
  %4543 = vmatpush1.msra.mxu0 0.0
  %4544 = vmatprep.subr.mxu0 0.0
  %4545 = vmatpush1.msra.mxu0 0.0
  %4546 = vmatprep.subr.mxu0 0.0
  %4547 = vmatpush1.msra.mxu0 0.0
  %4548 = vmatprep.subr.mxu0 0.0
  %4549 = vmatpush1.msra.mxu0 0.0
  %4550 = vmatprep.subr.mxu0 0.0
  %4551 = vmatpush1.msra.mxu0 0.0
  %4552 = vmatprep.subr.mxu0 0.0
  %4553 = vmatpush1.msra.mxu0 0.0
  %4554 = vmatprep.subr.mxu0 0.0
  %4555 = vmatpush1.msra.mxu0 0.0
  %4556 = vmatprep.subr.mxu0 0.0
  %4557 = vmatpush1.msra.mxu0 0.0
  %4558 = vmatprep.mubr.f32.mxu0 0.0
  %4559 = vmatmul.mubr.f32.gmra.mrb[0].mxu0 %v4492
  %v4560 = vpop.f32.mrb[0].mxu0
  %v4561 = vadd.f32 0.0, %v4560
  %v4562 = vpop.f32.mrb[0].mxu0
  %4563 = vdwg.mxu0
  %v4564 = vadd.f32 %v4323, %v4561
  %s4565 = scalar_lea.vmem %s9, 1
  %v4566 = vld [vmem:[%s4565] sm:$0x1]
  %v4568 = vlaneseq
  %v4569 = vshrl.u32 %v4568, 7
  %v4570 = vsub.s32 0, %v4569
  %v4571 = vrot.slane %v4566, %v4570
  %v4573 = vadd.f32 %v3603, %v4571
  %v4574 = vadd.f32 %v4564, %v4571
  %v4575 = vadd.f32 %v4573, %v2496
  %v4576 = vadd.f32 %v4574, %v2497
  %s4577 = scalar_lea.vmem %s10, 1
  %v4578 = vld [vmem:[%s4577] sm:$0x1]
  %s4579 = scalar_lea.vmem %s11, 1
  %v4580 = vld [vmem:[%s4579] sm:$0x1]
  %v4581 = vsel %vm174, %v4575, 0.0
  %4582 = vadd.xlane.f32.xlu0 %v4581
  %v4583 = vpop.xlane.xlu0 %4582
  %v4584 = vsel %vm174, %v4576, 0.0
  %4585 = vadd.xlane.f32.xlu0 %v4584
  %v4586 = vpop.xlane.xlu0 %4585
  %v4587 = vmul.f32 %v4583, %v181
  %v4588 = vmul.f32 %v4586, %v181
  %v4589 = vsub.f32 %v4575, %v4587
  %v4590 = vsub.f32 %v4576, %v4588
  %v4591 = vmul.f32 %v4589, %v4589
  %v4592 = vmul.f32 %v4590, %v4590
  %v4593 = vsel %vm174, %v4591, 0.0
  %4594 = vadd.xlane.f32.xlu0 %v4593
  %v4595 = vpop.xlane.xlu0 %4594
  %v4596 = vsel %vm174, %v4592, 0.0
  %4597 = vadd.xlane.f32.xlu0 %v4596
  %v4598 = vpop.xlane.xlu0 %4597
  %v4599 = vmul.f32 %v4595, %v181
  %v4600 = vmul.f32 %v4598, %v181
  %v4601 = vadd.f32 %v4599, 1e-12
  %v4602 = vadd.f32 %v4600, 1e-12
  %v4603 = vrsqrt.pop %v4601
  %v4604 = vrsqrt.pop %v4602
  %v4605 = vmul.f32 %v4589, %v4603
  %v4606 = vmul.f32 %v4590, %v4604
  %v4608 = vlaneseq
  %v4609 = vshrl.u32 %v4608, 7
  %v4610 = vsub.s32 0, %v4609
  %v4611 = vrot.slane %v4578, %v4610
  %v4613 = vmul.f32 %v4605, %v4611
  %v4614 = vmul.f32 %v4606, %v4611
  %v4616 = vlaneseq
  %v4617 = vshrl.u32 %v4616, 7
  %v4618 = vsub.s32 0, %v4617
  %v4619 = vrot.slane %v4580, %v4618
  %v4621 = vadd.f32 %v4613, %v4619
  %v4622 = vadd.f32 %v4614, %v4619
  %s4623 = scalar_lea.vmem %s12, 32
  %v4624 = vld [vmem:[%s4623] sm:$0xff]
  %v4625 = vld [vmem:[%s4623 + $0x8] sm:$0xff]
  %v4626 = vld [vmem:[%s4623 + $0x10] sm:$0xff]
  %v4627 = vld [vmem:[%s4623 + $0x18] sm:$0xff]
  %s4628 = scalar_lea.vmem %s13, 1
  %v4629 = vld [vmem:[%s4628] sm:$0x1]
  %v4631 = vlaneseq
  %v4632 = vshrl.u32 %v4631, 7
  %v4633 = vsub.s32 0, %v4632
  %v4634 = vrot.slane %v4629, %v4633
  %v4637 = vsel %vm174, %v4621, 0
  %v4640 = vsel %vm174, %v4622, 0
  %4642 = vmatprep.subr.mxu0 0.0
  %4643 = vmatpush1.msra.mxu0 %v4624
  %4644 = vmatprep.subr.mxu0 0.0
  %4645 = vmatpush1.msra.mxu0 %v4625
  %4646 = vmatprep.subr.mxu0 0.0
  %4647 = vmatpush1.msra.mxu0 %v4626
  %4648 = vmatprep.subr.mxu0 0.0
  %4649 = vmatpush1.msra.mxu0 %v4627
  %4650 = vmatprep.subr.mxu0 0.0
  %4651 = vmatpush1.msra.mxu0 0.0
  %4652 = vmatprep.subr.mxu0 0.0
  %4653 = vmatpush1.msra.mxu0 0.0
  %4654 = vmatprep.subr.mxu0 0.0
  %4655 = vmatpush1.msra.mxu0 0.0
  %4656 = vmatprep.subr.mxu0 0.0
  %4657 = vmatpush1.msra.mxu0 0.0
  %4658 = vmatprep.subr.mxu0 0.0
  %4659 = vmatpush1.msra.mxu0 0.0
  %4660 = vmatprep.subr.mxu0 0.0
  %4661 = vmatpush1.msra.mxu0 0.0
  %4662 = vmatprep.subr.mxu0 0.0
  %4663 = vmatpush1.msra.mxu0 0.0
  %4664 = vmatprep.subr.mxu0 0.0
  %4665 = vmatpush1.msra.mxu0 0.0
  %4666 = vmatprep.subr.mxu0 0.0
  %4667 = vmatpush1.msra.mxu0 0.0
  %4668 = vmatprep.subr.mxu0 0.0
  %4669 = vmatpush1.msra.mxu0 0.0
  %4670 = vmatprep.subr.mxu0 0.0
  %4671 = vmatpush1.msra.mxu0 0.0
  %4672 = vmatprep.subr.mxu0 0.0
  %4673 = vmatpush1.msra.mxu0 0.0
  %4674 = vmatprep.subr.mxu0 0.0
  %4675 = vmatpush1.msra.mxu0 0.0
  %4676 = vmatprep.subr.mxu0 0.0
  %4677 = vmatpush1.msra.mxu0 0.0
  %4678 = vmatprep.subr.mxu0 0.0
  %4679 = vmatpush1.msra.mxu0 0.0
  %4680 = vmatprep.subr.mxu0 0.0
  %4681 = vmatpush1.msra.mxu0 0.0
  %4682 = vmatprep.subr.mxu0 0.0
  %4683 = vmatpush1.msra.mxu0 0.0
  %4684 = vmatprep.subr.mxu0 0.0
  %4685 = vmatpush1.msra.mxu0 0.0
  %4686 = vmatprep.subr.mxu0 0.0
  %4687 = vmatpush1.msra.mxu0 0.0
  %4688 = vmatprep.subr.mxu0 0.0
  %4689 = vmatpush1.msra.mxu0 0.0
  %4690 = vmatprep.subr.mxu0 0.0
  %4691 = vmatpush1.msra.mxu0 0.0
  %4692 = vmatprep.subr.mxu0 0.0
  %4693 = vmatpush1.msra.mxu0 0.0
  %4694 = vmatprep.subr.mxu0 0.0
  %4695 = vmatpush1.msra.mxu0 0.0
  %4696 = vmatprep.subr.mxu0 0.0
  %4697 = vmatpush1.msra.mxu0 0.0
  %4698 = vmatprep.subr.mxu0 0.0
  %4699 = vmatpush1.msra.mxu0 0.0
  %4700 = vmatprep.subr.mxu0 0.0
  %4701 = vmatpush1.msra.mxu0 0.0
  %4702 = vmatprep.subr.mxu0 0.0
  %4703 = vmatpush1.msra.mxu0 0.0
  %4704 = vmatprep.subr.mxu0 0.0
  %4705 = vmatpush1.msra.mxu0 0.0
  %4706 = vmatprep.mubr.f32.mxu0 0.0
  %4707 = vmatmul.mubr.f32.gmra.mrb[0].mxu0 %v4637
  %v4708 = vpop.f32.mrb[0].mxu0
  %v4709 = vadd.f32 %v4634, %v4708
  %v4710 = vpop.f32.mrb[0].mxu0
  %4711 = vmatprep.mubr.f32.mxu0 0.0
  %4712 = vmatmul.mubr.f32.gmra.mrb[0].mxu0 %v4640
  %v4713 = vpop.f32.mrb[0].mxu0
  %v4714 = vadd.f32 %v4634, %v4713
  %v4715 = vpop.f32.mrb[0].mxu0
  %4716 = vdwg.mxu0
  %v4717 = vmul.f32 %v4709, 0.5
  %v4718 = vmul.f32 %v4714, 0.5
  %v4719 = vmul.f32 %v4709, 0.70710677
  %v4720 = vmul.f32 %v4714, 0.70710677
  %v4721 = verf.f32.pop %v4719
  %v4722 = verf.f32.pop %v4720
  %v4723 = vadd.f32 %v4721, 1.0
  %v4724 = vadd.f32 %v4722, 1.0
  %v4725 = vmul.f32 %v4717, %v4723
  %v4726 = vmul.f32 %v4718, %v4724
  %s4727 = scalar_lea.vmem %s14, 64
  %v4728 = vld [vmem:[%s4727] sm:$0xff]
  %v4729 = vld [vmem:[%s4727 + $0x8] sm:$0xff]
  %v4730 = vld [vmem:[%s4727 + $0x10] sm:$0xff]
  %v4731 = vld [vmem:[%s4727 + $0x18] sm:$0xff]
  %v4732 = vld [vmem:[%s4727 + $0x20] sm:$0xff]
  %v4733 = vld [vmem:[%s4727 + $0x28] sm:$0xff]
  %v4734 = vld [vmem:[%s4727 + $0x30] sm:$0xff]
  %v4735 = vld [vmem:[%s4727 + $0x38] sm:$0xff]
  %s4736 = scalar_lea.vmem %s15, 1
  %v4737 = vld [vmem:[%s4736] sm:$0x1]
  %v4739 = vlaneseq
  %v4740 = vshrl.u32 %v4739, 7
  %v4741 = vsub.s32 0, %v4740
  %v4742 = vrot.slane %v4737, %v4741
  %v4745 = vsel %vm90, %v4725, 0
  %v4748 = vsel %vm90, %v4726, 0
  %4750 = vmatprep.subr.mxu0 0.0
  %4751 = vmatpush1.msra.mxu0 %v4728
  %4752 = vmatprep.subr.mxu0 0.0
  %4753 = vmatpush1.msra.mxu0 %v4729
  %4754 = vmatprep.subr.mxu0 0.0
  %4755 = vmatpush1.msra.mxu0 %v4730
  %4756 = vmatprep.subr.mxu0 0.0
  %4757 = vmatpush1.msra.mxu0 %v4731
  %4758 = vmatprep.subr.mxu0 0.0
  %4759 = vmatpush1.msra.mxu0 %v4732
  %4760 = vmatprep.subr.mxu0 0.0
  %4761 = vmatpush1.msra.mxu0 %v4733
  %4762 = vmatprep.subr.mxu0 0.0
  %4763 = vmatpush1.msra.mxu0 %v4734
  %4764 = vmatprep.subr.mxu0 0.0
  %4765 = vmatpush1.msra.mxu0 %v4735
  %4766 = vmatprep.subr.mxu0 0.0
  %4767 = vmatpush1.msra.mxu0 0.0
  %4768 = vmatprep.subr.mxu0 0.0
  %4769 = vmatpush1.msra.mxu0 0.0
  %4770 = vmatprep.subr.mxu0 0.0
  %4771 = vmatpush1.msra.mxu0 0.0
  %4772 = vmatprep.subr.mxu0 0.0
  %4773 = vmatpush1.msra.mxu0 0.0
  %4774 = vmatprep.subr.mxu0 0.0
  %4775 = vmatpush1.msra.mxu0 0.0
  %4776 = vmatprep.subr.mxu0 0.0
  %4777 = vmatpush1.msra.mxu0 0.0
  %4778 = vmatprep.subr.mxu0 0.0
  %4779 = vmatpush1.msra.mxu0 0.0
  %4780 = vmatprep.subr.mxu0 0.0
  %4781 = vmatpush1.msra.mxu0 0.0
  %4782 = vmatprep.subr.mxu0 0.0
  %4783 = vmatpush1.msra.mxu0 0.0
  %4784 = vmatprep.subr.mxu0 0.0
  %4785 = vmatpush1.msra.mxu0 0.0
  %4786 = vmatprep.subr.mxu0 0.0
  %4787 = vmatpush1.msra.mxu0 0.0
  %4788 = vmatprep.subr.mxu0 0.0
  %4789 = vmatpush1.msra.mxu0 0.0
  %4790 = vmatprep.subr.mxu0 0.0
  %4791 = vmatpush1.msra.mxu0 0.0
  %4792 = vmatprep.subr.mxu0 0.0
  %4793 = vmatpush1.msra.mxu0 0.0
  %4794 = vmatprep.subr.mxu0 0.0
  %4795 = vmatpush1.msra.mxu0 0.0
  %4796 = vmatprep.subr.mxu0 0.0
  %4797 = vmatpush1.msra.mxu0 0.0
  %4798 = vmatprep.subr.mxu0 0.0
  %4799 = vmatpush1.msra.mxu0 0.0
  %4800 = vmatprep.subr.mxu0 0.0
  %4801 = vmatpush1.msra.mxu0 0.0
  %4802 = vmatprep.subr.mxu0 0.0
  %4803 = vmatpush1.msra.mxu0 0.0
  %4804 = vmatprep.subr.mxu0 0.0
  %4805 = vmatpush1.msra.mxu0 0.0
  %4806 = vmatprep.subr.mxu0 0.0
  %4807 = vmatpush1.msra.mxu0 0.0
  %4808 = vmatprep.subr.mxu0 0.0
  %4809 = vmatpush1.msra.mxu0 0.0
  %4810 = vmatprep.subr.mxu0 0.0
  %4811 = vmatpush1.msra.mxu0 0.0
  %4812 = vmatprep.subr.mxu0 0.0
  %4813 = vmatpush1.msra.mxu0 0.0
  %4814 = vmatprep.mubr.f32.mxu0 0.0
  %4815 = vmatmul.mubr.f32.gmra.mrb[0].mxu0 %v4745
  %v4816 = vpop.f32.mrb[0].mxu0
  %v4817 = vadd.f32 %v4742, %v4816
  %v4818 = vpop.f32.mrb[0].mxu0
  %4819 = vmatprep.mubr.f32.mxu0 0.0
  %4820 = vmatmul.mubr.f32.gmra.mrb[0].mxu0 %v4748
  %v4821 = vpop.f32.mrb[0].mxu0
  %v4822 = vadd.f32 %v4742, %v4821
  %v4823 = vpop.f32.mrb[0].mxu0
  %4824 = vdwg.mxu0
  %v4825 = vadd.f32 %v4817, %v4575
  %v4826 = vadd.f32 %v4822, %v4576
  %v4827 = vld [vmem:[%s16] sm:$0x1]
  %v4828 = vld [vmem:[%s17] sm:$0x1]
  %v4829 = vsel %vm174, %v4825, 0.0
  %4830 = vadd.xlane.f32.xlu0 %v4829
  %v4831 = vpop.xlane.xlu0 %4830
  %v4832 = vsel %vm174, %v4826, 0.0
  %4833 = vadd.xlane.f32.xlu0 %v4832
  %v4834 = vpop.xlane.xlu0 %4833
  %v4835 = vmul.f32 %v4831, %v181
  %v4836 = vmul.f32 %v4834, %v181
  %v4837 = vsub.f32 %v4825, %v4835
  %v4838 = vsub.f32 %v4826, %v4836
  %v4839 = vmul.f32 %v4837, %v4837
  %v4840 = vmul.f32 %v4838, %v4838
  %v4841 = vsel %vm174, %v4839, 0.0
  %4842 = vadd.xlane.f32.xlu0 %v4841
  %v4843 = vpop.xlane.xlu0 %4842
  %v4844 = vsel %vm174, %v4840, 0.0
  %4845 = vadd.xlane.f32.xlu0 %v4844
  %v4846 = vpop.xlane.xlu0 %4845
  %v4847 = vmul.f32 %v4843, %v181
  %v4848 = vmul.f32 %v4846, %v181
  %v4849 = vadd.f32 %v4847, 1e-12
  %v4850 = vadd.f32 %v4848, 1e-12
  %v4851 = vrsqrt.pop %v4849
  %v4852 = vrsqrt.pop %v4850
  %v4853 = vmul.f32 %v4837, %v4851
  %v4854 = vmul.f32 %v4838, %v4852
  %v4856 = vlaneseq
  %v4857 = vshrl.u32 %v4856, 7
  %v4858 = vsub.s32 0, %v4857
  %v4859 = vrot.slane %v4827, %v4858
  %v4861 = vmul.f32 %v4853, %v4859
  %v4862 = vmul.f32 %v4854, %v4859
  %v4864 = vlaneseq
  %v4865 = vshrl.u32 %v4864, 7
  %v4866 = vsub.s32 0, %v4865
  %v4867 = vrot.slane %v4828, %v4866
  %v4869 = vadd.f32 %v4861, %v4867
  %v4870 = vadd.f32 %v4862, %v4867
  %4871 = vst.msk [vmem:[%s18] sm:$0xff] %vm174, %v4869
  %4872 = vst.msk [vmem:[%s18 + $0x8] sm:$0xff] %vm174, %v4870
  // Predicated region
  $region74: #{vit_forward.1} parent=0 // pred_check
    _
  $region75: #{vit_forward.1} parent=0 // pred_check_branch
    %4874 = sbr.rel (0) target = $region77
  $region76: #{vit_forward.1} parent=0 // pred_region
    _
  $region77: #{vit_forward.1} parent=0 // pred_fallthru
    _
  // Predicated region
  $region78: #{vit_forward.1} parent=0 // pred_check
    _
  $region79: #{vit_forward.1} parent=0 // pred_check_branch
    %4876 = sbr.rel (0) target = $region81
  $region80: #{vit_forward.1} parent=0 // pred_region
    _
  $region81: #{vit_forward.1} parent=0 // pred_fallthru
    _

</llo_original>
